<compile_context>
chip_gen: v7x
topology: tpu7x:2x2x1
jax: 0.10.0
libtpu: 0.0.40
codegen_flags: <defaults>
</compile_context>

<pallas_src>
import functools

import jax
import jax.numpy as jnp
from jax.experimental import pallas as pl
from jax.experimental.pallas import tpu as pltpu


# ----------------------------------------------------------------------------
# Pallas kernel: single-shot (full-K) matmul fused with bias + activation.
# ----------------------------------------------------------------------------
def _matmul_bias_act_kernel(a_ref, b_ref, c_ref, o_ref, *, activation):
    # bf16 operands, f32 accumulation on the MXU.
    y = jnp.dot(a_ref[...], b_ref[...], preferred_element_type=jnp.float32)
    y = y + c_ref[...]                      # f32 epilogue (BN/bias pre-folded)
    if activation == "relu":
        y = jnp.maximum(y, 0.0)
    elif activation == "tanh":
        y = jnp.tanh(y)
    o_ref[...] = y.astype(o_ref.dtype)


def fused_matmul(a, b, bias, activation="none", out_dtype=jnp.float32,
                 tm_pref=256, tn_pref=256):
    """act(a @ b + bias); bias broadcasts over rows (per output column).

    a: (M, K), b: (K, N), bias: (N,).  Operands are cast to bf16; accumulation
    and epilogue are f32.  K is never tiled (full-K stripe per block).
    """
    M, K = a.shape
    K2, N = b.shape
    assert K == K2

    a = a.astype(jnp.bfloat16)
    b = b.astype(jnp.bfloat16)
    bias = bias.astype(jnp.float32).reshape(1, N)

    # Full-dim block when the dim is small (no pad needed); otherwise tile+pad.
    tm = M if M <= tm_pref else tm_pref
    tn = N if N <= tn_pref else tn_pref
    Mp = pl.cdiv(M, tm) * tm
    Np = pl.cdiv(N, tn) * tn
    if Mp != M:
        a = jnp.pad(a, ((0, Mp - M), (0, 0)))
    if Np != N:
        b = jnp.pad(b, ((0, 0), (0, Np - N)))
        bias = jnp.pad(bias, ((0, 0), (0, Np - N)))

    grid = (Mp // tm, Np // tn)
    out = pl.pallas_call(
        functools.partial(_matmul_bias_act_kernel, activation=activation),
        out_shape=jax.ShapeDtypeStruct((Mp, Np), out_dtype),
        grid_spec=pltpu.PrefetchScalarGridSpec(
            num_scalar_prefetch=0,
            grid=grid,
            in_specs=[
                pl.BlockSpec((tm, K), lambda i, j: (i, 0)),   # full-K stripe
                pl.BlockSpec((K, tn), lambda i, j: (0, j)),   # full-K stripe
                pl.BlockSpec((1, tn), lambda i, j: (0, j)),   # bias row
            ],
            out_specs=pl.BlockSpec((tm, tn), lambda i, j: (i, j)),
        ),
        compiler_params=pltpu.CompilerParams(
            dimension_semantics=("parallel", "parallel")),
    )(a, b, bias)

    if Mp != M or Np != N:
        out = out[:M, :N]
    return out


# ----------------------------------------------------------------------------
# Weight preparation (tiny, done once per layer at f32).
# ----------------------------------------------------------------------------
def dense_weight_l1(w, scale, bias_folded):
    """Layer-1 ConvTranspose2d(k=4, s=1, p=0) on a 1x1 input == dense matmul.

    w: (Cin, Cout, 4, 4) PyTorch layout.  Returns (Cin, 16*Cout) weight with the
    BN scale folded in (columns ordered (kh, kw, co)) and (16*Cout,) bias cols.
    """
    Cin, Cout = w.shape[0], w.shape[1]
    wm = (w.transpose(0, 2, 3, 1) * scale).reshape(Cin, 16 * Cout)
    bias_cols = jnp.tile(bias_folded, 16)
    return wm, bias_cols


def subpixel_weight(w, scale, bias_folded):
    """ConvTranspose2d(k=4, s=2, p=1) -> sub-pixel weight matrix.

    out[oh=2m+ph, ow=2n+pw] depends on a 3x3 window of the (1-padded) input at
    (m, n); tap (th, tw) uses kernel entry (KH[ph,th], KW[pw,tw]) or zero.
    w: (Cin, Cout, 4, 4).  Returns (9*Cin, 4*Cout) weight (rows ordered
    (th, tw, ci); cols ordered (ph, pw, co)) with BN scale folded, plus
    (4*Cout,) bias columns.
    """
    Cin, Cout = w.shape[0], w.shape[1]
    tap_idx = jnp.array([[3, 1, 0], [0, 2, 0]], dtype=jnp.int32)   # [parity, tap]
    tap_msk = jnp.array([[1.0, 1.0, 0.0], [0.0, 1.0, 1.0]], jnp.float32)

    wk = w[:, :, tap_idx, :]          # (Cin, Cout, ph, th, 4)
    wk = wk[..., tap_idx]             # (Cin, Cout, ph, th, pw, tw)
    mask = tap_msk[:, :, None, None] * tap_msk[None, None, :, :]   # (ph,th,pw,tw)
    wk = wk * mask[None, None]
    wm = wk.transpose(3, 5, 0, 2, 4, 1) * scale    # (th, tw, ci, ph, pw, co)
    wm = wm.reshape(9 * Cin, 4 * Cout)
    bias_cols = jnp.tile(bias_folded, 4)           # column order (ph, pw, co)
    return wm, bias_cols


# ----------------------------------------------------------------------------
# Sub-pixel transposed conv: im2col (3x3 taps, bf16) + fused matmul + d2s.
# ----------------------------------------------------------------------------
def subpixel_deconv(x, wmat, bias_cols, cout, activation,
                    out_dtype=jnp.bfloat16):
    """x: (B, H, W, Cin) NHWC -> (B, 2H, 2W, cout) NHWC."""
    B, H, W, Cin = x.shape
    xp = jnp.pad(x, ((0, 0), (1, 1), (1, 1), (0, 0)))
    taps = [xp[:, th:th + H, tw:tw + W, :]
            for th in range(3) for tw in range(3)]
    patches = jnp.stack(taps, axis=3).reshape(B * H * W, 9 * Cin)

    out = fused_matmul(patches, wmat, bias_cols, activation, out_dtype=out_dtype)

    out = out.reshape(B, H, W, 2, 2, cout)                 # (b,h,w,ph,pw,co)
    out = out.transpose(0, 1, 3, 2, 4, 5).reshape(B, 2 * H, 2 * W, cout)
    return out


# ----------------------------------------------------------------------------
# Generator (cGAN CIFAR-10): deconv1 -> BN -> relu -> concat(labels) ->
#   deconv2 -> BN -> relu -> deconv3 -> BN -> relu -> deconv4 -> tanh
# ----------------------------------------------------------------------------
def init_params(key, d=128):
    ks = jax.random.split(key, 20)

    def w(kk, shape):
        return (0.02 * jax.random.normal(kk, shape)).astype(jnp.float32)

    def bn(kk1, kk2, c):
        gamma = (1.0 + 0.1 * jax.random.normal(kk1, (c,))).astype(jnp.float32)
        beta = (0.1 * jax.random.normal(kk2, (c,))).astype(jnp.float32)
        return gamma, beta

    p = {}
    p["w1"], p["b1"] = w(ks[0], (100, d * 4, 4, 4)), w(ks[1], (d * 4,))
    p["g1"], p["be1"] = bn(ks[2], ks[3], d * 4)
    p["w2"], p["b2"] = w(ks[4], (d * 4 + 10, d * 2, 4, 4)), w(ks[5], (d * 2,))
    p["g2"], p["be2"] = bn(ks[6], ks[7], d * 2)
    p["w3"], p["b3"] = w(ks[8], (d * 2, d, 4, 4)), w(ks[9], (d,))
    p["g3"], p["be3"] = bn(ks[10], ks[11], d)
    p["w4"], p["b4"] = w(ks[12], (d, 3, 4, 4)), w(ks[13], (3,))
    return p


def generator_forward(params, z, labels):
    eps = 1e-5

    def bn_fold(conv_bias, gamma, beta):
        # eval-mode BN with default running stats (mean=0, var=1)
        s = gamma / jnp.sqrt(1.0 + eps)
        return s, conv_bias * s + beta

    B = z.shape[0]
    d4 = params["w1"].shape[1]

    # layer 1: ConvTranspose2d(100, 4d, 4, 1, 0) on a 1x1 input -> dense matmul
    s1, c1 = bn_fold(params["b1"], params["g1"], params["be1"])
    wm1, bc1 = dense_weight_l1(params["w1"], s1, c1)
    x = fused_matmul(z.reshape(B, -1), wm1, bc1, "relu",
                     out_dtype=jnp.bfloat16)
    x = x.reshape(B, 4, 4, d4)                                  # NHWC

    lab = jnp.broadcast_to(labels.reshape(B, 1, 1, -1),
                           (B, 4, 4, labels.shape[1]))
    x = jnp.concatenate([x, lab.astype(x.dtype)], axis=-1)      # (B,4,4,4d+10)

    s2, c2 = bn_fold(params["b2"], params["g2"], params["be2"])
    wm2, bc2 = subpixel_weight(params["w2"], s2, c2)
    x = subpixel_deconv(x, wm2, bc2, params["w2"].shape[1], "relu")   # (B,8,8,2d)

    s3, c3 = bn_fold(params["b3"], params["g3"], params["be3"])
    wm3, bc3 = subpixel_weight(params["w3"], s3, c3)
    x = subpixel_deconv(x, wm3, bc3, params["w3"].shape[1], "relu")   # (B,16,16,d)

    wm4, bc4 = subpixel_weight(params["w4"], jnp.ones((3,), jnp.float32),
                               params["b4"])
    x = subpixel_deconv(x, wm4, bc4, 3, "tanh",
                        out_dtype=jnp.float32)                  # (B,32,32,3)

    return x.transpose(0, 3, 1, 2)   # NCHW only at the module boundary


if __name__ == "__main__":
    d = 32          # small d for the test (module default is 128)
    batch = 2
    key = jax.random.PRNGKey(0)
    kp, kz, kl = jax.random.split(key, 3)

    params = init_params(kp, d=d)
    z = jax.random.normal(kz, (batch, 100, 1, 1), jnp.float32)
    lab_idx = jax.random.randint(kl, (batch,), 0, 10)
    labels = jax.nn.one_hot(lab_idx, 10, dtype=jnp.float32)[:, :, None, None]

    fwd = jax.jit(generator_forward)
    out = fwd(params, z, labels)
    out = jax.block_until_ready(out)

    assert out.shape == (batch, 3, 32, 32), out.shape
    assert bool(jnp.all(jnp.isfinite(out)))
    assert bool(jnp.all(jnp.abs(out) <= 1.0 + 1e-6))  # tanh range
    print("KERNEL_OK")
</pallas_src>

<mosaic_0001>
module attributes {stable_mosaic.version = 11 : i64} {
  func.func @_matmul_bias_act_kernel(%arg0: i32, %arg1: i32, %arg2: memref<2x100xbf16, #tpu.memory_space<vmem>>, %arg3: memref<100x256xbf16, #tpu.memory_space<vmem>>, %arg4: memref<1x256xf32, #tpu.memory_space<vmem>>, %arg5: memref<2x256xbf16, #tpu.memory_space<vmem>>) attributes {dimension_semantics = [#tpu.dimension_semantics<parallel>, #tpu.dimension_semantics<parallel>], iteration_bounds = array<i64: 1, 8>, scalar_prefetch = 0 : i64, scratch_operands = 0 : i64, tpu.core_type = #tpu.core_type<tc>, window_params = [{transform_indices = @transform_0, window_bounds = array<i64: 2, 100>}, {transform_indices = @transform_1, window_bounds = array<i64: 100, 256>}, {transform_indices = @transform_2, window_bounds = array<i64: 1, 256>}, {transform_indices = @transform_3, window_bounds = array<i64: 2, 256>}]} {
    %c0 = arith.constant 0 : index
    %c0_0 = arith.constant 0 : index
    %0 = vector.load %arg2[%c0, %c0_0] : memref<2x100xbf16, #tpu.memory_space<vmem>>, vector<2x100xbf16>
    %c0_1 = arith.constant 0 : index
    %c0_2 = arith.constant 0 : index
    %1 = vector.load %arg3[%c0_1, %c0_2] : memref<100x256xbf16, #tpu.memory_space<vmem>>, vector<100x256xbf16>
    %cst = arith.constant dense<0.000000e+00> : vector<2x256xf32>
    %2 = tpu.matmul %0, %1, %cst {dimension_numbers = #tpu.dot_dimension_numbers<[1], [0], [0], [1], [0, 0, 1, 1], [], []>} : vector<2x100xbf16>, vector<100x256xbf16>, vector<2x256xf32> -> vector<2x256xf32>
    %c0_3 = arith.constant 0 : index
    %c0_4 = arith.constant 0 : index
    %3 = vector.load %arg4[%c0_3, %c0_4] : memref<1x256xf32, #tpu.memory_space<vmem>>, vector<1x256xf32>
    %4 = vector.broadcast %3 : vector<1x256xf32> to vector<2x256xf32>
    %5 = arith.addf %2, %4 : vector<2x256xf32>
    %cst_5 = arith.constant 0.000000e+00 : f32
    %6 = vector.broadcast %cst_5 : f32 to vector<2x256xf32>
    %7 = arith.maximumf %5, %6 : vector<2x256xf32>
    %8 = arith.truncf %7 : vector<2x256xf32> to vector<2x256xbf16>
    %c0_6 = arith.constant 0 : index
    %c0_7 = arith.constant 0 : index
    %9 = vector.load %arg5[%c0_6, %c0_7] : memref<2x256xbf16, #tpu.memory_space<vmem>>, vector<2x256xbf16>
    tpu.vector_store %arg5[%c0_6, %c0_7], %8 {strides = array<i32>} : memref<2x256xbf16, #tpu.memory_space<vmem>>, vector<2x256xbf16>,
    return
  }
  func.func @transform_0(%arg0: i32, %arg1: i32) -> (i32, i32) {
    %c0_i32 = arith.constant 0 : i32
    %c0_i32_0 = arith.constant 0 : i32
    return %arg0, %c0_i32 : i32, i32
  }
  func.func @transform_1(%arg0: i32, %arg1: i32) -> (i32, i32) {
    %c0_i32 = arith.constant 0 : i32
    %c0_i32_0 = arith.constant 0 : i32
    return %c0_i32, %arg1 : i32, i32
  }
  func.func @transform_2(%arg0: i32, %arg1: i32) -> (i32, i32) {
    %c0_i32 = arith.constant 0 : i32
    %c0_i32_0 = arith.constant 0 : i32
    return %c0_i32, %arg1 : i32, i32
  }
  func.func @transform_3(%arg0: i32, %arg1: i32) -> (i32, i32) {
    %c0_i32 = arith.constant 0 : i32
    return %arg0, %arg1 : i32, i32
  }
}

module attributes {stable_mosaic.version = 11 : i64} {
  func.func @_matmul_bias_act_kernel(%arg0: i32, %arg1: i32, %arg2: memref<32x1242xbf16, #tpu.memory_space<vmem>>, %arg3: memref<1242x256xbf16, #tpu.memory_space<vmem>>, %arg4: memref<1x256xf32, #tpu.memory_space<vmem>>, %arg5: memref<32x256xbf16, #tpu.memory_space<vmem>>) attributes {dimension_semantics = [#tpu.dimension_semantics<parallel>, #tpu.dimension_semantics<parallel>], iteration_bounds = array<i64: 1, 1>, scalar_prefetch = 0 : i64, scratch_operands = 0 : i64, tpu.core_type = #tpu.core_type<tc>, window_params = [{transform_indices = @transform_0, window_bounds = array<i64: 32, 1242>}, {transform_indices = @transform_1, window_bounds = array<i64: 1242, 256>}, {transform_indices = @transform_2, window_bounds = array<i64: 1, 256>}, {transform_indices = @transform_3, window_bounds = array<i64: 32, 256>}]} {
    %c0 = arith.constant 0 : index
    %c0_0 = arith.constant 0 : index
    %0 = vector.load %arg2[%c0, %c0_0] : memref<32x1242xbf16, #tpu.memory_space<vmem>>, vector<32x1242xbf16>
    %c0_1 = arith.constant 0 : index
    %c0_2 = arith.constant 0 : index
    %1 = vector.load %arg3[%c0_1, %c0_2] : memref<1242x256xbf16, #tpu.memory_space<vmem>>, vector<1242x256xbf16>
    %cst = arith.constant dense<0.000000e+00> : vector<32x256xf32>
    %2 = tpu.matmul %0, %1, %cst {dimension_numbers = #tpu.dot_dimension_numbers<[1], [0], [0], [1], [0, 0, 1, 1], [], []>} : vector<32x1242xbf16>, vector<1242x256xbf16>, vector<32x256xf32> -> vector<32x256xf32>
    %c0_3 = arith.constant 0 : index
    %c0_4 = arith.constant 0 : index
    %3 = vector.load %arg4[%c0_3, %c0_4] : memref<1x256xf32, #tpu.memory_space<vmem>>, vector<1x256xf32>
    %4 = vector.broadcast %3 : vector<1x256xf32> to vector<32x256xf32>
    %5 = arith.addf %2, %4 : vector<32x256xf32>
    %cst_5 = arith.constant 0.000000e+00 : f32
    %6 = vector.broadcast %cst_5 : f32 to vector<32x256xf32>
    %7 = arith.maximumf %5, %6 : vector<32x256xf32>
    %8 = arith.truncf %7 : vector<32x256xf32> to vector<32x256xbf16>
    %c0_6 = arith.constant 0 : index
    %c0_7 = arith.constant 0 : index
    %9 = vector.load %arg5[%c0_6, %c0_7] : memref<32x256xbf16, #tpu.memory_space<vmem>>, vector<32x256xbf16>
    tpu.vector_store %arg5[%c0_6, %c0_7], %8 {strides = array<i32>} : memref<32x256xbf16, #tpu.memory_space<vmem>>, vector<32x256xbf16>,
    return
  }
  func.func @transform_0(%arg0: i32, %arg1: i32) -> (i32, i32) {
    %c0_i32 = arith.constant 0 : i32
    %c0_i32_0 = arith.constant 0 : i32
    return %arg0, %c0_i32 : i32, i32
  }
  func.func @transform_1(%arg0: i32, %arg1: i32) -> (i32, i32) {
    %c0_i32 = arith.constant 0 : i32
    %c0_i32_0 = arith.constant 0 : i32
    return %c0_i32, %arg1 : i32, i32
  }
  func.func @transform_2(%arg0: i32, %arg1: i32) -> (i32, i32) {
    %c0_i32 = arith.constant 0 : i32
    %c0_i32_0 = arith.constant 0 : i32
    return %c0_i32, %arg1 : i32, i32
  }
  func.func @transform_3(%arg0: i32, %arg1: i32) -> (i32, i32) {
    %c0_i32 = arith.constant 0 : i32
    return %arg0, %arg1 : i32, i32
  }
}

module attributes {stable_mosaic.version = 11 : i64} {
  func.func @_matmul_bias_act_kernel(%arg0: i32, %arg1: i32, %arg2: memref<128x576xbf16, #tpu.memory_space<vmem>>, %arg3: memref<576x128xbf16, #tpu.memory_space<vmem>>, %arg4: memref<1x128xf32, #tpu.memory_space<vmem>>, %arg5: memref<128x128xbf16, #tpu.memory_space<vmem>>) attributes {dimension_semantics = [#tpu.dimension_semantics<parallel>, #tpu.dimension_semantics<parallel>], iteration_bounds = array<i64: 1, 1>, scalar_prefetch = 0 : i64, scratch_operands = 0 : i64, tpu.core_type = #tpu.core_type<tc>, window_params = [{transform_indices = @transform_0, window_bounds = array<i64: 128, 576>}, {transform_indices = @transform_1, window_bounds = array<i64: 576, 128>}, {transform_indices = @transform_2, window_bounds = array<i64: 1, 128>}, {transform_indices = @transform_3, window_bounds = array<i64: 128, 128>}]} {
    %c0 = arith.constant 0 : index
    %c0_0 = arith.constant 0 : index
    %0 = vector.load %arg2[%c0, %c0_0] : memref<128x576xbf16, #tpu.memory_space<vmem>>, vector<128x576xbf16>
    %c0_1 = arith.constant 0 : index
    %c0_2 = arith.constant 0 : index
    %1 = vector.load %arg3[%c0_1, %c0_2] : memref<576x128xbf16, #tpu.memory_space<vmem>>, vector<576x128xbf16>
    %cst = arith.constant dense<0.000000e+00> : vector<128x128xf32>
    %2 = tpu.matmul %0, %1, %cst {dimension_numbers = #tpu.dot_dimension_numbers<[1], [0], [0], [1], [0, 0, 1, 1], [], []>} : vector<128x576xbf16>, vector<576x128xbf16>, vector<128x128xf32> -> vector<128x128xf32>
    %c0_3 = arith.constant 0 : index
    %c0_4 = arith.constant 0 : index
    %3 = vector.load %arg4[%c0_3, %c0_4] : memref<1x128xf32, #tpu.memory_space<vmem>>, vector<1x128xf32>
    %4 = vector.broadcast %3 : vector<1x128xf32> to vector<128x128xf32>
    %5 = arith.addf %2, %4 : vector<128x128xf32>
    %cst_5 = arith.constant 0.000000e+00 : f32
    %6 = vector.broadcast %cst_5 : f32 to vector<128x128xf32>
    %7 = arith.maximumf %5, %6 : vector<128x128xf32>
    %8 = arith.truncf %7 : vector<128x128xf32> to vector<128x128xbf16>
    %c0_6 = arith.constant 0 : index
    %c0_7 = arith.constant 0 : index
    %9 = vector.load %arg5[%c0_6, %c0_7] : memref<128x128xbf16, #tpu.memory_space<vmem>>, vector<128x128xbf16>
    tpu.vector_store %arg5[%c0_6, %c0_7], %8 {strides = array<i32>} : memref<128x128xbf16, #tpu.memory_space<vmem>>, vector<128x128xbf16>,
    return
  }
  func.func @transform_0(%arg0: i32, %arg1: i32) -> (i32, i32) {
    %c0_i32 = arith.constant 0 : i32
    %c0_i32_0 = arith.constant 0 : i32
    return %arg0, %c0_i32 : i32, i32
  }
  func.func @transform_1(%arg0: i32, %arg1: i32) -> (i32, i32) {
    %c0_i32 = arith.constant 0 : i32
    %c0_i32_0 = arith.constant 0 : i32
    return %c0_i32, %arg1 : i32, i32
  }
  func.func @transform_2(%arg0: i32, %arg1: i32) -> (i32, i32) {
    %c0_i32 = arith.constant 0 : i32
    %c0_i32_0 = arith.constant 0 : i32
    return %c0_i32, %arg1 : i32, i32
  }
  func.func @transform_3(%arg0: i32, %arg1: i32) -> (i32, i32) {
    %c0_i32 = arith.constant 0 : i32
    return %arg0, %arg1 : i32, i32
  }
}

module attributes {stable_mosaic.version = 11 : i64} {
  func.func @_matmul_bias_act_kernel(%arg0: i32, %arg1: i32, %arg2: memref<256x288xbf16, #tpu.memory_space<vmem>>, %arg3: memref<288x12xbf16, #tpu.memory_space<vmem>>, %arg4: memref<1x12xf32, #tpu.memory_space<vmem>>, %arg5: memref<256x12xf32, #tpu.memory_space<vmem>>) attributes {dimension_semantics = [#tpu.dimension_semantics<parallel>, #tpu.dimension_semantics<parallel>], iteration_bounds = array<i64: 2, 1>, scalar_prefetch = 0 : i64, scratch_operands = 0 : i64, tpu.core_type = #tpu.core_type<tc>, window_params = [{transform_indices = @transform_0, window_bounds = array<i64: 256, 288>}, {transform_indices = @transform_1, window_bounds = array<i64: 288, 12>}, {transform_indices = @transform_2, window_bounds = array<i64: 1, 12>}, {transform_indices = @transform_3, window_bounds = array<i64: 256, 12>}]} {
    %c0 = arith.constant 0 : index
    %c0_0 = arith.constant 0 : index
    %0 = vector.load %arg2[%c0, %c0_0] : memref<256x288xbf16, #tpu.memory_space<vmem>>, vector<256x288xbf16>
    %c0_1 = arith.constant 0 : index
    %c0_2 = arith.constant 0 : index
    %1 = vector.load %arg3[%c0_1, %c0_2] : memref<288x12xbf16, #tpu.memory_space<vmem>>, vector<288x12xbf16>
    %cst = arith.constant dense<0.000000e+00> : vector<256x12xf32>
    %2 = tpu.matmul %0, %1, %cst {dimension_numbers = #tpu.dot_dimension_numbers<[1], [0], [0], [1], [0, 0, 1, 1], [], []>} : vector<256x288xbf16>, vector<288x12xbf16>, vector<256x12xf32> -> vector<256x12xf32>
    %c0_3 = arith.constant 0 : index
    %c0_4 = arith.constant 0 : index
    %3 = vector.load %arg4[%c0_3, %c0_4] : memref<1x12xf32, #tpu.memory_space<vmem>>, vector<1x12xf32>
    %4 = vector.broadcast %3 : vector<1x12xf32> to vector<256x12xf32>
    %5 = arith.addf %2, %4 : vector<256x12xf32>
    %6 = math.tanh %5 : vector<256x12xf32>
    %c0_5 = arith.constant 0 : index
    %c0_6 = arith.constant 0 : index
    %7 = vector.load %arg5[%c0_5, %c0_6] : memref<256x12xf32, #tpu.memory_space<vmem>>, vector<256x12xf32>
    tpu.vector_store %arg5[%c0_5, %c0_6], %6 {strides = array<i32>} : memref<256x12xf32, #tpu.memory_space<vmem>>, vector<256x12xf32>,
    return
  }
  func.func @transform_0(%arg0: i32, %arg1: i32) -> (i32, i32) {
    %c0_i32 = arith.constant 0 : i32
    %c0_i32_0 = arith.constant 0 : i32
    return %arg0, %c0_i32 : i32, i32
  }
  func.func @transform_1(%arg0: i32, %arg1: i32) -> (i32, i32) {
    %c0_i32 = arith.constant 0 : i32
    %c0_i32_0 = arith.constant 0 : i32
    return %c0_i32, %arg1 : i32, i32
  }
  func.func @transform_2(%arg0: i32, %arg1: i32) -> (i32, i32) {
    %c0_i32 = arith.constant 0 : i32
    %c0_i32_0 = arith.constant 0 : i32
    return %c0_i32, %arg1 : i32, i32
  }
  func.func @transform_3(%arg0: i32, %arg1: i32) -> (i32, i32) {
    %c0_i32 = arith.constant 0 : i32
    return %arg0, %arg1 : i32, i32
  }
}

</mosaic_0001>

<llo_original>
// kernel: tile.23
$region0: #{tile.23}
  #allocation0 [shape = 's32[1]{0}', space=sflag, size = 0x4, scoped, tag = 'scoped memory for tile.23']
  %s0 = inlined_call_operand.vmem [shape: f32[128], index: 0, kind: input, shape index: {}]
  %s1 = inlined_call_operand.vmem [shape: f32[16,128], index: 1, kind: output, shape index: {}]
  // Predicated region
  $region2: #{tile.23} parent=0 // pred_check
    _
  $region3: #{tile.23} parent=0 // pred_check_branch
    %3 = sbr.rel (0) target = $region5
  $region4: #{tile.23} parent=0 // pred_region
    _
  $region5: #{tile.23} parent=0 // pred_fallthru
    _
  %v4 = vld [vmem:[%s0] ss:$0 sm:$0xff]
  %5 = vst [vmem:[%s1] sm:$0xff] %v4
  %s6 = scalar_lea.vmem %s1, 8
  %7 = vst [vmem:[%s6] sm:$0xff] %v4

// kernel: generator_forward.4
$region0: #{generator_forward.4}
  #allocation0 [shape = 'u32[]', space=smem, size = 0x4, offset = 0x4, fixed_abs, tag = 'smem constant byte address 0x4 - core index']
  #allocation1 [shape = 'u32[144,128]{1,0:T(1,128)}', space=vmem, size = 0x12000, scoped, tag = 'internal scratch']
  %s0 = inlined_call_operand.vmem [shape: bf16[2,100], index: 0, kind: input, shape index: {}]
  %s1 = inlined_call_operand.vmem [shape: bf16[100,2048], index: 1, kind: input, shape index: {}]
  %s2 = inlined_call_operand.vmem [shape: f32[1,2048], index: 2, kind: input, shape index: {}]
  %s3 = inlined_call_operand.vmem [shape: bf16[2,2048], index: 3, kind: output, shape index: {}]
  %s4 = sld [smem:[#allocation0]]
  $region83: #{generator_forward.4} parent=0
    _
  %s6 = ssub.s32 1, %s4
  %s7 = scalar_select 0, %s6, %s4
  $region1: #{generator_forward.4} parent=0
    #allocation2 [shape = 'u8[106496]{0}', space=vmem, size = 0x1a000, scoped, tag = 'input window, operand 1']
    loop: start=0, step=1, limit=10
    $region2: #{generator_forward.4} parent=1 // loop_pre_header
      _
    $region3: #{generator_forward.4} parent=1 // loop_header
      %s9 = sphi 0, %s13
      %p10 = scmp.ge.s32.totalorder %s9, 10
      %s16 = sphi 0, %s28
      %s17 = sphi 0, %s24
      %s18 = sphi 0, %s16
      %s19 = sphi 0, %s17
      %s20 = sphi 0, %s18
      %s21 = sphi 0, %s19
      %s31 = sphi 0, %s33
      %s34 = sphi 0, %s31
      %s35 = sphi 0, %s34
      %s51 = sphi 0, %s35
      %s57 = sphi 0, %s59
      %s60 = sphi 0, %s57
      %s61 = sphi 0, %s60
      %s77 = sphi 0, %s61
      %s83 = sphi 0, %s85
      %s86 = sphi 0, %s83
      %s87 = sphi 0, %s86
      %s103 = sphi 0, %s87
      %s111 = sphi 0, %s113
      %s114 = sphi 0, %s111
      %s115 = sphi 0, %s114
      %s131 = sphi 0, %s115
    $region4: #{generator_forward.4} parent=1 // loop_header_branch
      %12 = sbr.rel (%p10) target = $region8
    $region5: #{generator_forward.4} parent=1 // loop_body
      %s14 = ssub.s32 %s9, 1
      %s15 = ssub.s32 %s9, 2
      %s22 = sadd.s32 1, %s17
      %p23 = scmp.ge.s32.totalorder %s22, 8
      %s24 = scalar_select %p23, 0, %s22
      %s25 = sadd.s32 1, %s16
      %s26 = scalar_select %p23, %s25, %s16
      %p27 = scmp.ge.s32.totalorder %s26, 1
      %s28 = scalar_select %p27, 0, %s26
      %s29 = ssub.s32 %s16, %s28
      %p30 = scmp.eq.s32.totalorder %s29, 0
      %s32 = sadd.s32 %s31, 1
      %s33 = scalar_select %p30, %s31, %s32
      %p36 = pneg %p30
      %p37 = scmp.eq.s32.totalorder %s9, 7
      %p38 = por %p36, %p37
      %p39 = scmp.ne.s32.totalorder %s31, %s34
      %p40 = scmp.eq.s32.totalorder %s9, 0
      %p41 = por %p39, %p40
      %p42 = scmp.ne.s32.totalorder %s31, %s34
      %p43 = scmp.eq.s32.totalorder %s14, 7
      %p44 = por %p42, %p43
      %p45 = scmp.ne.s32.totalorder %s34, %s35
      %p46 = scmp.eq.s32.totalorder %s14, 0
      %p47 = por %p45, %p46
      %p48 = scmp.ne.s32.totalorder %s34, %s35
      %p49 = scmp.eq.s32.totalorder %s15, 7
      %p50 = por %p48, %p49
      %p52 = scmp.ne.s32.totalorder %s35, %s51
      %p53 = scmp.eq.s32.totalorder %s15, 0
      %p54 = por %p52, %p53
      %s55 = ssub.s32 %s17, %s24
      %p56 = scmp.eq.s32.totalorder %s55, 0
      %s58 = sadd.s32 %s57, 1
      %s59 = scalar_select %p56, %s57, %s58
      %p62 = pneg %p56
      %p63 = scmp.eq.s32.totalorder %s9, 7
      %p64 = por %p62, %p63
      %p65 = scmp.ne.s32.totalorder %s57, %s60
      %p66 = scmp.eq.s32.totalorder %s9, 0
      %p67 = por %p65, %p66
      %p68 = scmp.ne.s32.totalorder %s57, %s60
      %p69 = scmp.eq.s32.totalorder %s14, 7
      %p70 = por %p68, %p69
      %p71 = scmp.ne.s32.totalorder %s60, %s61
      %p72 = scmp.eq.s32.totalorder %s14, 0
      %p73 = por %p71, %p72
      %p74 = scmp.ne.s32.totalorder %s60, %s61
      %p75 = scmp.eq.s32.totalorder %s15, 7
      %p76 = por %p74, %p75
      %p78 = scmp.ne.s32.totalorder %s61, %s77
      %p79 = scmp.eq.s32.totalorder %s15, 0
      %p80 = por %p78, %p79
      %s81 = ssub.s32 %s17, %s24
      %p82 = scmp.eq.s32.totalorder %s81, 0
      %s84 = sadd.s32 %s83, 1
      %s85 = scalar_select %p82, %s83, %s84
      %p88 = pneg %p82
      %p89 = scmp.eq.s32.totalorder %s9, 7
      %p90 = por %p88, %p89
      %p91 = scmp.ne.s32.totalorder %s83, %s86
      %p92 = scmp.eq.s32.totalorder %s9, 0
      %p93 = por %p91, %p92
      %p94 = scmp.ne.s32.totalorder %s83, %s86
      %p95 = scmp.eq.s32.totalorder %s14, 7
      %p96 = por %p94, %p95
      %p97 = scmp.ne.s32.totalorder %s86, %s87
      %p98 = scmp.eq.s32.totalorder %s14, 0
      %p99 = por %p97, %p98
      %p100 = scmp.ne.s32.totalorder %s86, %s87
      %p101 = scmp.eq.s32.totalorder %s15, 7
      %p102 = por %p100, %p101
      %p104 = scmp.ne.s32.totalorder %s87, %s103
      %p105 = scmp.eq.s32.totalorder %s15, 0
      %p106 = por %p104, %p105
      %s107 = ssub.s32 %s16, %s28
      %s108 = ssub.s32 %s17, %s24
      %s109 = sor.u32 %s107, %s108
      %p110 = scmp.eq.s32.totalorder %s109, 0
      %s112 = sadd.s32 %s111, 1
      %s113 = scalar_select %p110, %s111, %s112
      %p116 = pneg %p110
      %p117 = scmp.eq.s32.totalorder %s9, 7
      %p118 = por %p116, %p117
      %p119 = scmp.ne.s32.totalorder %s111, %s114
      %p120 = scmp.eq.s32.totalorder %s9, 0
      %p121 = por %p119, %p120
      %p122 = scmp.ne.s32.totalorder %s111, %s114
      %p123 = scmp.eq.s32.totalorder %s14, 7
      %p124 = por %p122, %p123
      %p125 = scmp.ne.s32.totalorder %s114, %s115
      %p126 = scmp.eq.s32.totalorder %s14, 0
      %p127 = por %p125, %p126
      %p128 = scmp.ne.s32.totalorder %s114, %s115
      %p129 = scmp.eq.s32.totalorder %s15, 7
      %p130 = por %p128, %p129
      %p132 = scmp.ne.s32.totalorder %s115, %s131
      %p133 = scmp.eq.s32.totalorder %s15, 0
      %p134 = por %p132, %p133
      %p135 = scmp.le.s32.totalorder 1, %s9
      %p136 = scmp.lt.s32.totalorder %s9, 9
      %p137 = pnand %p135, %p136
      %p138 = pneg %p137
      // Predicated region
      $region9: #{generator_forward.4} parent=5 // pred_check
        _
      $region10: #{generator_forward.4} parent=5 // pred_check_branch
        %140 = sbr.rel (%p137) target = $region12
      $region11: #{generator_forward.4} parent=5 // pred_region
        %s141 = ssub.s32 %s9, 1
        // Predicated region
        $region13: #{generator_forward.4} parent=11 // pred_check
          %p142 = pneg %p47
        $region14: #{generator_forward.4} parent=11 // pred_check_branch
          %144 = sbr.rel (%p142) target = $region16
        $region15: #{generator_forward.4} parent=11 // pred_region
          %p145 = scmp.lt.s32.totalorder %s18, 0
          %s146 = scalar_select %p145, %s18, 0
          %s147 = scalar_lea.vmem %s0, %s146
        $region16: #{generator_forward.4} parent=11 // pred_fallthru
          _
      $region12: #{generator_forward.4} parent=5 // pred_fallthru
        _
      %p148 = scmp.lt.s32.totalorder %s9, 8
      // Predicated region
      $region17: #{generator_forward.4} parent=5 // pred_check
        %p149 = pneg %p148
      $region18: #{generator_forward.4} parent=5 // pred_check_branch
        %151 = sbr.rel (%p149) target = $region20
      $region19: #{generator_forward.4} parent=5 // pred_region
        // Predicated region
        $region21: #{generator_forward.4} parent=19 // pred_check
          %p152 = pneg %p67
        $region22: #{generator_forward.4} parent=19 // pred_check_branch
          %154 = sbr.rel (%p152) target = $region24
        $region23: #{generator_forward.4} parent=19 // pred_region
          %s155 = sand.u32 %s57, 1
          %s156 = sand.u32 %s57, 1
          %s157 = smul.addr %s156, 104
          %s158 = scalar_lea.vmem [#allocation2], %s157
          %s159 = smul.u32 2, %s17
          %s160 = smul.addr %s159, 4
          %s161 = scalar_lea.vmem %s1, %s160
          // Predicated region
          $region25: #{generator_forward.4} parent=23 // pred_check
            _
          $region26: #{generator_forward.4} parent=23 // pred_check_branch
            %163 = sbr.rel (0) target = $region28
          $region27: #{generator_forward.4} parent=23 // pred_region
            // Predicated region
            $region29: #{generator_forward.4} parent=27 // pred_check
              _
            $region30: #{generator_forward.4} parent=27 // pred_check_branch
              %165 = sbr.rel (0) target = $region32
            $region31: #{generator_forward.4} parent=27 // pred_region
              // Predicated region
              $region44: #{generator_forward.4} parent=31 // pred_check
                _
              $region45: #{generator_forward.4} parent=31 // pred_check_branch
                %204 = sbr.rel (0) target = $region47
              $region46: #{generator_forward.4} parent=31 // pred_region
                loop: start=0, step=1, limit=1
                $region48: #{generator_forward.4} parent=46 // loop_pre_header
                  _
                $region49: #{generator_forward.4} parent=46 // loop_header
                  %s206 = sphi 0, %s210
                  %p207 = scmp.ge.s32.totalorder %s206, 1
                  %s211 = sphi %s161, %s161
                  %s212 = sphi %s158, %s158
                $region50: #{generator_forward.4} parent=46 // loop_header_branch
                  %209 = sbr.rel (%p207) target = $region54
                $region51: #{generator_forward.4} parent=46 // loop_body
                  %v213 = vld [vmem:[%s211] sm:$0xff]
                  %214 = vst [vmem:[%s212] sm:$0xff] %v213
                  %v215 = vld [vmem:[%s211 + $0x40] sm:$0xff]
                  %216 = vst [vmem:[%s212 + $0x8] sm:$0xff] %v215
                  %v217 = vld [vmem:[%s211 + $0x80] sm:$0xff]
                  %218 = vst [vmem:[%s212 + $0x10] sm:$0xff] %v217
                  %v219 = vld [vmem:[%s211 + $0xc0] sm:$0xff]
                  %220 = vst [vmem:[%s212 + $0x18] sm:$0xff] %v219
                  %v221 = vld [vmem:[%s211 + $0x100] sm:$0xff]
                  %222 = vst [vmem:[%s212 + $0x20] sm:$0xff] %v221
                  %v223 = vld [vmem:[%s211 + $0x140] sm:$0xff]
                  %224 = vst [vmem:[%s212 + $0x28] sm:$0xff] %v223
                  %v225 = vld [vmem:[%s211 + $0x180] sm:$0xff]
                  %226 = vst [vmem:[%s212 + $0x30] sm:$0xff] %v225
                  %v227 = vld [vmem:[%s211 + $0x1c0] sm:$0xff]
                  %228 = vst [vmem:[%s212 + $0x38] sm:$0xff] %v227
                  %v229 = vld [vmem:[%s211 + $0x200] sm:$0xff]
                  %230 = vst [vmem:[%s212 + $0x40] sm:$0xff] %v229
                  %v231 = vld [vmem:[%s211 + $0x240] sm:$0xff]
                  %232 = vst [vmem:[%s212 + $0x48] sm:$0xff] %v231
                  %v233 = vld [vmem:[%s211 + $0x280] sm:$0xff]
                  %234 = vst [vmem:[%s212 + $0x50] sm:$0xff] %v233
                  %v235 = vld [vmem:[%s211 + $0x2c0] sm:$0xff]
                  %236 = vst [vmem:[%s212 + $0x58] sm:$0xff] %v235
                  %v237 = vld [vmem:[%s211 + $0x300] sm:$0xff]
                  %238 = vst [vmem:[%s212 + $0x60] sm:$0xff] %v237
                $region52: #{generator_forward.4} parent=46 // loop_footer
                  %s210 = sadd.s32 1, %s206
                $region53: #{generator_forward.4} parent=46 // loop_footer_branch
                  %205 = sbr.rel target = $region49
                $region54: #{generator_forward.4} parent=46 // loop_exit
                  _
              $region47: #{generator_forward.4} parent=31 // pred_fallthru
                _
              // Predicated region
              $region55: #{generator_forward.4} parent=31 // pred_check
                _
              $region56: #{generator_forward.4} parent=31 // pred_check_branch
                %240 = sbr.rel target = $region58
              $region57: #{generator_forward.4} parent=31 // pred_region
                _
              $region58: #{generator_forward.4} parent=31 // pred_fallthru
                _
            $region32: #{generator_forward.4} parent=27 // pred_fallthru
              _
            // Predicated region
            $region33: #{generator_forward.4} parent=27 // pred_check
              _
            $region34: #{generator_forward.4} parent=27 // pred_check_branch
              %167 = sbr.rel target = $region36
            $region35: #{generator_forward.4} parent=27 // pred_region
              loop: start=0, step=1, limit=1
              $region37: #{generator_forward.4} parent=35 // loop_pre_header
                _
              $region38: #{generator_forward.4} parent=35 // loop_header
                %s170 = sphi 0, %s174
                %p171 = scmp.ge.s32.totalorder %s170, 1
                %s175 = sphi %s161, %s161
                %s176 = sphi %s158, %s158
              $region39: #{generator_forward.4} parent=35 // loop_header_branch
                %173 = sbr.rel (%p171) target = $region43
              $region40: #{generator_forward.4} parent=35 // loop_body
                %v177 = vld [vmem:[%s175] sm:$0xff]
                %178 = vst [vmem:[%s176] sm:$0xff] %v177
                %v179 = vld [vmem:[%s175 + $0x40] sm:$0xff]
                %180 = vst [vmem:[%s176 + $0x8] sm:$0xff] %v179
                %v181 = vld [vmem:[%s175 + $0x80] sm:$0xff]
                %182 = vst [vmem:[%s176 + $0x10] sm:$0xff] %v181
                %v183 = vld [vmem:[%s175 + $0xc0] sm:$0xff]
                %184 = vst [vmem:[%s176 + $0x18] sm:$0xff] %v183
                %v185 = vld [vmem:[%s175 + $0x100] sm:$0xff]
                %186 = vst [vmem:[%s176 + $0x20] sm:$0xff] %v185
                %v187 = vld [vmem:[%s175 + $0x140] sm:$0xff]
                %188 = vst [vmem:[%s176 + $0x28] sm:$0xff] %v187
                %v189 = vld [vmem:[%s175 + $0x180] sm:$0xff]
                %190 = vst [vmem:[%s176 + $0x30] sm:$0xff] %v189
                %v191 = vld [vmem:[%s175 + $0x1c0] sm:$0xff]
                %192 = vst [vmem:[%s176 + $0x38] sm:$0xff] %v191
                %v193 = vld [vmem:[%s175 + $0x200] sm:$0xff]
                %194 = vst [vmem:[%s176 + $0x40] sm:$0xff] %v193
                %v195 = vld [vmem:[%s175 + $0x240] sm:$0xff]
                %196 = vst [vmem:[%s176 + $0x48] sm:$0xff] %v195
                %v197 = vld [vmem:[%s175 + $0x280] sm:$0xff]
                %198 = vst [vmem:[%s176 + $0x50] sm:$0xff] %v197
                %v199 = vld [vmem:[%s175 + $0x2c0] sm:$0xff]
                %200 = vst [vmem:[%s176 + $0x58] sm:$0xff] %v199
                %v201 = vld [vmem:[%s175 + $0x300] sm:$0xff]
                %202 = vst [vmem:[%s176 + $0x60] sm:$0xff] %v201
              $region41: #{generator_forward.4} parent=35 // loop_footer
                %s174 = sadd.s32 1, %s170
              $region42: #{generator_forward.4} parent=35 // loop_footer_branch
                %169 = sbr.rel target = $region38
              $region43: #{generator_forward.4} parent=35 // loop_exit
                _
            $region36: #{generator_forward.4} parent=27 // pred_fallthru
              _
          $region28: #{generator_forward.4} parent=23 // pred_fallthru
            _
          %241 = vnop
        $region24: #{generator_forward.4} parent=19 // pred_fallthru
          _
        // Predicated region
        $region59: #{generator_forward.4} parent=19 // pred_check
          %p242 = pneg %p93
        $region60: #{generator_forward.4} parent=19 // pred_check_branch
          %244 = sbr.rel (%p242) target = $region62
        $region61: #{generator_forward.4} parent=19 // pred_region
          %s245 = smul.u32 2, %s17
          %p246 = scmp.lt.s32.totalorder %s245, 15
          %s247 = scalar_select %p246, %s245, 15
          %s248 = scalar_lea.vmem %s2, %s247
          %s249 = smul.u32 2, %s17
        $region62: #{generator_forward.4} parent=19 // pred_fallthru
          _
      $region20: #{generator_forward.4} parent=5 // pred_fallthru
        _
      %p250 = scmp.le.s32.totalorder 1, %s9
      %p251 = scmp.lt.s32.totalorder %s9, 9
      %p252 = pnand %p250, %p251
      %p253 = pneg %p252
      // Predicated region
      $region63: #{generator_forward.4} parent=5 // pred_check
        _
      $region64: #{generator_forward.4} parent=5 // pred_check_branch
        %255 = sbr.rel (%p252) target = $region66
      $region65: #{generator_forward.4} parent=5 // pred_region
        %s256 = ssub.s32 %s9, 1
        %s257 = sand.u32 %s60, 1
        %s258 = sand.u32 %s60, 1
        %s259 = smul.addr %s258, 104
        %s260 = scalar_lea.vmem [#allocation2], %s259
        // Predicated region
        $region67: #{generator_forward.4} parent=65 // pred_check
          %p261 = pneg %p73
        $region68: #{generator_forward.4} parent=65 // pred_check_branch
          %263 = sbr.rel (%p261) target = $region70
        $region69: #{generator_forward.4} parent=65 // pred_region
          _
        $region70: #{generator_forward.4} parent=65 // pred_fallthru
          _
        %p264 = scmp.lt.s32.totalorder %s18, 0
        %s265 = scalar_select %p264, %s18, 0
        %s266 = scalar_lea.vmem %s0, %s265
        %p267 = pneg %p47
        %p268 = pneg %p44
        %s269 = sand.u32 %s60, 1
        %s270 = sand.u32 %s60, 1
        %s271 = smul.addr %s270, 104
        %s272 = scalar_lea.vmem [#allocation2], %s271
        %p273 = pneg %p73
        %p274 = pneg %p70
        %s275 = smul.u32 2, %s19
        %p276 = scmp.lt.s32.totalorder %s275, 15
        %s277 = scalar_select %p276, %s275, 15
        %s278 = scalar_lea.vmem %s2, %s277
        %p279 = pneg %p99
        %p280 = pneg %p96
        %p281 = pneg %p127
        %p282 = pneg %p124
        %s283 = smul.u32 2, %s19
        %p284 = scmp.lt.s32.totalorder %s18, 0
        %s285 = scalar_select %p284, %s18, 0
        %p286 = scmp.lt.s32.totalorder %s283, 15
        %s287 = scalar_select %p286, %s283, 15
        %s288 = smul.addr %s285, 16
        %s289 = sadd.s32 %s287, %s288
        %s290 = scalar_lea.vmem %s3, %s289
        %p291 = scmp.lt.s32.totalorder %s18, 0
        %s292 = scalar_select %p291, %s18, 0
        %s293 = scalar_lea.vmem %s0, %s292
        %s294 = smul.u32 2, %s19
        %s295 = smul.u32 2, %s19
        %p296 = scmp.lt.s32.totalorder %s295, 15
        %s297 = scalar_select %p296, %s295, 15
        %s298 = scalar_lea.vmem %s2, %s297
        %s299 = smul.u32 2, %s19
        %s300 = smul.u32 2, %s19
        %p301 = scmp.lt.s32.totalorder %s18, 0
        %s302 = scalar_select %p301, %s18, 0
        %p303 = scmp.lt.s32.totalorder %s300, 15
        %s304 = scalar_select %p303, %s300, 15
        %s305 = smul.addr %s302, 16
        %s306 = sadd.s32 %s304, %s305
        %s307 = scalar_lea.vmem %s3, %s306
        %s308 = smul.u32 2, %s19
        %v310 = vld [vmem:[%s293] sm:$0x1]
        %v311 = vld [vmem:[%s260] sm:$0xff]
        %v312 = vld [vmem:[%s260 + $0x8] sm:$0xff]
        %v313 = vld [vmem:[%s260 + $0x10] sm:$0xff]
        %v314 = vld [vmem:[%s260 + $0x18] sm:$0xff]
        %v315 = vld [vmem:[%s260 + $0x20] sm:$0xff]
        %v316 = vld [vmem:[%s260 + $0x28] sm:$0xff]
        %v317 = vld [vmem:[%s260 + $0x30] sm:$0xff]
        %v318 = vld [vmem:[%s260 + $0x38] sm:$0xff]
        %v319 = vld [vmem:[%s260 + $0x40] sm:$0xff]
        %v320 = vld [vmem:[%s260 + $0x48] sm:$0xff]
        %v321 = vld [vmem:[%s260 + $0x50] sm:$0xff]
        %v322 = vld [vmem:[%s260 + $0x58] sm:$0xff]
        %v323 = vld [vmem:[%s260 + $0x60] sm:$0x33]
        %v324 = vld [vmem:[%s298] sm:$0x3]
        %v326 = vlaneseq
        %v327 = vshrl.u32 %v326, 7
        %v328 = vsub.s32 0, %v327
        %v329 = vrot.slane %v324, %v328
        %v330 = vlaneseq
        %v331 = vshrl.u32 %v330, 7
        %v332 = vsub.s32 1, %v331
        %v333 = vrot.slane %v324, %v332
        %v349 = vunpack.c.l.b16 %v311
        %v350 = vunpack.c.h.b16 %v311
        %v351 = vunpack.c.l.b16 %v312
        %v352 = vunpack.c.h.b16 %v312
        %v353 = vunpack.c.l.b16 %v313
        %v354 = vunpack.c.h.b16 %v313
        %v355 = vunpack.c.l.b16 %v314
        %v356 = vunpack.c.h.b16 %v314
        %v357 = vunpack.c.l.b16 %v315
        %v358 = vunpack.c.h.b16 %v315
        %v359 = vunpack.c.l.b16 %v316
        %v360 = vunpack.c.h.b16 %v316
        %v361 = vunpack.c.l.b16 %v317
        %v362 = vunpack.c.h.b16 %v317
        %v363 = vunpack.c.l.b16 %v318
        %v364 = vunpack.c.h.b16 %v318
        %v365 = vunpack.c.l.b16 %v319
        %v366 = vunpack.c.h.b16 %v319
        %v367 = vunpack.c.l.b16 %v320
        %v368 = vunpack.c.h.b16 %v320
        %v369 = vunpack.c.l.b16 %v321
        %v370 = vunpack.c.h.b16 %v321
        %v371 = vunpack.c.l.b16 %v322
        %v372 = vunpack.c.h.b16 %v322
        %v373 = vunpack.c.l.b16 %v323
        %v374 = vunpack.c.h.b16 %v323
        %v375 = vpack.c.b16 %v351, %v349
        %v376 = vpack.c.b16 %v352, %v350
        %v377 = vpack.c.b16 %v355, %v353
        %v378 = vpack.c.b16 %v356, %v354
        %v379 = vpack.c.b16 %v359, %v357
        %v380 = vpack.c.b16 %v360, %v358
        %v381 = vpack.c.b16 %v363, %v361
        %v382 = vpack.c.b16 %v364, %v362
        %v383 = vpack.c.b16 %v367, %v365
        %v384 = vpack.c.b16 %v368, %v366
        %v385 = vpack.c.b16 %v371, %v369
        %v386 = vpack.c.b16 %v372, %v370
        %v387 = vpack.c.b16 %v373, %v373
        %v388 = vpack.c.b16 %v374, %v374
        %vm401 = vcmask 818176
        %v403 = vsel %vm401, %v310, 0
        %vm405 = vcmask 1041408
        %v407 = vsel %vm405, %v387, 0
        %v410 = vsel %vm405, %v388, 0
        %412 = vmatprep.subr.bf16.mxu0 %v376
        %413 = vmatpush1.bf16.msra.mxu0 %v375
        %414 = vmatprep.subr.bf16.mxu0 %v378
        %415 = vmatpush1.bf16.msra.mxu0 %v377
        %416 = vmatprep.subr.bf16.mxu0 %v380
        %417 = vmatpush1.bf16.msra.mxu0 %v379
        %418 = vmatprep.subr.bf16.mxu0 %v382
        %419 = vmatpush1.bf16.msra.mxu0 %v381
        %420 = vmatprep.subr.bf16.mxu0 %v384
        %421 = vmatpush1.bf16.msra.mxu0 %v383
        %422 = vmatprep.subr.bf16.mxu0 %v386
        %423 = vmatpush1.bf16.msra.mxu0 %v385
        %424 = vmatprep.subr.bf16.mxu0 %v410
        %425 = vmatpush1.bf16.msra.mxu0 %v407
        %426 = vmatprep.subr.bf16.mxu0 0
        %427 = vmatpush1.bf16.msra.mxu0 0
        %428 = vmatprep.subr.bf16.mxu0 0
        %429 = vmatpush1.bf16.msra.mxu0 0
        %430 = vmatprep.subr.bf16.mxu0 0
        %431 = vmatpush1.bf16.msra.mxu0 0
        %432 = vmatprep.subr.bf16.mxu0 0
        %433 = vmatpush1.bf16.msra.mxu0 0
        %434 = vmatprep.subr.bf16.mxu0 0
        %435 = vmatpush1.bf16.msra.mxu0 0
        %436 = vmatprep.subr.bf16.mxu0 0
        %437 = vmatpush1.bf16.msra.mxu0 0
        %438 = vmatprep.subr.bf16.mxu0 0
        %439 = vmatpush1.bf16.msra.mxu0 0
        %440 = vmatprep.subr.bf16.mxu0 0
        %441 = vmatpush1.bf16.msra.mxu0 0
        %442 = vmatprep.subr.bf16.mxu0 0
        %443 = vmatpush1.bf16.msra.mxu0 0
        %444 = vmatprep.mubr.bf16.mxu0 0
        %445 = vmatmul.mubr.bf16.gmra.mrb[0].mxu0 %v403
        %v446 = vpop.f32.mrb[0].mxu0
        %v447 = vadd.f32 %v329, %v446
        %v448 = vpop.f32.mrb[0].mxu0
        %v449 = vadd.f32 %v333, %v448
        %v450 = vpop.f32.mrb[0].mxu0
        %v451 = vpop.f32.mrb[0].mxu0
        %452 = vdwg.mxu0
        %v453 = vmax.f32 %v447, 0.0
        %v454 = vmax.f32 %v449, 0.0
        %v455 = vpack.c.bf16 %v453, %v453
        %v456 = vpack.c.bf16 %v454, %v454
        %v459 = vcombine.low %v455, %v456
        %v461 = vunpack.c.l.s4 1966171168
        %v462 = vunpack.c.0.s8 %v461
        %v463 = vlaneseq
        %v464 = vshrl.u32 %v463, 7
        %v465 = vsub.s32 %v462, %v464
        %v466 = vrot.slane %v459, %v465
        %v468 = vunpack.c.l.s4 1966171168
        %v469 = vunpack.c.0.s8 %v468
        %v470 = vlaneseq
        %v471 = vshrl.u32 %v470, 7
        %v472 = vsub.s32 %v469, %v471
        %v473 = vrot.slane %v466, %v472
        %475 = vst [vmem:[%s307] sm:$0x3] %v473
        %s476 = smul.u32 2, %s19
        %p477 = scmp.lt.s32.totalorder %s18, 0
        %s478 = scalar_select %p477, %s18, 0
        %p479 = scmp.lt.s32.totalorder %s476, 15
        %s480 = scalar_select %p479, %s476, 15
        %s481 = smul.addr %s478, 16
        %s482 = sadd.s32 %s480, %s481
        %s483 = scalar_lea.vmem %s3, %s482
        // Predicated region
        $region71: #{generator_forward.4} parent=65 // pred_check
          %p484 = pneg %p124
        $region72: #{generator_forward.4} parent=65 // pred_check_branch
          %486 = sbr.rel (%p484) target = $region74
        $region73: #{generator_forward.4} parent=65 // pred_region
          %s487 = smul.u32 2, %s19
        $region74: #{generator_forward.4} parent=65 // pred_fallthru
          _
      $region66: #{generator_forward.4} parent=5 // pred_fallthru
        _
      %p488 = scmp.le.s32.totalorder 2, %s9
      // Predicated region
      $region75: #{generator_forward.4} parent=5 // pred_check
        %p489 = pneg %p488
      $region76: #{generator_forward.4} parent=5 // pred_check_branch
        %491 = sbr.rel (%p489) target = $region78
      $region77: #{generator_forward.4} parent=5 // pred_region
        %s492 = ssub.s32 %s9, 2
        // Predicated region
        $region79: #{generator_forward.4} parent=77 // pred_check
          %p493 = pneg %p130
        $region80: #{generator_forward.4} parent=77 // pred_check_branch
          %495 = sbr.rel (%p493) target = $region82
        $region81: #{generator_forward.4} parent=77 // pred_region
          %s496 = smul.u32 2, %s21
          %p497 = scmp.lt.s32.totalorder %s20, 0
          %s498 = scalar_select %p497, %s20, 0
          %p499 = scmp.lt.s32.totalorder %s496, 15
          %s500 = scalar_select %p499, %s496, 15
          %s501 = smul.addr %s498, 16
          %s502 = sadd.s32 %s500, %s501
          %s503 = scalar_lea.vmem %s3, %s502
        $region82: #{generator_forward.4} parent=77 // pred_fallthru
          _
      $region78: #{generator_forward.4} parent=5 // pred_fallthru
        _
    $region6: #{generator_forward.4} parent=1 // loop_footer
      %s13 = sadd.s32 1, %s9
    $region7: #{generator_forward.4} parent=1 // loop_footer_branch
      %8 = sbr.rel target = $region3
    $region8: #{generator_forward.4} parent=1 // loop_exit
      _

// kernel: tile.28
$region0: #{tile.28}
  #allocation0 [shape = 's32[1]{0}', space=sflag, size = 0x4, scoped, tag = 'scoped memory for tile.28']
  %s0 = inlined_call_operand.vmem [shape: f32[64], index: 0, kind: input, shape index: {}]
  %s1 = inlined_call_operand.vmem [shape: f32[4,64], index: 1, kind: output, shape index: {}]
  // Predicated region
  $region2: #{tile.28} parent=0 // pred_check
    _
  $region3: #{tile.28} parent=0 // pred_check_branch
    %3 = sbr.rel (0) target = $region5
  $region4: #{tile.28} parent=0 // pred_region
    _
  $region5: #{tile.28} parent=0 // pred_fallthru
    _
  %v4 = vld [vmem:[%s0] ss:$0 sm:$0xff]
  %5 = vst [vmem:[%s1] sm:$0xf] %v4

// kernel: tile.29
$region0: #{tile.29}
  %s0 = inlined_call_operand.vmem [shape: f32[4,64], index: 0, kind: input, shape index: {}]
  %s1 = inlined_call_operand.vmem [shape: f32[1,256], index: 1, kind: output, shape index: {}]
  $region1: #{tile.29} parent=0
    #allocation0 [shape = 'u8[8192]{0}', space=vmem, size = 0x2000, scoped, tag = 'scoped mem for output reshape']
    #allocation1 [shape = 'u8[4096]{0}', space=vmem, size = 0x1000, scoped, tag = 'scoped mem for input reshape']
    %s3 = sshllo.u32 0, 4
    %v4 = vld [vmem:[%s0] sm:%s3]
    %5 = vst [vmem:[#allocation1] sm:%s3] %v4
    %s6 = smov 3
    %v7 = vld [vmem:[#allocation1] ss:$2 sm:%s6]
    %vm8 = vcmask 523264
    %9 = vst.msk [vmem:[#allocation0] ss:$8 sm:$0x3] %vm8, %v7
    %s10 = scalar_lea.vmem [#allocation1], 1
    %s11 = smov 3
    %v12 = vld [vmem:[%s10] ss:$2 sm:%s11]
    %13 = vrot.lane.b32.xlu0 %v12, 64
    %v14 = vpop.permute.xlu0 %13
    %vm15 = vcmask 1048064
    %16 = vst.msk [vmem:[#allocation0] ss:$8 sm:$0x3] %vm15, %v14
    %s18 = sshllo.u32 0, 1
    %v20 = vld [vmem:[#allocation0] sm:%s18]
    %s21 = sshllo.u32 0, 1
    %22 = vst [vmem:[%s1] sm:%s21] %v20
    %s23 = scalar_lea.vmem [#allocation0], 8
    %v24 = vld [vmem:[%s23] sm:%s18]
    %s25 = sshllo.u32 0, 1
    %s26 = scalar_lea.vmem %s1, 1
    %27 = vst [vmem:[%s26] sm:%s25] %v24

// kernel: generator_forward.5
$region0: #{generator_forward.5}
  #allocation0 [shape = 'u32[]', space=smem, size = 0x4, offset = 0x4, fixed_abs, tag = 'smem constant byte address 0x4 - core index']
  #allocation1 [shape = 'u32[144,128]{1,0:T(1,128)}', space=vmem, size = 0x12000, scoped, tag = 'internal scratch']
  %s0 = inlined_call_operand.vmem [shape: bf16[32,1242], index: 0, kind: input, shape index: {}]
  %s1 = inlined_call_operand.vmem [shape: bf16[1242,256], index: 1, kind: input, shape index: {}]
  %s2 = inlined_call_operand.vmem [shape: f32[1,256], index: 2, kind: input, shape index: {}]
  %s3 = inlined_call_operand.vmem [shape: bf16[32,256], index: 3, kind: output, shape index: {}]
  %s4 = sld [smem:[#allocation0]]
  $region22: #{generator_forward.5} parent=0
    _
  %s6 = ssub.s32 1, %s4
  %s7 = scalar_select 0, %s6, %s4
  // Predicated region
  $region2: #{generator_forward.5} parent=0 // pred_check
    _
  $region3: #{generator_forward.5} parent=0 // pred_check_branch
    %9 = sbr.rel (0) target = $region5
  $region4: #{generator_forward.5} parent=0 // pred_region
    _
  $region5: #{generator_forward.5} parent=0 // pred_fallthru
    _
  // Predicated region
  $region6: #{generator_forward.5} parent=0 // pred_check
    _
  $region7: #{generator_forward.5} parent=0 // pred_check_branch
    %11 = sbr.rel (0) target = $region9
  $region8: #{generator_forward.5} parent=0 // pred_region
    _
  $region9: #{generator_forward.5} parent=0 // pred_fallthru
    _
  // Predicated region
  $region10: #{generator_forward.5} parent=0 // pred_check
    _
  $region11: #{generator_forward.5} parent=0 // pred_check_branch
    %13 = sbr.rel (0) target = $region13
  $region12: #{generator_forward.5} parent=0 // pred_region
    _
  $region13: #{generator_forward.5} parent=0 // pred_fallthru
    _
  %v15 = vld [vmem:[%s0] sm:$0xff]
  %v16 = vld [vmem:[%s0 + $0x8] sm:$0xff]
  %v17 = vld [vmem:[%s0 + $0x10] sm:$0xff]
  %v18 = vld [vmem:[%s0 + $0x18] sm:$0xff]
  %v19 = vld [vmem:[%s0 + $0x20] sm:$0xff]
  %v20 = vld [vmem:[%s0 + $0x28] sm:$0xff]
  %v21 = vld [vmem:[%s0 + $0x30] sm:$0xff]
  %v22 = vld [vmem:[%s0 + $0x38] sm:$0xff]
  %v23 = vld [vmem:[%s0 + $0x40] sm:$0xff]
  %v24 = vld [vmem:[%s0 + $0x48] sm:$0xff]
  %v25 = vld [vmem:[%s0 + $0x50] sm:$0xff]
  %v26 = vld [vmem:[%s0 + $0x58] sm:$0xff]
  %v27 = vld [vmem:[%s0 + $0x60] sm:$0xff]
  %v28 = vld [vmem:[%s0 + $0x68] sm:$0xff]
  %v29 = vld [vmem:[%s0 + $0x70] sm:$0xff]
  %v30 = vld [vmem:[%s0 + $0x78] sm:$0xff]
  %v31 = vld [vmem:[%s0 + $0x80] sm:$0xff]
  %v32 = vld [vmem:[%s0 + $0x88] sm:$0xff]
  %v33 = vld [vmem:[%s0 + $0x90] sm:$0xff]
  %v34 = vld [vmem:[%s0 + $0x98] sm:$0xff]
  %v35 = vld [vmem:[%s1] sm:$0xff]
  %v36 = vld [vmem:[%s1 + $0x8] sm:$0xff]
  %v37 = vld [vmem:[%s1 + $0x10] sm:$0xff]
  %v38 = vld [vmem:[%s1 + $0x18] sm:$0xff]
  %v39 = vld [vmem:[%s1 + $0x20] sm:$0xff]
  %v40 = vld [vmem:[%s1 + $0x28] sm:$0xff]
  %v41 = vld [vmem:[%s1 + $0x30] sm:$0xff]
  %v42 = vld [vmem:[%s1 + $0x38] sm:$0xff]
  %v43 = vld [vmem:[%s1 + $0x40] sm:$0xff]
  %v44 = vld [vmem:[%s1 + $0x48] sm:$0xff]
  %v45 = vld [vmem:[%s1 + $0x50] sm:$0xff]
  %v46 = vld [vmem:[%s1 + $0x58] sm:$0xff]
  %v47 = vld [vmem:[%s1 + $0x60] sm:$0xff]
  %v48 = vld [vmem:[%s1 + $0x68] sm:$0xff]
  %v49 = vld [vmem:[%s1 + $0x70] sm:$0xff]
  %v50 = vld [vmem:[%s1 + $0x78] sm:$0xff]
  %v51 = vld [vmem:[%s1 + $0x80] sm:$0xff]
  %v52 = vld [vmem:[%s1 + $0x88] sm:$0xff]
  %v53 = vld [vmem:[%s1 + $0x90] sm:$0xff]
  %v54 = vld [vmem:[%s1 + $0x98] sm:$0xff]
  %v55 = vld [vmem:[%s1 + $0xa0] sm:$0xff]
  %v56 = vld [vmem:[%s1 + $0xa8] sm:$0xff]
  %v57 = vld [vmem:[%s1 + $0xb0] sm:$0xff]
  %v58 = vld [vmem:[%s1 + $0xb8] sm:$0xff]
  %v59 = vld [vmem:[%s1 + $0xc0] sm:$0xff]
  %v60 = vld [vmem:[%s1 + $0xc8] sm:$0xff]
  %v61 = vld [vmem:[%s1 + $0xd0] sm:$0xff]
  %v62 = vld [vmem:[%s1 + $0xd8] sm:$0xff]
  %v63 = vld [vmem:[%s1 + $0xe0] sm:$0xff]
  %v64 = vld [vmem:[%s1 + $0xe8] sm:$0xff]
  %v65 = vld [vmem:[%s1 + $0xf0] sm:$0xff]
  %v66 = vld [vmem:[%s1 + $0xf8] sm:$0xff]
  %v67 = vld [vmem:[%s1 + $0x100] sm:$0xff]
  %v68 = vld [vmem:[%s1 + $0x108] sm:$0xff]
  %v69 = vld [vmem:[%s1 + $0x110] sm:$0xff]
  %v70 = vld [vmem:[%s1 + $0x118] sm:$0xff]
  %v71 = vld [vmem:[%s1 + $0x120] sm:$0xff]
  %v72 = vld [vmem:[%s1 + $0x128] sm:$0xff]
  %v73 = vld [vmem:[%s1 + $0x130] sm:$0xff]
  %v74 = vld [vmem:[%s1 + $0x138] sm:$0xff]
  %v75 = vld [vmem:[%s1 + $0x140] sm:$0xff]
  %v76 = vld [vmem:[%s1 + $0x148] sm:$0xff]
  %v77 = vld [vmem:[%s1 + $0x150] sm:$0xff]
  %v78 = vld [vmem:[%s1 + $0x158] sm:$0xff]
  %v79 = vld [vmem:[%s1 + $0x160] sm:$0xff]
  %v80 = vld [vmem:[%s1 + $0x168] sm:$0xff]
  %v81 = vld [vmem:[%s1 + $0x170] sm:$0xff]
  %v82 = vld [vmem:[%s1 + $0x178] sm:$0xff]
  %v83 = vld [vmem:[%s1 + $0x180] sm:$0xff]
  %v84 = vld [vmem:[%s1 + $0x188] sm:$0xff]
  %v85 = vld [vmem:[%s1 + $0x190] sm:$0xff]
  %v86 = vld [vmem:[%s1 + $0x198] sm:$0xff]
  %v87 = vld [vmem:[%s1 + $0x1a0] sm:$0xff]
  %v88 = vld [vmem:[%s1 + $0x1a8] sm:$0xff]
  %v89 = vld [vmem:[%s1 + $0x1b0] sm:$0xff]
  %v90 = vld [vmem:[%s1 + $0x1b8] sm:$0xff]
  %v91 = vld [vmem:[%s1 + $0x1c0] sm:$0xff]
  %v92 = vld [vmem:[%s1 + $0x1c8] sm:$0xff]
  %v93 = vld [vmem:[%s1 + $0x1d0] sm:$0xff]
  %v94 = vld [vmem:[%s1 + $0x1d8] sm:$0xff]
  %v95 = vld [vmem:[%s1 + $0x1e0] sm:$0xff]
  %v96 = vld [vmem:[%s1 + $0x1e8] sm:$0xff]
  %v97 = vld [vmem:[%s1 + $0x1f0] sm:$0xff]
  %v98 = vld [vmem:[%s1 + $0x1f8] sm:$0xff]
  %v99 = vld [vmem:[%s1 + $0x200] sm:$0xff]
  %v100 = vld [vmem:[%s1 + $0x208] sm:$0xff]
  %v101 = vld [vmem:[%s1 + $0x210] sm:$0xff]
  %v102 = vld [vmem:[%s1 + $0x218] sm:$0xff]
  %v103 = vld [vmem:[%s1 + $0x220] sm:$0xff]
  %v104 = vld [vmem:[%s1 + $0x228] sm:$0xff]
  %v105 = vld [vmem:[%s1 + $0x230] sm:$0xff]
  %v106 = vld [vmem:[%s1 + $0x238] sm:$0xff]
  %v107 = vld [vmem:[%s1 + $0x240] sm:$0xff]
  %v108 = vld [vmem:[%s1 + $0x248] sm:$0xff]
  %v109 = vld [vmem:[%s1 + $0x250] sm:$0xff]
  %v110 = vld [vmem:[%s1 + $0x258] sm:$0xff]
  %v111 = vld [vmem:[%s1 + $0x260] sm:$0xff]
  %v112 = vld [vmem:[%s1 + $0x268] sm:$0xff]
  %v113 = vld [vmem:[%s1 + $0x270] sm:$0xff]
  %v114 = vld [vmem:[%s1 + $0x278] sm:$0xff]
  %v115 = vld [vmem:[%s1 + $0x280] sm:$0xff]
  %v116 = vld [vmem:[%s1 + $0x288] sm:$0xff]
  %v117 = vld [vmem:[%s1 + $0x290] sm:$0xff]
  %v118 = vld [vmem:[%s1 + $0x298] sm:$0xff]
  %v119 = vld [vmem:[%s1 + $0x2a0] sm:$0xff]
  %v120 = vld [vmem:[%s1 + $0x2a8] sm:$0xff]
  %v121 = vld [vmem:[%s1 + $0x2b0] sm:$0xff]
  %v122 = vld [vmem:[%s1 + $0x2b8] sm:$0xff]
  %v123 = vld [vmem:[%s1 + $0x2c0] sm:$0xff]
  %v124 = vld [vmem:[%s1 + $0x2c8] sm:$0xff]
  %v125 = vld [vmem:[%s1 + $0x2d0] sm:$0xff]
  %v126 = vld [vmem:[%s1 + $0x2d8] sm:$0xff]
  %v127 = vld [vmem:[%s1 + $0x2e0] sm:$0xff]
  %v128 = vld [vmem:[%s1 + $0x2e8] sm:$0xff]
  %v129 = vld [vmem:[%s1 + $0x2f0] sm:$0xff]
  %v130 = vld [vmem:[%s1 + $0x2f8] sm:$0xff]
  %v131 = vld [vmem:[%s1 + $0x300] sm:$0xff]
  %v132 = vld [vmem:[%s1 + $0x308] sm:$0xff]
  %v133 = vld [vmem:[%s1 + $0x310] sm:$0xff]
  %v134 = vld [vmem:[%s1 + $0x318] sm:$0xff]
  %v135 = vld [vmem:[%s1 + $0x320] sm:$0xff]
  %v136 = vld [vmem:[%s1 + $0x328] sm:$0xff]
  %v137 = vld [vmem:[%s1 + $0x330] sm:$0xff]
  %v138 = vld [vmem:[%s1 + $0x338] sm:$0xff]
  %v139 = vld [vmem:[%s1 + $0x340] sm:$0xff]
  %v140 = vld [vmem:[%s1 + $0x348] sm:$0xff]
  %v141 = vld [vmem:[%s1 + $0x350] sm:$0xff]
  %v142 = vld [vmem:[%s1 + $0x358] sm:$0xff]
  %v143 = vld [vmem:[%s1 + $0x360] sm:$0xff]
  %v144 = vld [vmem:[%s1 + $0x368] sm:$0xff]
  %v145 = vld [vmem:[%s1 + $0x370] sm:$0xff]
  %v146 = vld [vmem:[%s1 + $0x378] sm:$0xff]
  %v147 = vld [vmem:[%s1 + $0x380] sm:$0xff]
  %v148 = vld [vmem:[%s1 + $0x388] sm:$0xff]
  %v149 = vld [vmem:[%s1 + $0x390] sm:$0xff]
  %v150 = vld [vmem:[%s1 + $0x398] sm:$0xff]
  %v151 = vld [vmem:[%s1 + $0x3a0] sm:$0xff]
  %v152 = vld [vmem:[%s1 + $0x3a8] sm:$0xff]
  %v153 = vld [vmem:[%s1 + $0x3b0] sm:$0xff]
  %v154 = vld [vmem:[%s1 + $0x3b8] sm:$0xff]
  %v155 = vld [vmem:[%s1 + $0x3c0] sm:$0xff]
  %v156 = vld [vmem:[%s1 + $0x3c8] sm:$0xff]
  %v157 = vld [vmem:[%s1 + $0x3d0] sm:$0xff]
  %v158 = vld [vmem:[%s1 + $0x3d8] sm:$0xff]
  %v159 = vld [vmem:[%s1 + $0x3e0] sm:$0xff]
  %v160 = vld [vmem:[%s1 + $0x3e8] sm:$0xff]
  %v161 = vld [vmem:[%s1 + $0x3f0] sm:$0xff]
  %v162 = vld [vmem:[%s1 + $0x3f8] sm:$0xff]
  %v163 = vld [vmem:[%s1 + $0x400] sm:$0xff]
  %v164 = vld [vmem:[%s1 + $0x408] sm:$0xff]
  %v165 = vld [vmem:[%s1 + $0x410] sm:$0xff]
  %v166 = vld [vmem:[%s1 + $0x418] sm:$0xff]
  %v167 = vld [vmem:[%s1 + $0x420] sm:$0xff]
  %v168 = vld [vmem:[%s1 + $0x428] sm:$0xff]
  %v169 = vld [vmem:[%s1 + $0x430] sm:$0xff]
  %v170 = vld [vmem:[%s1 + $0x438] sm:$0xff]
  %v171 = vld [vmem:[%s1 + $0x440] sm:$0xff]
  %v172 = vld [vmem:[%s1 + $0x448] sm:$0xff]
  %v173 = vld [vmem:[%s1 + $0x450] sm:$0xff]
  %v174 = vld [vmem:[%s1 + $0x458] sm:$0xff]
  %v175 = vld [vmem:[%s1 + $0x460] sm:$0xff]
  %v176 = vld [vmem:[%s1 + $0x468] sm:$0xff]
  %v177 = vld [vmem:[%s1 + $0x470] sm:$0xff]
  %v178 = vld [vmem:[%s1 + $0x478] sm:$0xff]
  %v179 = vld [vmem:[%s1 + $0x480] sm:$0xff]
  %v180 = vld [vmem:[%s1 + $0x488] sm:$0xff]
  %v181 = vld [vmem:[%s1 + $0x490] sm:$0xff]
  %v182 = vld [vmem:[%s1 + $0x498] sm:$0xff]
  %v183 = vld [vmem:[%s1 + $0x4a0] sm:$0xff]
  %v184 = vld [vmem:[%s1 + $0x4a8] sm:$0xff]
  %v185 = vld [vmem:[%s1 + $0x4b0] sm:$0xff]
  %v186 = vld [vmem:[%s1 + $0x4b8] sm:$0xff]
  %v187 = vld [vmem:[%s1 + $0x4c0] sm:$0xff]
  %v188 = vld [vmem:[%s1 + $0x4c8] sm:$0xff]
  %v189 = vld [vmem:[%s1 + $0x4d0] sm:$0xff]
  %v190 = vld [vmem:[%s1 + $0x4d8] sm:$0x11]
  %v191 = vld [vmem:[%s2] sm:$0x3]
  %v193 = vlaneseq
  %v194 = vshrl.u32 %v193, 7
  %v195 = vsub.s32 0, %v194
  %v196 = vrot.slane %v191, %v195
  %v197 = vlaneseq
  %v198 = vshrl.u32 %v197, 7
  %v199 = vsub.s32 1, %v198
  %v200 = vrot.slane %v191, %v199
  %v223 = vunpack.c.l.b16 %v15
  %v224 = vunpack.c.h.b16 %v15
  %v225 = vunpack.c.l.b16 %v16
  %v226 = vunpack.c.h.b16 %v16
  %v227 = vunpack.c.l.b16 %v17
  %v228 = vunpack.c.h.b16 %v17
  %v229 = vunpack.c.l.b16 %v18
  %v230 = vunpack.c.h.b16 %v18
  %v231 = vunpack.c.l.b16 %v19
  %v232 = vunpack.c.h.b16 %v19
  %v233 = vunpack.c.l.b16 %v20
  %v234 = vunpack.c.h.b16 %v20
  %v235 = vunpack.c.l.b16 %v21
  %v236 = vunpack.c.h.b16 %v21
  %v237 = vunpack.c.l.b16 %v22
  %v238 = vunpack.c.h.b16 %v22
  %v239 = vunpack.c.l.b16 %v23
  %v240 = vunpack.c.h.b16 %v23
  %v241 = vunpack.c.l.b16 %v24
  %v242 = vunpack.c.h.b16 %v24
  %v243 = vunpack.c.l.b16 %v25
  %v244 = vunpack.c.h.b16 %v25
  %v245 = vunpack.c.l.b16 %v26
  %v246 = vunpack.c.h.b16 %v26
  %v247 = vunpack.c.l.b16 %v27
  %v248 = vunpack.c.h.b16 %v27
  %v249 = vunpack.c.l.b16 %v28
  %v250 = vunpack.c.h.b16 %v28
  %v251 = vunpack.c.l.b16 %v29
  %v252 = vunpack.c.h.b16 %v29
  %v253 = vunpack.c.l.b16 %v30
  %v254 = vunpack.c.h.b16 %v30
  %v255 = vunpack.c.l.b16 %v31
  %v256 = vunpack.c.h.b16 %v31
  %v257 = vunpack.c.l.b16 %v32
  %v258 = vunpack.c.h.b16 %v32
  %v259 = vunpack.c.l.b16 %v33
  %v260 = vunpack.c.h.b16 %v33
  %v261 = vunpack.c.l.b16 %v34
  %v262 = vunpack.c.h.b16 %v34
  %v263 = vpack.c.b16 %v233, %v223
  %v264 = vpack.c.b16 %v234, %v224
  %v265 = vpack.c.b16 %v235, %v225
  %v266 = vpack.c.b16 %v236, %v226
  %v267 = vpack.c.b16 %v237, %v227
  %v268 = vpack.c.b16 %v238, %v228
  %v269 = vpack.c.b16 %v239, %v229
  %v270 = vpack.c.b16 %v240, %v230
  %v271 = vpack.c.b16 %v241, %v231
  %v272 = vpack.c.b16 %v242, %v232
  %v273 = vpack.c.b16 %v253, %v243
  %v274 = vpack.c.b16 %v254, %v244
  %v275 = vpack.c.b16 %v255, %v245
  %v276 = vpack.c.b16 %v256, %v246
  %v277 = vpack.c.b16 %v257, %v247
  %v278 = vpack.c.b16 %v258, %v248
  %v279 = vpack.c.b16 %v259, %v249
  %v280 = vpack.c.b16 %v260, %v250
  %v281 = vpack.c.b16 %v261, %v251
  %v282 = vpack.c.b16 %v262, %v252
  %v457 = vunpack.c.l.b16 %v35
  %v458 = vunpack.c.h.b16 %v35
  %v459 = vunpack.c.l.b16 %v36
  %v460 = vunpack.c.h.b16 %v36
  %v461 = vunpack.c.l.b16 %v37
  %v462 = vunpack.c.h.b16 %v37
  %v463 = vunpack.c.l.b16 %v38
  %v464 = vunpack.c.h.b16 %v38
  %v465 = vunpack.c.l.b16 %v39
  %v466 = vunpack.c.h.b16 %v39
  %v467 = vunpack.c.l.b16 %v40
  %v468 = vunpack.c.h.b16 %v40
  %v469 = vunpack.c.l.b16 %v41
  %v470 = vunpack.c.h.b16 %v41
  %v471 = vunpack.c.l.b16 %v42
  %v472 = vunpack.c.h.b16 %v42
  %v473 = vunpack.c.l.b16 %v43
  %v474 = vunpack.c.h.b16 %v43
  %v475 = vunpack.c.l.b16 %v44
  %v476 = vunpack.c.h.b16 %v44
  %v477 = vunpack.c.l.b16 %v45
  %v478 = vunpack.c.h.b16 %v45
  %v479 = vunpack.c.l.b16 %v46
  %v480 = vunpack.c.h.b16 %v46
  %v481 = vunpack.c.l.b16 %v47
  %v482 = vunpack.c.h.b16 %v47
  %v483 = vunpack.c.l.b16 %v48
  %v484 = vunpack.c.h.b16 %v48
  %v485 = vunpack.c.l.b16 %v49
  %v486 = vunpack.c.h.b16 %v49
  %v487 = vunpack.c.l.b16 %v50
  %v488 = vunpack.c.h.b16 %v50
  %v489 = vunpack.c.l.b16 %v51
  %v490 = vunpack.c.h.b16 %v51
  %v491 = vunpack.c.l.b16 %v52
  %v492 = vunpack.c.h.b16 %v52
  %v493 = vunpack.c.l.b16 %v53
  %v494 = vunpack.c.h.b16 %v53
  %v495 = vunpack.c.l.b16 %v54
  %v496 = vunpack.c.h.b16 %v54
  %v497 = vunpack.c.l.b16 %v55
  %v498 = vunpack.c.h.b16 %v55
  %v499 = vunpack.c.l.b16 %v56
  %v500 = vunpack.c.h.b16 %v56
  %v501 = vunpack.c.l.b16 %v57
  %v502 = vunpack.c.h.b16 %v57
  %v503 = vunpack.c.l.b16 %v58
  %v504 = vunpack.c.h.b16 %v58
  %v505 = vunpack.c.l.b16 %v59
  %v506 = vunpack.c.h.b16 %v59
  %v507 = vunpack.c.l.b16 %v60
  %v508 = vunpack.c.h.b16 %v60
  %v509 = vunpack.c.l.b16 %v61
  %v510 = vunpack.c.h.b16 %v61
  %v511 = vunpack.c.l.b16 %v62
  %v512 = vunpack.c.h.b16 %v62
  %v513 = vunpack.c.l.b16 %v63
  %v514 = vunpack.c.h.b16 %v63
  %v515 = vunpack.c.l.b16 %v64
  %v516 = vunpack.c.h.b16 %v64
  %v517 = vunpack.c.l.b16 %v65
  %v518 = vunpack.c.h.b16 %v65
  %v519 = vunpack.c.l.b16 %v66
  %v520 = vunpack.c.h.b16 %v66
  %v521 = vunpack.c.l.b16 %v67
  %v522 = vunpack.c.h.b16 %v67
  %v523 = vunpack.c.l.b16 %v68
  %v524 = vunpack.c.h.b16 %v68
  %v525 = vunpack.c.l.b16 %v69
  %v526 = vunpack.c.h.b16 %v69
  %v527 = vunpack.c.l.b16 %v70
  %v528 = vunpack.c.h.b16 %v70
  %v529 = vunpack.c.l.b16 %v71
  %v530 = vunpack.c.h.b16 %v71
  %v531 = vunpack.c.l.b16 %v72
  %v532 = vunpack.c.h.b16 %v72
  %v533 = vunpack.c.l.b16 %v73
  %v534 = vunpack.c.h.b16 %v73
  %v535 = vunpack.c.l.b16 %v74
  %v536 = vunpack.c.h.b16 %v74
  %v537 = vunpack.c.l.b16 %v75
  %v538 = vunpack.c.h.b16 %v75
  %v539 = vunpack.c.l.b16 %v76
  %v540 = vunpack.c.h.b16 %v76
  %v541 = vunpack.c.l.b16 %v77
  %v542 = vunpack.c.h.b16 %v77
  %v543 = vunpack.c.l.b16 %v78
  %v544 = vunpack.c.h.b16 %v78
  %v545 = vunpack.c.l.b16 %v79
  %v546 = vunpack.c.h.b16 %v79
  %v547 = vunpack.c.l.b16 %v80
  %v548 = vunpack.c.h.b16 %v80
  %v549 = vunpack.c.l.b16 %v81
  %v550 = vunpack.c.h.b16 %v81
  %v551 = vunpack.c.l.b16 %v82
  %v552 = vunpack.c.h.b16 %v82
  %v553 = vunpack.c.l.b16 %v83
  %v554 = vunpack.c.h.b16 %v83
  %v555 = vunpack.c.l.b16 %v84
  %v556 = vunpack.c.h.b16 %v84
  %v557 = vunpack.c.l.b16 %v85
  %v558 = vunpack.c.h.b16 %v85
  %v559 = vunpack.c.l.b16 %v86
  %v560 = vunpack.c.h.b16 %v86
  %v561 = vunpack.c.l.b16 %v87
  %v562 = vunpack.c.h.b16 %v87
  %v563 = vunpack.c.l.b16 %v88
  %v564 = vunpack.c.h.b16 %v88
  %v565 = vunpack.c.l.b16 %v89
  %v566 = vunpack.c.h.b16 %v89
  %v567 = vunpack.c.l.b16 %v90
  %v568 = vunpack.c.h.b16 %v90
  %v569 = vunpack.c.l.b16 %v91
  %v570 = vunpack.c.h.b16 %v91
  %v571 = vunpack.c.l.b16 %v92
  %v572 = vunpack.c.h.b16 %v92
  %v573 = vunpack.c.l.b16 %v93
  %v574 = vunpack.c.h.b16 %v93
  %v575 = vunpack.c.l.b16 %v94
  %v576 = vunpack.c.h.b16 %v94
  %v577 = vunpack.c.l.b16 %v95
  %v578 = vunpack.c.h.b16 %v95
  %v579 = vunpack.c.l.b16 %v96
  %v580 = vunpack.c.h.b16 %v96
  %v581 = vunpack.c.l.b16 %v97
  %v582 = vunpack.c.h.b16 %v97
  %v583 = vunpack.c.l.b16 %v98
  %v584 = vunpack.c.h.b16 %v98
  %v585 = vunpack.c.l.b16 %v99
  %v586 = vunpack.c.h.b16 %v99
  %v587 = vunpack.c.l.b16 %v100
  %v588 = vunpack.c.h.b16 %v100
  %v589 = vunpack.c.l.b16 %v101
  %v590 = vunpack.c.h.b16 %v101
  %v591 = vunpack.c.l.b16 %v102
  %v592 = vunpack.c.h.b16 %v102
  %v593 = vunpack.c.l.b16 %v103
  %v594 = vunpack.c.h.b16 %v103
  %v595 = vunpack.c.l.b16 %v104
  %v596 = vunpack.c.h.b16 %v104
  %v597 = vunpack.c.l.b16 %v105
  %v598 = vunpack.c.h.b16 %v105
  %v599 = vunpack.c.l.b16 %v106
  %v600 = vunpack.c.h.b16 %v106
  %v601 = vunpack.c.l.b16 %v107
  %v602 = vunpack.c.h.b16 %v107
  %v603 = vunpack.c.l.b16 %v108
  %v604 = vunpack.c.h.b16 %v108
  %v605 = vunpack.c.l.b16 %v109
  %v606 = vunpack.c.h.b16 %v109
  %v607 = vunpack.c.l.b16 %v110
  %v608 = vunpack.c.h.b16 %v110
  %v609 = vunpack.c.l.b16 %v111
  %v610 = vunpack.c.h.b16 %v111
  %v611 = vunpack.c.l.b16 %v112
  %v612 = vunpack.c.h.b16 %v112
  %v613 = vunpack.c.l.b16 %v113
  %v614 = vunpack.c.h.b16 %v113
  %v615 = vunpack.c.l.b16 %v114
  %v616 = vunpack.c.h.b16 %v114
  %v617 = vunpack.c.l.b16 %v115
  %v618 = vunpack.c.h.b16 %v115
  %v619 = vunpack.c.l.b16 %v116
  %v620 = vunpack.c.h.b16 %v116
  %v621 = vunpack.c.l.b16 %v117
  %v622 = vunpack.c.h.b16 %v117
  %v623 = vunpack.c.l.b16 %v118
  %v624 = vunpack.c.h.b16 %v118
  %v625 = vunpack.c.l.b16 %v119
  %v626 = vunpack.c.h.b16 %v119
  %v627 = vunpack.c.l.b16 %v120
  %v628 = vunpack.c.h.b16 %v120
  %v629 = vunpack.c.l.b16 %v121
  %v630 = vunpack.c.h.b16 %v121
  %v631 = vunpack.c.l.b16 %v122
  %v632 = vunpack.c.h.b16 %v122
  %v633 = vunpack.c.l.b16 %v123
  %v634 = vunpack.c.h.b16 %v123
  %v635 = vunpack.c.l.b16 %v124
  %v636 = vunpack.c.h.b16 %v124
  %v637 = vunpack.c.l.b16 %v125
  %v638 = vunpack.c.h.b16 %v125
  %v639 = vunpack.c.l.b16 %v126
  %v640 = vunpack.c.h.b16 %v126
  %v641 = vunpack.c.l.b16 %v127
  %v642 = vunpack.c.h.b16 %v127
  %v643 = vunpack.c.l.b16 %v128
  %v644 = vunpack.c.h.b16 %v128
  %v645 = vunpack.c.l.b16 %v129
  %v646 = vunpack.c.h.b16 %v129
  %v647 = vunpack.c.l.b16 %v130
  %v648 = vunpack.c.h.b16 %v130
  %v649 = vunpack.c.l.b16 %v131
  %v650 = vunpack.c.h.b16 %v131
  %v651 = vunpack.c.l.b16 %v132
  %v652 = vunpack.c.h.b16 %v132
  %v653 = vunpack.c.l.b16 %v133
  %v654 = vunpack.c.h.b16 %v133
  %v655 = vunpack.c.l.b16 %v134
  %v656 = vunpack.c.h.b16 %v134
  %v657 = vunpack.c.l.b16 %v135
  %v658 = vunpack.c.h.b16 %v135
  %v659 = vunpack.c.l.b16 %v136
  %v660 = vunpack.c.h.b16 %v136
  %v661 = vunpack.c.l.b16 %v137
  %v662 = vunpack.c.h.b16 %v137
  %v663 = vunpack.c.l.b16 %v138
  %v664 = vunpack.c.h.b16 %v138
  %v665 = vunpack.c.l.b16 %v139
  %v666 = vunpack.c.h.b16 %v139
  %v667 = vunpack.c.l.b16 %v140
  %v668 = vunpack.c.h.b16 %v140
  %v669 = vunpack.c.l.b16 %v141
  %v670 = vunpack.c.h.b16 %v141
  %v671 = vunpack.c.l.b16 %v142
  %v672 = vunpack.c.h.b16 %v142
  %v673 = vunpack.c.l.b16 %v143
  %v674 = vunpack.c.h.b16 %v143
  %v675 = vunpack.c.l.b16 %v144
  %v676 = vunpack.c.h.b16 %v144
  %v677 = vunpack.c.l.b16 %v145
  %v678 = vunpack.c.h.b16 %v145
  %v679 = vunpack.c.l.b16 %v146
  %v680 = vunpack.c.h.b16 %v146
  %v681 = vunpack.c.l.b16 %v147
  %v682 = vunpack.c.h.b16 %v147
  %v683 = vunpack.c.l.b16 %v148
  %v684 = vunpack.c.h.b16 %v148
  %v685 = vunpack.c.l.b16 %v149
  %v686 = vunpack.c.h.b16 %v149
  %v687 = vunpack.c.l.b16 %v150
  %v688 = vunpack.c.h.b16 %v150
  %v689 = vunpack.c.l.b16 %v151
  %v690 = vunpack.c.h.b16 %v151
  %v691 = vunpack.c.l.b16 %v152
  %v692 = vunpack.c.h.b16 %v152
  %v693 = vunpack.c.l.b16 %v153
  %v694 = vunpack.c.h.b16 %v153
  %v695 = vunpack.c.l.b16 %v154
  %v696 = vunpack.c.h.b16 %v154
  %v697 = vunpack.c.l.b16 %v155
  %v698 = vunpack.c.h.b16 %v155
  %v699 = vunpack.c.l.b16 %v156
  %v700 = vunpack.c.h.b16 %v156
  %v701 = vunpack.c.l.b16 %v157
  %v702 = vunpack.c.h.b16 %v157
  %v703 = vunpack.c.l.b16 %v158
  %v704 = vunpack.c.h.b16 %v158
  %v705 = vunpack.c.l.b16 %v159
  %v706 = vunpack.c.h.b16 %v159
  %v707 = vunpack.c.l.b16 %v160
  %v708 = vunpack.c.h.b16 %v160
  %v709 = vunpack.c.l.b16 %v161
  %v710 = vunpack.c.h.b16 %v161
  %v711 = vunpack.c.l.b16 %v162
  %v712 = vunpack.c.h.b16 %v162
  %v713 = vunpack.c.l.b16 %v163
  %v714 = vunpack.c.h.b16 %v163
  %v715 = vunpack.c.l.b16 %v164
  %v716 = vunpack.c.h.b16 %v164
  %v717 = vunpack.c.l.b16 %v165
  %v718 = vunpack.c.h.b16 %v165
  %v719 = vunpack.c.l.b16 %v166
  %v720 = vunpack.c.h.b16 %v166
  %v721 = vunpack.c.l.b16 %v167
  %v722 = vunpack.c.h.b16 %v167
  %v723 = vunpack.c.l.b16 %v168
  %v724 = vunpack.c.h.b16 %v168
  %v725 = vunpack.c.l.b16 %v169
  %v726 = vunpack.c.h.b16 %v169
  %v727 = vunpack.c.l.b16 %v170
  %v728 = vunpack.c.h.b16 %v170
  %v729 = vunpack.c.l.b16 %v171
  %v730 = vunpack.c.h.b16 %v171
  %v731 = vunpack.c.l.b16 %v172
  %v732 = vunpack.c.h.b16 %v172
  %v733 = vunpack.c.l.b16 %v173
  %v734 = vunpack.c.h.b16 %v173
  %v735 = vunpack.c.l.b16 %v174
  %v736 = vunpack.c.h.b16 %v174
  %v737 = vunpack.c.l.b16 %v175
  %v738 = vunpack.c.h.b16 %v175
  %v739 = vunpack.c.l.b16 %v176
  %v740 = vunpack.c.h.b16 %v176
  %v741 = vunpack.c.l.b16 %v177
  %v742 = vunpack.c.h.b16 %v177
  %v743 = vunpack.c.l.b16 %v178
  %v744 = vunpack.c.h.b16 %v178
  %v745 = vunpack.c.l.b16 %v179
  %v746 = vunpack.c.h.b16 %v179
  %v747 = vunpack.c.l.b16 %v180
  %v748 = vunpack.c.h.b16 %v180
  %v749 = vunpack.c.l.b16 %v181
  %v750 = vunpack.c.h.b16 %v181
  %v751 = vunpack.c.l.b16 %v182
  %v752 = vunpack.c.h.b16 %v182
  %v753 = vunpack.c.l.b16 %v183
  %v754 = vunpack.c.h.b16 %v183
  %v755 = vunpack.c.l.b16 %v184
  %v756 = vunpack.c.h.b16 %v184
  %v757 = vunpack.c.l.b16 %v185
  %v758 = vunpack.c.h.b16 %v185
  %v759 = vunpack.c.l.b16 %v186
  %v760 = vunpack.c.h.b16 %v186
  %v761 = vunpack.c.l.b16 %v187
  %v762 = vunpack.c.h.b16 %v187
  %v763 = vunpack.c.l.b16 %v188
  %v764 = vunpack.c.h.b16 %v188
  %v765 = vunpack.c.l.b16 %v189
  %v766 = vunpack.c.h.b16 %v189
  %v767 = vunpack.c.l.b16 %v190
  %v768 = vunpack.c.h.b16 %v190
  %v769 = vpack.c.b16 %v459, %v457
  %v770 = vpack.c.b16 %v460, %v458
  %v771 = vpack.c.b16 %v463, %v461
  %v772 = vpack.c.b16 %v464, %v462
  %v773 = vpack.c.b16 %v467, %v465
  %v774 = vpack.c.b16 %v468, %v466
  %v775 = vpack.c.b16 %v471, %v469
  %v776 = vpack.c.b16 %v472, %v470
  %v777 = vpack.c.b16 %v475, %v473
  %v778 = vpack.c.b16 %v476, %v474
  %v779 = vpack.c.b16 %v479, %v477
  %v780 = vpack.c.b16 %v480, %v478
  %v781 = vpack.c.b16 %v483, %v481
  %v782 = vpack.c.b16 %v484, %v482
  %v783 = vpack.c.b16 %v487, %v485
  %v784 = vpack.c.b16 %v488, %v486
  %v785 = vpack.c.b16 %v491, %v489
  %v786 = vpack.c.b16 %v492, %v490
  %v787 = vpack.c.b16 %v495, %v493
  %v788 = vpack.c.b16 %v496, %v494
  %v789 = vpack.c.b16 %v499, %v497
  %v790 = vpack.c.b16 %v500, %v498
  %v791 = vpack.c.b16 %v503, %v501
  %v792 = vpack.c.b16 %v504, %v502
  %v793 = vpack.c.b16 %v507, %v505
  %v794 = vpack.c.b16 %v508, %v506
  %v795 = vpack.c.b16 %v511, %v509
  %v796 = vpack.c.b16 %v512, %v510
  %v797 = vpack.c.b16 %v515, %v513
  %v798 = vpack.c.b16 %v516, %v514
  %v799 = vpack.c.b16 %v519, %v517
  %v800 = vpack.c.b16 %v520, %v518
  %v801 = vpack.c.b16 %v523, %v521
  %v802 = vpack.c.b16 %v524, %v522
  %v803 = vpack.c.b16 %v527, %v525
  %v804 = vpack.c.b16 %v528, %v526
  %v805 = vpack.c.b16 %v531, %v529
  %v806 = vpack.c.b16 %v532, %v530
  %v807 = vpack.c.b16 %v535, %v533
  %v808 = vpack.c.b16 %v536, %v534
  %v809 = vpack.c.b16 %v539, %v537
  %v810 = vpack.c.b16 %v540, %v538
  %v811 = vpack.c.b16 %v543, %v541
  %v812 = vpack.c.b16 %v544, %v542
  %v813 = vpack.c.b16 %v547, %v545
  %v814 = vpack.c.b16 %v548, %v546
  %v815 = vpack.c.b16 %v551, %v549
  %v816 = vpack.c.b16 %v552, %v550
  %v817 = vpack.c.b16 %v555, %v553
  %v818 = vpack.c.b16 %v556, %v554
  %v819 = vpack.c.b16 %v559, %v557
  %v820 = vpack.c.b16 %v560, %v558
  %v821 = vpack.c.b16 %v563, %v561
  %v822 = vpack.c.b16 %v564, %v562
  %v823 = vpack.c.b16 %v567, %v565
  %v824 = vpack.c.b16 %v568, %v566
  %v825 = vpack.c.b16 %v571, %v569
  %v826 = vpack.c.b16 %v572, %v570
  %v827 = vpack.c.b16 %v575, %v573
  %v828 = vpack.c.b16 %v576, %v574
  %v829 = vpack.c.b16 %v579, %v577
  %v830 = vpack.c.b16 %v580, %v578
  %v831 = vpack.c.b16 %v583, %v581
  %v832 = vpack.c.b16 %v584, %v582
  %v833 = vpack.c.b16 %v587, %v585
  %v834 = vpack.c.b16 %v588, %v586
  %v835 = vpack.c.b16 %v591, %v589
  %v836 = vpack.c.b16 %v592, %v590
  %v837 = vpack.c.b16 %v595, %v593
  %v838 = vpack.c.b16 %v596, %v594
  %v839 = vpack.c.b16 %v599, %v597
  %v840 = vpack.c.b16 %v600, %v598
  %v841 = vpack.c.b16 %v603, %v601
  %v842 = vpack.c.b16 %v604, %v602
  %v843 = vpack.c.b16 %v607, %v605
  %v844 = vpack.c.b16 %v608, %v606
  %v845 = vpack.c.b16 %v611, %v609
  %v846 = vpack.c.b16 %v612, %v610
  %v847 = vpack.c.b16 %v615, %v613
  %v848 = vpack.c.b16 %v616, %v614
  %v849 = vpack.c.b16 %v619, %v617
  %v850 = vpack.c.b16 %v620, %v618
  %v851 = vpack.c.b16 %v623, %v621
  %v852 = vpack.c.b16 %v624, %v622
  %v853 = vpack.c.b16 %v627, %v625
  %v854 = vpack.c.b16 %v628, %v626
  %v855 = vpack.c.b16 %v631, %v629
  %v856 = vpack.c.b16 %v632, %v630
  %v857 = vpack.c.b16 %v635, %v633
  %v858 = vpack.c.b16 %v636, %v634
  %v859 = vpack.c.b16 %v639, %v637
  %v860 = vpack.c.b16 %v640, %v638
  %v861 = vpack.c.b16 %v643, %v641
  %v862 = vpack.c.b16 %v644, %v642
  %v863 = vpack.c.b16 %v647, %v645
  %v864 = vpack.c.b16 %v648, %v646
  %v865 = vpack.c.b16 %v651, %v649
  %v866 = vpack.c.b16 %v652, %v650
  %v867 = vpack.c.b16 %v655, %v653
  %v868 = vpack.c.b16 %v656, %v654
  %v869 = vpack.c.b16 %v659, %v657
  %v870 = vpack.c.b16 %v660, %v658
  %v871 = vpack.c.b16 %v663, %v661
  %v872 = vpack.c.b16 %v664, %v662
  %v873 = vpack.c.b16 %v667, %v665
  %v874 = vpack.c.b16 %v668, %v666
  %v875 = vpack.c.b16 %v671, %v669
  %v876 = vpack.c.b16 %v672, %v670
  %v877 = vpack.c.b16 %v675, %v673
  %v878 = vpack.c.b16 %v676, %v674
  %v879 = vpack.c.b16 %v679, %v677
  %v880 = vpack.c.b16 %v680, %v678
  %v881 = vpack.c.b16 %v683, %v681
  %v882 = vpack.c.b16 %v684, %v682
  %v883 = vpack.c.b16 %v687, %v685
  %v884 = vpack.c.b16 %v688, %v686
  %v885 = vpack.c.b16 %v691, %v689
  %v886 = vpack.c.b16 %v692, %v690
  %v887 = vpack.c.b16 %v695, %v693
  %v888 = vpack.c.b16 %v696, %v694
  %v889 = vpack.c.b16 %v699, %v697
  %v890 = vpack.c.b16 %v700, %v698
  %v891 = vpack.c.b16 %v703, %v701
  %v892 = vpack.c.b16 %v704, %v702
  %v893 = vpack.c.b16 %v707, %v705
  %v894 = vpack.c.b16 %v708, %v706
  %v895 = vpack.c.b16 %v711, %v709
  %v896 = vpack.c.b16 %v712, %v710
  %v897 = vpack.c.b16 %v715, %v713
  %v898 = vpack.c.b16 %v716, %v714
  %v899 = vpack.c.b16 %v719, %v717
  %v900 = vpack.c.b16 %v720, %v718
  %v901 = vpack.c.b16 %v723, %v721
  %v902 = vpack.c.b16 %v724, %v722
  %v903 = vpack.c.b16 %v727, %v725
  %v904 = vpack.c.b16 %v728, %v726
  %v905 = vpack.c.b16 %v731, %v729
  %v906 = vpack.c.b16 %v732, %v730
  %v907 = vpack.c.b16 %v735, %v733
  %v908 = vpack.c.b16 %v736, %v734
  %v909 = vpack.c.b16 %v739, %v737
  %v910 = vpack.c.b16 %v740, %v738
  %v911 = vpack.c.b16 %v743, %v741
  %v912 = vpack.c.b16 %v744, %v742
  %v913 = vpack.c.b16 %v747, %v745
  %v914 = vpack.c.b16 %v748, %v746
  %v915 = vpack.c.b16 %v751, %v749
  %v916 = vpack.c.b16 %v752, %v750
  %v917 = vpack.c.b16 %v755, %v753
  %v918 = vpack.c.b16 %v756, %v754
  %v919 = vpack.c.b16 %v759, %v757
  %v920 = vpack.c.b16 %v760, %v758
  %v921 = vpack.c.b16 %v763, %v761
  %v922 = vpack.c.b16 %v764, %v762
  %v923 = vpack.c.b16 %v767, %v765
  %v924 = vpack.c.b16 %v768, %v766
  %vm1079 = vcmask 736256
  %v1081 = vsel %vm1079, %v272, 0
  %v1084 = vsel %vm1079, %v282, 0
  %vm1086 = vcmask 1044480
  %v1088 = vsel %vm1086, %v923, 0
  %v1091 = vsel %vm1086, %v924, 0
  %1093 = vmatprep.subr.bf16.mxu0 %v770
  %1094 = vmatpush1.bf16.msra.mxu0 %v769
  %1095 = vmatprep.subr.bf16.mxu0 %v772
  %1096 = vmatpush1.bf16.msra.mxu0 %v771
  %1097 = vmatprep.subr.bf16.mxu0 %v774
  %1098 = vmatpush1.bf16.msra.mxu0 %v773
  %1099 = vmatprep.subr.bf16.mxu0 %v776
  %1100 = vmatpush1.bf16.msra.mxu0 %v775
  %1101 = vmatprep.subr.bf16.mxu0 %v778
  %1102 = vmatpush1.bf16.msra.mxu0 %v777
  %1103 = vmatprep.subr.bf16.mxu0 %v780
  %1104 = vmatpush1.bf16.msra.mxu0 %v779
  %1105 = vmatprep.subr.bf16.mxu0 %v782
  %1106 = vmatpush1.bf16.msra.mxu0 %v781
  %1107 = vmatprep.subr.bf16.mxu0 %v784
  %1108 = vmatpush1.bf16.msra.mxu0 %v783
  %1109 = vmatprep.subr.bf16.mxu0 %v786
  %1110 = vmatpush1.bf16.msra.mxu0 %v785
  %1111 = vmatprep.subr.bf16.mxu0 %v788
  %1112 = vmatpush1.bf16.msra.mxu0 %v787
  %1113 = vmatprep.subr.bf16.mxu0 %v790
  %1114 = vmatpush1.bf16.msra.mxu0 %v789
  %1115 = vmatprep.subr.bf16.mxu0 %v792
  %1116 = vmatpush1.bf16.msra.mxu0 %v791
  %1117 = vmatprep.subr.bf16.mxu0 %v794
  %1118 = vmatpush1.bf16.msra.mxu0 %v793
  %1119 = vmatprep.subr.bf16.mxu0 %v796
  %1120 = vmatpush1.bf16.msra.mxu0 %v795
  %1121 = vmatprep.subr.bf16.mxu0 %v798
  %1122 = vmatpush1.bf16.msra.mxu0 %v797
  %1123 = vmatprep.subr.bf16.mxu0 %v800
  %1124 = vmatpush1.bf16.msra.mxu0 %v799
  %1125 = vmatprep.mubr.bf16.mxu0 %v264
  %1126 = vmatmul.mubr.bf16.gmra.mrb[0].mxu0 %v263
  %v1127 = vpop.f32.mrb[0].mxu0
  %v1128 = vadd.f32 %v196, %v1127
  %v1129 = vpop.f32.mrb[0].mxu0
  %v1130 = vadd.f32 %v200, %v1129
  %v1131 = vpop.f32.mrb[0].mxu0
  %v1132 = vadd.f32 %v196, %v1131
  %v1133 = vpop.f32.mrb[0].mxu0
  %v1134 = vadd.f32 %v200, %v1133
  %1135 = vmatprep.mubr.bf16.mxu0 %v274
  %1136 = vmatmul.mubr.bf16.gmra.mrb[0].mxu0 %v273
  %v1137 = vpop.f32.mrb[0].mxu0
  %v1138 = vadd.f32 %v196, %v1137
  %v1139 = vpop.f32.mrb[0].mxu0
  %v1140 = vadd.f32 %v200, %v1139
  %v1141 = vpop.f32.mrb[0].mxu0
  %v1142 = vadd.f32 %v196, %v1141
  %v1143 = vpop.f32.mrb[0].mxu0
  %v1144 = vadd.f32 %v200, %v1143
  %1145 = vdwg.mxu0
  %1146 = vmatprep.subr.bf16.mxu0 %v802
  %1147 = vmatpush1.bf16.msra.mxu0 %v801
  %1148 = vmatprep.subr.bf16.mxu0 %v804
  %1149 = vmatpush1.bf16.msra.mxu0 %v803
  %1150 = vmatprep.subr.bf16.mxu0 %v806
  %1151 = vmatpush1.bf16.msra.mxu0 %v805
  %1152 = vmatprep.subr.bf16.mxu0 %v808
  %1153 = vmatpush1.bf16.msra.mxu0 %v807
  %1154 = vmatprep.subr.bf16.mxu0 %v810
  %1155 = vmatpush1.bf16.msra.mxu0 %v809
  %1156 = vmatprep.subr.bf16.mxu0 %v812
  %1157 = vmatpush1.bf16.msra.mxu0 %v811
  %1158 = vmatprep.subr.bf16.mxu0 %v814
  %1159 = vmatpush1.bf16.msra.mxu0 %v813
  %1160 = vmatprep.subr.bf16.mxu0 %v816
  %1161 = vmatpush1.bf16.msra.mxu0 %v815
  %1162 = vmatprep.subr.bf16.mxu0 %v818
  %1163 = vmatpush1.bf16.msra.mxu0 %v817
  %1164 = vmatprep.subr.bf16.mxu0 %v820
  %1165 = vmatpush1.bf16.msra.mxu0 %v819
  %1166 = vmatprep.subr.bf16.mxu0 %v822
  %1167 = vmatpush1.bf16.msra.mxu0 %v821
  %1168 = vmatprep.subr.bf16.mxu0 %v824
  %1169 = vmatpush1.bf16.msra.mxu0 %v823
  %1170 = vmatprep.subr.bf16.mxu0 %v826
  %1171 = vmatpush1.bf16.msra.mxu0 %v825
  %1172 = vmatprep.subr.bf16.mxu0 %v828
  %1173 = vmatpush1.bf16.msra.mxu0 %v827
  %1174 = vmatprep.subr.bf16.mxu0 %v830
  %1175 = vmatpush1.bf16.msra.mxu0 %v829
  %1176 = vmatprep.subr.bf16.mxu0 %v832
  %1177 = vmatpush1.bf16.msra.mxu0 %v831
  %1178 = vmatprep.mubr.bf16.mxu0 %v266
  %1179 = vmatmul.mubr.bf16.gmra.mrb[0].mxu0 %v265
  %v1180 = vpop.f32.mrb[0].mxu0
  %v1181 = vadd.f32 %v1128, %v1180
  %v1182 = vpop.f32.mrb[0].mxu0
  %v1183 = vadd.f32 %v1130, %v1182
  %v1184 = vpop.f32.mrb[0].mxu0
  %v1185 = vadd.f32 %v1132, %v1184
  %v1186 = vpop.f32.mrb[0].mxu0
  %v1187 = vadd.f32 %v1134, %v1186
  %1188 = vmatprep.mubr.bf16.mxu0 %v276
  %1189 = vmatmul.mubr.bf16.gmra.mrb[0].mxu0 %v275
  %v1190 = vpop.f32.mrb[0].mxu0
  %v1191 = vadd.f32 %v1138, %v1190
  %v1192 = vpop.f32.mrb[0].mxu0
  %v1193 = vadd.f32 %v1140, %v1192
  %v1194 = vpop.f32.mrb[0].mxu0
  %v1195 = vadd.f32 %v1142, %v1194
  %v1196 = vpop.f32.mrb[0].mxu0
  %v1197 = vadd.f32 %v1144, %v1196
  %1198 = vdwg.mxu0
  %1199 = vmatprep.subr.bf16.mxu0 %v834
  %1200 = vmatpush1.bf16.msra.mxu0 %v833
  %1201 = vmatprep.subr.bf16.mxu0 %v836
  %1202 = vmatpush1.bf16.msra.mxu0 %v835
  %1203 = vmatprep.subr.bf16.mxu0 %v838
  %1204 = vmatpush1.bf16.msra.mxu0 %v837
  %1205 = vmatprep.subr.bf16.mxu0 %v840
  %1206 = vmatpush1.bf16.msra.mxu0 %v839
  %1207 = vmatprep.subr.bf16.mxu0 %v842
  %1208 = vmatpush1.bf16.msra.mxu0 %v841
  %1209 = vmatprep.subr.bf16.mxu0 %v844
  %1210 = vmatpush1.bf16.msra.mxu0 %v843
  %1211 = vmatprep.subr.bf16.mxu0 %v846
  %1212 = vmatpush1.bf16.msra.mxu0 %v845
  %1213 = vmatprep.subr.bf16.mxu0 %v848
  %1214 = vmatpush1.bf16.msra.mxu0 %v847
  %1215 = vmatprep.subr.bf16.mxu0 %v850
  %1216 = vmatpush1.bf16.msra.mxu0 %v849
  %1217 = vmatprep.subr.bf16.mxu0 %v852
  %1218 = vmatpush1.bf16.msra.mxu0 %v851
  %1219 = vmatprep.subr.bf16.mxu0 %v854
  %1220 = vmatpush1.bf16.msra.mxu0 %v853
  %1221 = vmatprep.subr.bf16.mxu0 %v856
  %1222 = vmatpush1.bf16.msra.mxu0 %v855
  %1223 = vmatprep.subr.bf16.mxu0 %v858
  %1224 = vmatpush1.bf16.msra.mxu0 %v857
  %1225 = vmatprep.subr.bf16.mxu0 %v860
  %1226 = vmatpush1.bf16.msra.mxu0 %v859
  %1227 = vmatprep.subr.bf16.mxu0 %v862
  %1228 = vmatpush1.bf16.msra.mxu0 %v861
  %1229 = vmatprep.subr.bf16.mxu0 %v864
  %1230 = vmatpush1.bf16.msra.mxu0 %v863
  %1231 = vmatprep.mubr.bf16.mxu0 %v268
  %1232 = vmatmul.mubr.bf16.gmra.mrb[0].mxu0 %v267
  %v1233 = vpop.f32.mrb[0].mxu0
  %v1234 = vadd.f32 %v1181, %v1233
  %v1235 = vpop.f32.mrb[0].mxu0
  %v1236 = vadd.f32 %v1183, %v1235
  %v1237 = vpop.f32.mrb[0].mxu0
  %v1238 = vadd.f32 %v1185, %v1237
  %v1239 = vpop.f32.mrb[0].mxu0
  %v1240 = vadd.f32 %v1187, %v1239
  %1241 = vmatprep.mubr.bf16.mxu0 %v278
  %1242 = vmatmul.mubr.bf16.gmra.mrb[0].mxu0 %v277
  %v1243 = vpop.f32.mrb[0].mxu0
  %v1244 = vadd.f32 %v1191, %v1243
  %v1245 = vpop.f32.mrb[0].mxu0
  %v1246 = vadd.f32 %v1193, %v1245
  %v1247 = vpop.f32.mrb[0].mxu0
  %v1248 = vadd.f32 %v1195, %v1247
  %v1249 = vpop.f32.mrb[0].mxu0
  %v1250 = vadd.f32 %v1197, %v1249
  %1251 = vdwg.mxu0
  %1252 = vmatprep.subr.bf16.mxu0 %v866
  %1253 = vmatpush1.bf16.msra.mxu0 %v865
  %1254 = vmatprep.subr.bf16.mxu0 %v868
  %1255 = vmatpush1.bf16.msra.mxu0 %v867
  %1256 = vmatprep.subr.bf16.mxu0 %v870
  %1257 = vmatpush1.bf16.msra.mxu0 %v869
  %1258 = vmatprep.subr.bf16.mxu0 %v872
  %1259 = vmatpush1.bf16.msra.mxu0 %v871
  %1260 = vmatprep.subr.bf16.mxu0 %v874
  %1261 = vmatpush1.bf16.msra.mxu0 %v873
  %1262 = vmatprep.subr.bf16.mxu0 %v876
  %1263 = vmatpush1.bf16.msra.mxu0 %v875
  %1264 = vmatprep.subr.bf16.mxu0 %v878
  %1265 = vmatpush1.bf16.msra.mxu0 %v877
  %1266 = vmatprep.subr.bf16.mxu0 %v880
  %1267 = vmatpush1.bf16.msra.mxu0 %v879
  %1268 = vmatprep.subr.bf16.mxu0 %v882
  %1269 = vmatpush1.bf16.msra.mxu0 %v881
  %1270 = vmatprep.subr.bf16.mxu0 %v884
  %1271 = vmatpush1.bf16.msra.mxu0 %v883
  %1272 = vmatprep.subr.bf16.mxu0 %v886
  %1273 = vmatpush1.bf16.msra.mxu0 %v885
  %1274 = vmatprep.subr.bf16.mxu0 %v888
  %1275 = vmatpush1.bf16.msra.mxu0 %v887
  %1276 = vmatprep.subr.bf16.mxu0 %v890
  %1277 = vmatpush1.bf16.msra.mxu0 %v889
  %1278 = vmatprep.subr.bf16.mxu0 %v892
  %1279 = vmatpush1.bf16.msra.mxu0 %v891
  %1280 = vmatprep.subr.bf16.mxu0 %v894
  %1281 = vmatpush1.bf16.msra.mxu0 %v893
  %1282 = vmatprep.subr.bf16.mxu0 %v896
  %1283 = vmatpush1.bf16.msra.mxu0 %v895
  %1284 = vmatprep.mubr.bf16.mxu0 %v270
  %1285 = vmatmul.mubr.bf16.gmra.mrb[0].mxu0 %v269
  %v1286 = vpop.f32.mrb[0].mxu0
  %v1287 = vadd.f32 %v1234, %v1286
  %v1288 = vpop.f32.mrb[0].mxu0
  %v1289 = vadd.f32 %v1236, %v1288
  %v1290 = vpop.f32.mrb[0].mxu0
  %v1291 = vadd.f32 %v1238, %v1290
  %v1292 = vpop.f32.mrb[0].mxu0
  %v1293 = vadd.f32 %v1240, %v1292
  %1294 = vmatprep.mubr.bf16.mxu0 %v280
  %1295 = vmatmul.mubr.bf16.gmra.mrb[0].mxu0 %v279
  %v1296 = vpop.f32.mrb[0].mxu0
  %v1297 = vadd.f32 %v1244, %v1296
  %v1298 = vpop.f32.mrb[0].mxu0
  %v1299 = vadd.f32 %v1246, %v1298
  %v1300 = vpop.f32.mrb[0].mxu0
  %v1301 = vadd.f32 %v1248, %v1300
  %v1302 = vpop.f32.mrb[0].mxu0
  %v1303 = vadd.f32 %v1250, %v1302
  %1304 = vdwg.mxu0
  %1305 = vmatprep.subr.bf16.mxu0 %v898
  %1306 = vmatpush1.bf16.msra.mxu0 %v897
  %1307 = vmatprep.subr.bf16.mxu0 %v900
  %1308 = vmatpush1.bf16.msra.mxu0 %v899
  %1309 = vmatprep.subr.bf16.mxu0 %v902
  %1310 = vmatpush1.bf16.msra.mxu0 %v901
  %1311 = vmatprep.subr.bf16.mxu0 %v904
  %1312 = vmatpush1.bf16.msra.mxu0 %v903
  %1313 = vmatprep.subr.bf16.mxu0 %v906
  %1314 = vmatpush1.bf16.msra.mxu0 %v905
  %1315 = vmatprep.subr.bf16.mxu0 %v908
  %1316 = vmatpush1.bf16.msra.mxu0 %v907
  %1317 = vmatprep.subr.bf16.mxu0 %v910
  %1318 = vmatpush1.bf16.msra.mxu0 %v909
  %1319 = vmatprep.subr.bf16.mxu0 %v912
  %1320 = vmatpush1.bf16.msra.mxu0 %v911
  %1321 = vmatprep.subr.bf16.mxu0 %v914
  %1322 = vmatpush1.bf16.msra.mxu0 %v913
  %1323 = vmatprep.subr.bf16.mxu0 %v916
  %1324 = vmatpush1.bf16.msra.mxu0 %v915
  %1325 = vmatprep.subr.bf16.mxu0 %v918
  %1326 = vmatpush1.bf16.msra.mxu0 %v917
  %1327 = vmatprep.subr.bf16.mxu0 %v920
  %1328 = vmatpush1.bf16.msra.mxu0 %v919
  %1329 = vmatprep.subr.bf16.mxu0 %v922
  %1330 = vmatpush1.bf16.msra.mxu0 %v921
  %1331 = vmatprep.subr.bf16.mxu0 %v1091
  %1332 = vmatpush1.bf16.msra.mxu0 %v1088
  %1333 = vmatprep.subr.bf16.mxu0 0
  %1334 = vmatpush1.bf16.msra.mxu0 0
  %1335 = vmatprep.subr.bf16.mxu0 0
  %1336 = vmatpush1.bf16.msra.mxu0 0
  %1337 = vmatprep.mubr.bf16.mxu0 %v1081
  %1338 = vmatmul.mubr.bf16.gmra.mrb[0].mxu0 %v271
  %v1339 = vpop.f32.mrb[0].mxu0
  %v1340 = vadd.f32 %v1287, %v1339
  %v1341 = vpop.f32.mrb[0].mxu0
  %v1342 = vadd.f32 %v1289, %v1341
  %v1343 = vpop.f32.mrb[0].mxu0
  %v1344 = vadd.f32 %v1291, %v1343
  %v1345 = vpop.f32.mrb[0].mxu0
  %v1346 = vadd.f32 %v1293, %v1345
  %1347 = vmatprep.mubr.bf16.mxu0 %v1084
  %1348 = vmatmul.mubr.bf16.gmra.mrb[0].mxu0 %v281
  %v1349 = vpop.f32.mrb[0].mxu0
  %v1350 = vadd.f32 %v1297, %v1349
  %v1351 = vpop.f32.mrb[0].mxu0
  %v1352 = vadd.f32 %v1299, %v1351
  %v1353 = vpop.f32.mrb[0].mxu0
  %v1354 = vadd.f32 %v1301, %v1353
  %v1355 = vpop.f32.mrb[0].mxu0
  %v1356 = vadd.f32 %v1303, %v1355
  %1357 = vdwg.mxu0
  %v1358 = vmax.f32 %v1340, 0.0
  %v1359 = vmax.f32 %v1342, 0.0
  %v1360 = vmax.f32 %v1344, 0.0
  %v1361 = vmax.f32 %v1346, 0.0
  %v1362 = vmax.f32 %v1350, 0.0
  %v1363 = vmax.f32 %v1352, 0.0
  %v1364 = vmax.f32 %v1354, 0.0
  %v1365 = vmax.f32 %v1356, 0.0
  %v1366 = vpack.c.bf16 %v1360, %v1358
  %v1367 = vpack.c.bf16 %v1361, %v1359
  %v1368 = vpack.c.bf16 %v1364, %v1362
  %v1369 = vpack.c.bf16 %v1365, %v1363
  %v1374 = vunpack.c.l.b16 %v1366
  %v1375 = vunpack.c.l.b16 %v1367
  %v1376 = vunpack.c.h.b16 %v1366
  %v1377 = vunpack.c.h.b16 %v1367
  %v1378 = vunpack.c.l.b16 %v1368
  %v1379 = vunpack.c.l.b16 %v1369
  %v1380 = vunpack.c.h.b16 %v1368
  %v1381 = vunpack.c.h.b16 %v1369
  %v1382 = vpack.c.b16 %v1375, %v1374
  %v1383 = vpack.c.b16 %v1377, %v1376
  %v1384 = vpack.c.b16 %v1379, %v1378
  %v1385 = vpack.c.b16 %v1381, %v1380
  %1390 = vst [vmem:[%s3] sm:$0xff] %v1382
  %1391 = vst [vmem:[%s3 + $0x8] sm:$0xff] %v1383
  %1392 = vst [vmem:[%s3 + $0x10] sm:$0xff] %v1384
  %1393 = vst [vmem:[%s3 + $0x18] sm:$0xff] %v1385
  // Predicated region
  $region14: #{generator_forward.5} parent=0 // pred_check
    _
  $region15: #{generator_forward.5} parent=0 // pred_check_branch
    %1395 = sbr.rel (0) target = $region17
  $region16: #{generator_forward.5} parent=0 // pred_region
    _
  $region17: #{generator_forward.5} parent=0 // pred_fallthru
    _
  // Predicated region
  $region18: #{generator_forward.5} parent=0 // pred_check
    _
  $region19: #{generator_forward.5} parent=0 // pred_check_branch
    %1397 = sbr.rel (0) target = $region21
  $region20: #{generator_forward.5} parent=0 // pred_region
    _
  $region21: #{generator_forward.5} parent=0 // pred_fallthru
    _

// kernel: tile.33
$region0: #{tile.33}
  #allocation0 [shape = 's32[1]{0}', space=sflag, size = 0x4, scoped, tag = 'scoped memory for tile.33']
  %s0 = inlined_call_operand.vmem [shape: f32[32], index: 0, kind: input, shape index: {}]
  %s1 = inlined_call_operand.vmem [shape: f32[4,32], index: 1, kind: output, shape index: {}]
  // Predicated region
  $region2: #{tile.33} parent=0 // pred_check
    _
  $region3: #{tile.33} parent=0 // pred_check_branch
    %3 = sbr.rel (0) target = $region5
  $region4: #{tile.33} parent=0 // pred_region
    _
  $region5: #{tile.33} parent=0 // pred_fallthru
    _
  %v4 = vld [vmem:[%s0] ss:$0 sm:$0xff]
  %5 = vst [vmem:[%s1] sm:$0xf] %v4

// kernel: tile.34
$region0: #{tile.34}
  %s0 = inlined_call_operand.vmem [shape: f32[4,32], index: 0, kind: input, shape index: {}]
  %s1 = inlined_call_operand.vmem [shape: f32[1,128], index: 1, kind: output, shape index: {}]
  $region1: #{tile.34} parent=0
    #allocation0 [shape = 'u8[4096]{0}', space=vmem, size = 0x1000, scoped, tag = 'scoped mem for output reshape']
    #allocation1 [shape = 'u8[4096]{0}', space=vmem, size = 0x1000, scoped, tag = 'scoped mem for input reshape']
    %s3 = sshllo.u32 0, 4
    %v4 = vld [vmem:[%s0] sm:%s3]
    %5 = vst [vmem:[#allocation1] sm:%s3] %v4
    %v6 = vld [vmem:[#allocation1] sm:$0x1]
    %vm7 = vcmask 261120
    %8 = vst.msk [vmem:[#allocation0] sm:$0x1] %vm7, %v6
    %s9 = scalar_lea.vmem [#allocation1], 3
    %v10 = vld [vmem:[%s9] sm:$0x1]
    %11 = vrot.lane.b32.xlu0 %v10, 96
    %v12 = vpop.permute.xlu0 %11
    %vm13 = vcmask 1048320
    %14 = vst.msk [vmem:[#allocation0] sm:$0x1] %vm13, %v12
    %s15 = scalar_lea.vmem [#allocation1], 2
    %v16 = vld [vmem:[%s15] sm:$0x1]
    %17 = vrot.lane.b32.xlu0 %v16, 64
    %v18 = vpop.permute.xlu0 %17
    %vm19 = vcmask 785920
    %20 = vst.msk [vmem:[#allocation0] sm:$0x1] %vm19, %v18
    %s21 = scalar_lea.vmem [#allocation1], 1
    %v22 = vld [vmem:[%s21] sm:$0x1]
    %23 = vrot.lane.b32.xlu0 %v22, 32
    %v24 = vpop.permute.xlu0 %23
    %vm25 = vcmask 523520
    %26 = vst.msk [vmem:[#allocation0] sm:$0x1] %vm25, %v24
    %s28 = sshllo.u32 0, 1
    %v30 = vld [vmem:[#allocation0] sm:%s28]
    %s31 = sshllo.u32 0, 1
    %32 = vst [vmem:[%s1] sm:%s31] %v30

// kernel: generator_forward.6
$region0: #{generator_forward.6}
  #allocation0 [shape = 'u32[]', space=smem, size = 0x4, offset = 0x4, fixed_abs, tag = 'smem constant byte address 0x4 - core index']
  #allocation1 [shape = 'u32[144,128]{1,0:T(1,128)}', space=vmem, size = 0x12000, scoped, tag = 'internal scratch']
  %s0 = inlined_call_operand.vmem [shape: bf16[128,576], index: 0, kind: input, shape index: {}]
  %s1 = inlined_call_operand.vmem [shape: bf16[576,128], index: 1, kind: input, shape index: {}]
  %s2 = inlined_call_operand.vmem [shape: f32[1,128], index: 2, kind: input, shape index: {}]
  %s3 = inlined_call_operand.vmem [shape: bf16[128,128], index: 3, kind: output, shape index: {}]
  %s4 = sld [smem:[#allocation0]]
  $region22: #{generator_forward.6} parent=0
    _
  %s6 = ssub.s32 1, %s4
  %s7 = scalar_select 0, %s6, %s4
  // Predicated region
  $region2: #{generator_forward.6} parent=0 // pred_check
    _
  $region3: #{generator_forward.6} parent=0 // pred_check_branch
    %9 = sbr.rel (0) target = $region5
  $region4: #{generator_forward.6} parent=0 // pred_region
    _
  $region5: #{generator_forward.6} parent=0 // pred_fallthru
    _
  // Predicated region
  $region6: #{generator_forward.6} parent=0 // pred_check
    _
  $region7: #{generator_forward.6} parent=0 // pred_check_branch
    %11 = sbr.rel (0) target = $region9
  $region8: #{generator_forward.6} parent=0 // pred_region
    _
  $region9: #{generator_forward.6} parent=0 // pred_fallthru
    _
  // Predicated region
  $region10: #{generator_forward.6} parent=0 // pred_check
    _
  $region11: #{generator_forward.6} parent=0 // pred_check_branch
    %13 = sbr.rel (0) target = $region13
  $region12: #{generator_forward.6} parent=0 // pred_region
    _
  $region13: #{generator_forward.6} parent=0 // pred_fallthru
    _
  %v15 = vld [vmem:[%s0] sm:$0xff]
  %v16 = vld [vmem:[%s0 + $0x8] sm:$0xff]
  %v17 = vld [vmem:[%s0 + $0x10] sm:$0xf]
  %v18 = vld [vmem:[%s0 + $0x14] sm:$0xff]
  %v19 = vld [vmem:[%s0 + $0x1c] sm:$0xff]
  %v20 = vld [vmem:[%s0 + $0x24] sm:$0xf]
  %v21 = vld [vmem:[%s0 + $0x28] sm:$0xff]
  %v22 = vld [vmem:[%s0 + $0x30] sm:$0xff]
  %v23 = vld [vmem:[%s0 + $0x38] sm:$0xf]
  %v24 = vld [vmem:[%s0 + $0x3c] sm:$0xff]
  %v25 = vld [vmem:[%s0 + $0x44] sm:$0xff]
  %v26 = vld [vmem:[%s0 + $0x4c] sm:$0xf]
  %v27 = vld [vmem:[%s0 + $0x50] sm:$0xff]
  %v28 = vld [vmem:[%s0 + $0x58] sm:$0xff]
  %v29 = vld [vmem:[%s0 + $0x60] sm:$0xf]
  %v30 = vld [vmem:[%s0 + $0x64] sm:$0xff]
  %v31 = vld [vmem:[%s0 + $0x6c] sm:$0xff]
  %v32 = vld [vmem:[%s0 + $0x74] sm:$0xf]
  %v33 = vld [vmem:[%s0 + $0x78] sm:$0xff]
  %v34 = vld [vmem:[%s0 + $0x80] sm:$0xff]
  %v35 = vld [vmem:[%s0 + $0x88] sm:$0xf]
  %v36 = vld [vmem:[%s0 + $0x8c] sm:$0xff]
  %v37 = vld [vmem:[%s0 + $0x94] sm:$0xff]
  %v38 = vld [vmem:[%s0 + $0x9c] sm:$0xf]
  %v39 = vld [vmem:[%s0 + $0xa0] sm:$0xff]
  %v40 = vld [vmem:[%s0 + $0xa8] sm:$0xff]
  %v41 = vld [vmem:[%s0 + $0xb0] sm:$0xf]
  %v42 = vld [vmem:[%s0 + $0xb4] sm:$0xff]
  %v43 = vld [vmem:[%s0 + $0xbc] sm:$0xff]
  %v44 = vld [vmem:[%s0 + $0xc4] sm:$0xf]
  %v45 = vld [vmem:[%s0 + $0xc8] sm:$0xff]
  %v46 = vld [vmem:[%s0 + $0xd0] sm:$0xff]
  %v47 = vld [vmem:[%s0 + $0xd8] sm:$0xf]
  %v48 = vld [vmem:[%s0 + $0xdc] sm:$0xff]
  %v49 = vld [vmem:[%s0 + $0xe4] sm:$0xff]
  %v50 = vld [vmem:[%s0 + $0xec] sm:$0xf]
  %v51 = vld [vmem:[%s0 + $0xf0] sm:$0xff]
  %v52 = vld [vmem:[%s0 + $0xf8] sm:$0xff]
  %v53 = vld [vmem:[%s0 + $0x100] sm:$0xf]
  %v54 = vld [vmem:[%s0 + $0x104] sm:$0xff]
  %v55 = vld [vmem:[%s0 + $0x10c] sm:$0xff]
  %v56 = vld [vmem:[%s0 + $0x114] sm:$0xf]
  %v57 = vld [vmem:[%s0 + $0x118] sm:$0xff]
  %v58 = vld [vmem:[%s0 + $0x120] sm:$0xff]
  %v59 = vld [vmem:[%s0 + $0x128] sm:$0xf]
  %v60 = vld [vmem:[%s0 + $0x12c] sm:$0xff]
  %v61 = vld [vmem:[%s0 + $0x134] sm:$0xff]
  %v62 = vld [vmem:[%s0 + $0x13c] sm:$0xf]
  %v63 = vld [vmem:[%s1] sm:$0xf]
  %v64 = vld [vmem:[%s1 + $0x4] sm:$0xf]
  %v65 = vld [vmem:[%s1 + $0x8] sm:$0xf]
  %v66 = vld [vmem:[%s1 + $0xc] sm:$0xf]
  %v67 = vld [vmem:[%s1 + $0x10] sm:$0xf]
  %v68 = vld [vmem:[%s1 + $0x14] sm:$0xf]
  %v69 = vld [vmem:[%s1 + $0x18] sm:$0xf]
  %v70 = vld [vmem:[%s1 + $0x1c] sm:$0xf]
  %v71 = vld [vmem:[%s1 + $0x20] sm:$0xf]
  %v72 = vld [vmem:[%s1 + $0x24] sm:$0xf]
  %v73 = vld [vmem:[%s1 + $0x28] sm:$0xf]
  %v74 = vld [vmem:[%s1 + $0x2c] sm:$0xf]
  %v75 = vld [vmem:[%s1 + $0x30] sm:$0xf]
  %v76 = vld [vmem:[%s1 + $0x34] sm:$0xf]
  %v77 = vld [vmem:[%s1 + $0x38] sm:$0xf]
  %v78 = vld [vmem:[%s1 + $0x3c] sm:$0xf]
  %v79 = vld [vmem:[%s1 + $0x40] sm:$0xf]
  %v80 = vld [vmem:[%s1 + $0x44] sm:$0xf]
  %v81 = vld [vmem:[%s1 + $0x48] sm:$0xf]
  %v82 = vld [vmem:[%s1 + $0x4c] sm:$0xf]
  %v83 = vld [vmem:[%s1 + $0x50] sm:$0xf]
  %v84 = vld [vmem:[%s1 + $0x54] sm:$0xf]
  %v85 = vld [vmem:[%s1 + $0x58] sm:$0xf]
  %v86 = vld [vmem:[%s1 + $0x5c] sm:$0xf]
  %v87 = vld [vmem:[%s1 + $0x60] sm:$0xf]
  %v88 = vld [vmem:[%s1 + $0x64] sm:$0xf]
  %v89 = vld [vmem:[%s1 + $0x68] sm:$0xf]
  %v90 = vld [vmem:[%s1 + $0x6c] sm:$0xf]
  %v91 = vld [vmem:[%s1 + $0x70] sm:$0xf]
  %v92 = vld [vmem:[%s1 + $0x74] sm:$0xf]
  %v93 = vld [vmem:[%s1 + $0x78] sm:$0xf]
  %v94 = vld [vmem:[%s1 + $0x7c] sm:$0xf]
  %v95 = vld [vmem:[%s1 + $0x80] sm:$0xf]
  %v96 = vld [vmem:[%s1 + $0x84] sm:$0xf]
  %v97 = vld [vmem:[%s1 + $0x88] sm:$0xf]
  %v98 = vld [vmem:[%s1 + $0x8c] sm:$0xf]
  %v99 = vld [vmem:[%s1 + $0x90] sm:$0xf]
  %v100 = vld [vmem:[%s1 + $0x94] sm:$0xf]
  %v101 = vld [vmem:[%s1 + $0x98] sm:$0xf]
  %v102 = vld [vmem:[%s1 + $0x9c] sm:$0xf]
  %v103 = vld [vmem:[%s1 + $0xa0] sm:$0xf]
  %v104 = vld [vmem:[%s1 + $0xa4] sm:$0xf]
  %v105 = vld [vmem:[%s1 + $0xa8] sm:$0xf]
  %v106 = vld [vmem:[%s1 + $0xac] sm:$0xf]
  %v107 = vld [vmem:[%s1 + $0xb0] sm:$0xf]
  %v108 = vld [vmem:[%s1 + $0xb4] sm:$0xf]
  %v109 = vld [vmem:[%s1 + $0xb8] sm:$0xf]
  %v110 = vld [vmem:[%s1 + $0xbc] sm:$0xf]
  %v111 = vld [vmem:[%s1 + $0xc0] sm:$0xf]
  %v112 = vld [vmem:[%s1 + $0xc4] sm:$0xf]
  %v113 = vld [vmem:[%s1 + $0xc8] sm:$0xf]
  %v114 = vld [vmem:[%s1 + $0xcc] sm:$0xf]
  %v115 = vld [vmem:[%s1 + $0xd0] sm:$0xf]
  %v116 = vld [vmem:[%s1 + $0xd4] sm:$0xf]
  %v117 = vld [vmem:[%s1 + $0xd8] sm:$0xf]
  %v118 = vld [vmem:[%s1 + $0xdc] sm:$0xf]
  %v119 = vld [vmem:[%s1 + $0xe0] sm:$0xf]
  %v120 = vld [vmem:[%s1 + $0xe4] sm:$0xf]
  %v121 = vld [vmem:[%s1 + $0xe8] sm:$0xf]
  %v122 = vld [vmem:[%s1 + $0xec] sm:$0xf]
  %v123 = vld [vmem:[%s1 + $0xf0] sm:$0xf]
  %v124 = vld [vmem:[%s1 + $0xf4] sm:$0xf]
  %v125 = vld [vmem:[%s1 + $0xf8] sm:$0xf]
  %v126 = vld [vmem:[%s1 + $0xfc] sm:$0xf]
  %v127 = vld [vmem:[%s1 + $0x100] sm:$0xf]
  %v128 = vld [vmem:[%s1 + $0x104] sm:$0xf]
  %v129 = vld [vmem:[%s1 + $0x108] sm:$0xf]
  %v130 = vld [vmem:[%s1 + $0x10c] sm:$0xf]
  %v131 = vld [vmem:[%s1 + $0x110] sm:$0xf]
  %v132 = vld [vmem:[%s1 + $0x114] sm:$0xf]
  %v133 = vld [vmem:[%s1 + $0x118] sm:$0xf]
  %v134 = vld [vmem:[%s1 + $0x11c] sm:$0xf]
  %v135 = vld [vmem:[%s2] sm:$0x1]
  %v137 = vlaneseq
  %v138 = vshrl.u32 %v137, 7
  %v139 = vsub.s32 0, %v138
  %v140 = vrot.slane %v135, %v139
  %v190 = vunpack.c.l.b16 %v15
  %v191 = vunpack.c.h.b16 %v15
  %v192 = vunpack.c.l.b16 %v16
  %v193 = vunpack.c.h.b16 %v16
  %v194 = vunpack.c.l.b16 %v17
  %v195 = vunpack.c.l.b16 %v18
  %v196 = vunpack.c.h.b16 %v18
  %v197 = vunpack.c.l.b16 %v19
  %v198 = vunpack.c.h.b16 %v19
  %v199 = vunpack.c.l.b16 %v20
  %v200 = vunpack.c.l.b16 %v21
  %v201 = vunpack.c.h.b16 %v21
  %v202 = vunpack.c.l.b16 %v22
  %v203 = vunpack.c.h.b16 %v22
  %v204 = vunpack.c.l.b16 %v23
  %v205 = vunpack.c.l.b16 %v24
  %v206 = vunpack.c.h.b16 %v24
  %v207 = vunpack.c.l.b16 %v25
  %v208 = vunpack.c.h.b16 %v25
  %v209 = vunpack.c.l.b16 %v26
  %v210 = vunpack.c.l.b16 %v27
  %v211 = vunpack.c.h.b16 %v27
  %v212 = vunpack.c.l.b16 %v28
  %v213 = vunpack.c.h.b16 %v28
  %v214 = vunpack.c.l.b16 %v29
  %v215 = vunpack.c.l.b16 %v30
  %v216 = vunpack.c.h.b16 %v30
  %v217 = vunpack.c.l.b16 %v31
  %v218 = vunpack.c.h.b16 %v31
  %v219 = vunpack.c.l.b16 %v32
  %v220 = vunpack.c.l.b16 %v33
  %v221 = vunpack.c.h.b16 %v33
  %v222 = vunpack.c.l.b16 %v34
  %v223 = vunpack.c.h.b16 %v34
  %v224 = vunpack.c.l.b16 %v35
  %v225 = vunpack.c.l.b16 %v36
  %v226 = vunpack.c.h.b16 %v36
  %v227 = vunpack.c.l.b16 %v37
  %v228 = vunpack.c.h.b16 %v37
  %v229 = vunpack.c.l.b16 %v38
  %v230 = vunpack.c.l.b16 %v39
  %v231 = vunpack.c.h.b16 %v39
  %v232 = vunpack.c.l.b16 %v40
  %v233 = vunpack.c.h.b16 %v40
  %v234 = vunpack.c.l.b16 %v41
  %v235 = vunpack.c.l.b16 %v42
  %v236 = vunpack.c.h.b16 %v42
  %v237 = vunpack.c.l.b16 %v43
  %v238 = vunpack.c.h.b16 %v43
  %v239 = vunpack.c.l.b16 %v44
  %v240 = vunpack.c.l.b16 %v45
  %v241 = vunpack.c.h.b16 %v45
  %v242 = vunpack.c.l.b16 %v46
  %v243 = vunpack.c.h.b16 %v46
  %v244 = vunpack.c.l.b16 %v47
  %v245 = vunpack.c.l.b16 %v48
  %v246 = vunpack.c.h.b16 %v48
  %v247 = vunpack.c.l.b16 %v49
  %v248 = vunpack.c.h.b16 %v49
  %v249 = vunpack.c.l.b16 %v50
  %v250 = vunpack.c.l.b16 %v51
  %v251 = vunpack.c.h.b16 %v51
  %v252 = vunpack.c.l.b16 %v52
  %v253 = vunpack.c.h.b16 %v52
  %v254 = vunpack.c.l.b16 %v53
  %v255 = vunpack.c.l.b16 %v54
  %v256 = vunpack.c.h.b16 %v54
  %v257 = vunpack.c.l.b16 %v55
  %v258 = vunpack.c.h.b16 %v55
  %v259 = vunpack.c.l.b16 %v56
  %v260 = vunpack.c.l.b16 %v57
  %v261 = vunpack.c.h.b16 %v57
  %v262 = vunpack.c.l.b16 %v58
  %v263 = vunpack.c.h.b16 %v58
  %v264 = vunpack.c.l.b16 %v59
  %v265 = vunpack.c.l.b16 %v60
  %v266 = vunpack.c.h.b16 %v60
  %v267 = vunpack.c.l.b16 %v61
  %v268 = vunpack.c.h.b16 %v61
  %v269 = vunpack.c.l.b16 %v62
  %v270 = vpack.c.b16 %v195, %v190
  %v271 = vpack.c.b16 %v196, %v191
  %v272 = vpack.c.b16 %v197, %v192
  %v273 = vpack.c.b16 %v198, %v193
  %v274 = vpack.c.b16 %v199, %v194
  %v275 = vpack.c.b16 %v205, %v200
  %v276 = vpack.c.b16 %v206, %v201
  %v277 = vpack.c.b16 %v207, %v202
  %v278 = vpack.c.b16 %v208, %v203
  %v279 = vpack.c.b16 %v209, %v204
  %v280 = vpack.c.b16 %v215, %v210
  %v281 = vpack.c.b16 %v216, %v211
  %v282 = vpack.c.b16 %v217, %v212
  %v283 = vpack.c.b16 %v218, %v213
  %v284 = vpack.c.b16 %v219, %v214
  %v285 = vpack.c.b16 %v225, %v220
  %v286 = vpack.c.b16 %v226, %v221
  %v287 = vpack.c.b16 %v227, %v222
  %v288 = vpack.c.b16 %v228, %v223
  %v289 = vpack.c.b16 %v229, %v224
  %v290 = vpack.c.b16 %v235, %v230
  %v291 = vpack.c.b16 %v236, %v231
  %v292 = vpack.c.b16 %v237, %v232
  %v293 = vpack.c.b16 %v238, %v233
  %v294 = vpack.c.b16 %v239, %v234
  %v295 = vpack.c.b16 %v245, %v240
  %v296 = vpack.c.b16 %v246, %v241
  %v297 = vpack.c.b16 %v247, %v242
  %v298 = vpack.c.b16 %v248, %v243
  %v299 = vpack.c.b16 %v249, %v244
  %v300 = vpack.c.b16 %v255, %v250
  %v301 = vpack.c.b16 %v256, %v251
  %v302 = vpack.c.b16 %v257, %v252
  %v303 = vpack.c.b16 %v258, %v253
  %v304 = vpack.c.b16 %v259, %v254
  %v305 = vpack.c.b16 %v265, %v260
  %v306 = vpack.c.b16 %v266, %v261
  %v307 = vpack.c.b16 %v267, %v262
  %v308 = vpack.c.b16 %v268, %v263
  %v309 = vpack.c.b16 %v269, %v264
  %v414 = vunpack.c.l.b16 %v63
  %v415 = vunpack.c.l.b16 %v64
  %v416 = vunpack.c.l.b16 %v65
  %v417 = vunpack.c.l.b16 %v66
  %v418 = vunpack.c.l.b16 %v67
  %v419 = vunpack.c.l.b16 %v68
  %v420 = vunpack.c.l.b16 %v69
  %v421 = vunpack.c.l.b16 %v70
  %v422 = vunpack.c.l.b16 %v71
  %v423 = vunpack.c.l.b16 %v72
  %v424 = vunpack.c.l.b16 %v73
  %v425 = vunpack.c.l.b16 %v74
  %v426 = vunpack.c.l.b16 %v75
  %v427 = vunpack.c.l.b16 %v76
  %v428 = vunpack.c.l.b16 %v77
  %v429 = vunpack.c.l.b16 %v78
  %v430 = vunpack.c.l.b16 %v79
  %v431 = vunpack.c.l.b16 %v80
  %v432 = vunpack.c.l.b16 %v81
  %v433 = vunpack.c.l.b16 %v82
  %v434 = vunpack.c.l.b16 %v83
  %v435 = vunpack.c.l.b16 %v84
  %v436 = vunpack.c.l.b16 %v85
  %v437 = vunpack.c.l.b16 %v86
  %v438 = vunpack.c.l.b16 %v87
  %v439 = vunpack.c.l.b16 %v88
  %v440 = vunpack.c.l.b16 %v89
  %v441 = vunpack.c.l.b16 %v90
  %v442 = vunpack.c.l.b16 %v91
  %v443 = vunpack.c.l.b16 %v92
  %v444 = vunpack.c.l.b16 %v93
  %v445 = vunpack.c.l.b16 %v94
  %v446 = vunpack.c.l.b16 %v95
  %v447 = vunpack.c.l.b16 %v96
  %v448 = vunpack.c.l.b16 %v97
  %v449 = vunpack.c.l.b16 %v98
  %v450 = vunpack.c.l.b16 %v99
  %v451 = vunpack.c.l.b16 %v100
  %v452 = vunpack.c.l.b16 %v101
  %v453 = vunpack.c.l.b16 %v102
  %v454 = vunpack.c.l.b16 %v103
  %v455 = vunpack.c.l.b16 %v104
  %v456 = vunpack.c.l.b16 %v105
  %v457 = vunpack.c.l.b16 %v106
  %v458 = vunpack.c.l.b16 %v107
  %v459 = vunpack.c.l.b16 %v108
  %v460 = vunpack.c.l.b16 %v109
  %v461 = vunpack.c.l.b16 %v110
  %v462 = vunpack.c.l.b16 %v111
  %v463 = vunpack.c.l.b16 %v112
  %v464 = vunpack.c.l.b16 %v113
  %v465 = vunpack.c.l.b16 %v114
  %v466 = vunpack.c.l.b16 %v115
  %v467 = vunpack.c.l.b16 %v116
  %v468 = vunpack.c.l.b16 %v117
  %v469 = vunpack.c.l.b16 %v118
  %v470 = vunpack.c.l.b16 %v119
  %v471 = vunpack.c.l.b16 %v120
  %v472 = vunpack.c.l.b16 %v121
  %v473 = vunpack.c.l.b16 %v122
  %v474 = vunpack.c.l.b16 %v123
  %v475 = vunpack.c.l.b16 %v124
  %v476 = vunpack.c.l.b16 %v125
  %v477 = vunpack.c.l.b16 %v126
  %v478 = vunpack.c.l.b16 %v127
  %v479 = vunpack.c.l.b16 %v128
  %v480 = vunpack.c.l.b16 %v129
  %v481 = vunpack.c.l.b16 %v130
  %v482 = vunpack.c.l.b16 %v131
  %v483 = vunpack.c.l.b16 %v132
  %v484 = vunpack.c.l.b16 %v133
  %v485 = vunpack.c.l.b16 %v134
  %v486 = vpack.c.b16 %v415, %v414
  %v487 = vpack.c.b16 %v417, %v416
  %v488 = vpack.c.b16 %v419, %v418
  %v489 = vpack.c.b16 %v421, %v420
  %v490 = vpack.c.b16 %v423, %v422
  %v491 = vpack.c.b16 %v425, %v424
  %v492 = vpack.c.b16 %v427, %v426
  %v493 = vpack.c.b16 %v429, %v428
  %v494 = vpack.c.b16 %v431, %v430
  %v495 = vpack.c.b16 %v433, %v432
  %v496 = vpack.c.b16 %v435, %v434
  %v497 = vpack.c.b16 %v437, %v436
  %v498 = vpack.c.b16 %v439, %v438
  %v499 = vpack.c.b16 %v441, %v440
  %v500 = vpack.c.b16 %v443, %v442
  %v501 = vpack.c.b16 %v445, %v444
  %v502 = vpack.c.b16 %v447, %v446
  %v503 = vpack.c.b16 %v449, %v448
  %v504 = vpack.c.b16 %v451, %v450
  %v505 = vpack.c.b16 %v453, %v452
  %v506 = vpack.c.b16 %v455, %v454
  %v507 = vpack.c.b16 %v457, %v456
  %v508 = vpack.c.b16 %v459, %v458
  %v509 = vpack.c.b16 %v461, %v460
  %v510 = vpack.c.b16 %v463, %v462
  %v511 = vpack.c.b16 %v465, %v464
  %v512 = vpack.c.b16 %v467, %v466
  %v513 = vpack.c.b16 %v469, %v468
  %v514 = vpack.c.b16 %v471, %v470
  %v515 = vpack.c.b16 %v473, %v472
  %v516 = vpack.c.b16 %v475, %v474
  %v517 = vpack.c.b16 %v477, %v476
  %v518 = vpack.c.b16 %v479, %v478
  %v519 = vpack.c.b16 %v481, %v480
  %v520 = vpack.c.b16 %v483, %v482
  %v521 = vpack.c.b16 %v485, %v484
  %vm558 = vcmask 523264
  %v560 = vsel %vm558, %v274, 0
  %v563 = vsel %vm558, %v279, 0
  %v566 = vsel %vm558, %v284, 0
  %v569 = vsel %vm558, %v289, 0
  %v572 = vsel %vm558, %v294, 0
  %v575 = vsel %vm558, %v299, 0
  %v578 = vsel %vm558, %v304, 0
  %v581 = vsel %vm558, %v309, 0
  %583 = vmatprep.subr.bf16.mxu0 0
  %584 = vmatpush1.bf16.msra.mxu0 %v486
  %585 = vmatprep.subr.bf16.mxu0 0
  %586 = vmatpush1.bf16.msra.mxu0 %v487
  %587 = vmatprep.subr.bf16.mxu0 0
  %588 = vmatpush1.bf16.msra.mxu0 %v488
  %589 = vmatprep.subr.bf16.mxu0 0
  %590 = vmatpush1.bf16.msra.mxu0 %v489
  %591 = vmatprep.subr.bf16.mxu0 0
  %592 = vmatpush1.bf16.msra.mxu0 %v490
  %593 = vmatprep.subr.bf16.mxu0 0
  %594 = vmatpush1.bf16.msra.mxu0 %v491
  %595 = vmatprep.subr.bf16.mxu0 0
  %596 = vmatpush1.bf16.msra.mxu0 %v492
  %597 = vmatprep.subr.bf16.mxu0 0
  %598 = vmatpush1.bf16.msra.mxu0 %v493
  %599 = vmatprep.subr.bf16.mxu0 0
  %600 = vmatpush1.bf16.msra.mxu0 %v494
  %601 = vmatprep.subr.bf16.mxu0 0
  %602 = vmatpush1.bf16.msra.mxu0 %v495
  %603 = vmatprep.subr.bf16.mxu0 0
  %604 = vmatpush1.bf16.msra.mxu0 %v496
  %605 = vmatprep.subr.bf16.mxu0 0
  %606 = vmatpush1.bf16.msra.mxu0 %v497
  %607 = vmatprep.subr.bf16.mxu0 0
  %608 = vmatpush1.bf16.msra.mxu0 %v498
  %609 = vmatprep.subr.bf16.mxu0 0
  %610 = vmatpush1.bf16.msra.mxu0 %v499
  %611 = vmatprep.subr.bf16.mxu0 0
  %612 = vmatpush1.bf16.msra.mxu0 %v500
  %613 = vmatprep.subr.bf16.mxu0 0
  %614 = vmatpush1.bf16.msra.mxu0 %v501
  %615 = vmatprep.mubr.bf16.mxu0 %v271
  %616 = vmatmul.mubr.bf16.gmra.mrb[0].mxu0 %v270
  %v617 = vpop.f32.mrb[0].mxu0
  %v618 = vadd.f32 %v140, %v617
  %v619 = vpop.f32.mrb[0].mxu0
  %v620 = vpop.f32.mrb[0].mxu0
  %v621 = vadd.f32 %v140, %v620
  %v622 = vpop.f32.mrb[0].mxu0
  %623 = vmatprep.mubr.bf16.mxu0 %v276
  %624 = vmatmul.mubr.bf16.gmra.mrb[0].mxu0 %v275
  %v625 = vpop.f32.mrb[0].mxu0
  %v626 = vadd.f32 %v140, %v625
  %v627 = vpop.f32.mrb[0].mxu0
  %v628 = vpop.f32.mrb[0].mxu0
  %v629 = vadd.f32 %v140, %v628
  %v630 = vpop.f32.mrb[0].mxu0
  %631 = vmatprep.mubr.bf16.mxu0 %v281
  %632 = vmatmul.mubr.bf16.gmra.mrb[0].mxu0 %v280
  %v633 = vpop.f32.mrb[0].mxu0
  %v634 = vadd.f32 %v140, %v633
  %v635 = vpop.f32.mrb[0].mxu0
  %v636 = vpop.f32.mrb[0].mxu0
  %v637 = vadd.f32 %v140, %v636
  %v638 = vpop.f32.mrb[0].mxu0
  %639 = vmatprep.mubr.bf16.mxu0 %v286
  %640 = vmatmul.mubr.bf16.gmra.mrb[0].mxu0 %v285
  %v641 = vpop.f32.mrb[0].mxu0
  %v642 = vadd.f32 %v140, %v641
  %v643 = vpop.f32.mrb[0].mxu0
  %v644 = vpop.f32.mrb[0].mxu0
  %v645 = vadd.f32 %v140, %v644
  %v646 = vpop.f32.mrb[0].mxu0
  %647 = vmatprep.mubr.bf16.mxu0 %v291
  %648 = vmatmul.mubr.bf16.gmra.mrb[0].mxu0 %v290
  %v649 = vpop.f32.mrb[0].mxu0
  %v650 = vadd.f32 %v140, %v649
  %v651 = vpop.f32.mrb[0].mxu0
  %v652 = vpop.f32.mrb[0].mxu0
  %v653 = vadd.f32 %v140, %v652
  %v654 = vpop.f32.mrb[0].mxu0
  %655 = vmatprep.mubr.bf16.mxu0 %v296
  %656 = vmatmul.mubr.bf16.gmra.mrb[0].mxu0 %v295
  %v657 = vpop.f32.mrb[0].mxu0
  %v658 = vadd.f32 %v140, %v657
  %v659 = vpop.f32.mrb[0].mxu0
  %v660 = vpop.f32.mrb[0].mxu0
  %v661 = vadd.f32 %v140, %v660
  %v662 = vpop.f32.mrb[0].mxu0
  %663 = vmatprep.mubr.bf16.mxu0 %v301
  %664 = vmatmul.mubr.bf16.gmra.mrb[0].mxu0 %v300
  %v665 = vpop.f32.mrb[0].mxu0
  %v666 = vadd.f32 %v140, %v665
  %v667 = vpop.f32.mrb[0].mxu0
  %v668 = vpop.f32.mrb[0].mxu0
  %v669 = vadd.f32 %v140, %v668
  %v670 = vpop.f32.mrb[0].mxu0
  %671 = vmatprep.mubr.bf16.mxu0 %v306
  %672 = vmatmul.mubr.bf16.gmra.mrb[0].mxu0 %v305
  %v673 = vpop.f32.mrb[0].mxu0
  %v674 = vadd.f32 %v140, %v673
  %v675 = vpop.f32.mrb[0].mxu0
  %v676 = vpop.f32.mrb[0].mxu0
  %v677 = vadd.f32 %v140, %v676
  %v678 = vpop.f32.mrb[0].mxu0
  %679 = vdwg.mxu0
  %680 = vmatprep.subr.bf16.mxu0 0
  %681 = vmatpush1.bf16.msra.mxu0 %v502
  %682 = vmatprep.subr.bf16.mxu0 0
  %683 = vmatpush1.bf16.msra.mxu0 %v503
  %684 = vmatprep.subr.bf16.mxu0 0
  %685 = vmatpush1.bf16.msra.mxu0 %v504
  %686 = vmatprep.subr.bf16.mxu0 0
  %687 = vmatpush1.bf16.msra.mxu0 %v505
  %688 = vmatprep.subr.bf16.mxu0 0
  %689 = vmatpush1.bf16.msra.mxu0 %v506
  %690 = vmatprep.subr.bf16.mxu0 0
  %691 = vmatpush1.bf16.msra.mxu0 %v507
  %692 = vmatprep.subr.bf16.mxu0 0
  %693 = vmatpush1.bf16.msra.mxu0 %v508
  %694 = vmatprep.subr.bf16.mxu0 0
  %695 = vmatpush1.bf16.msra.mxu0 %v509
  %696 = vmatprep.subr.bf16.mxu0 0
  %697 = vmatpush1.bf16.msra.mxu0 %v510
  %698 = vmatprep.subr.bf16.mxu0 0
  %699 = vmatpush1.bf16.msra.mxu0 %v511
  %700 = vmatprep.subr.bf16.mxu0 0
  %701 = vmatpush1.bf16.msra.mxu0 %v512
  %702 = vmatprep.subr.bf16.mxu0 0
  %703 = vmatpush1.bf16.msra.mxu0 %v513
  %704 = vmatprep.subr.bf16.mxu0 0
  %705 = vmatpush1.bf16.msra.mxu0 %v514
  %706 = vmatprep.subr.bf16.mxu0 0
  %707 = vmatpush1.bf16.msra.mxu0 %v515
  %708 = vmatprep.subr.bf16.mxu0 0
  %709 = vmatpush1.bf16.msra.mxu0 %v516
  %710 = vmatprep.subr.bf16.mxu0 0
  %711 = vmatpush1.bf16.msra.mxu0 %v517
  %712 = vmatprep.mubr.bf16.mxu0 %v273
  %713 = vmatmul.mubr.bf16.gmra.mrb[0].mxu0 %v272
  %v714 = vpop.f32.mrb[0].mxu0
  %v715 = vadd.f32 %v618, %v714
  %v716 = vpop.f32.mrb[0].mxu0
  %v717 = vpop.f32.mrb[0].mxu0
  %v718 = vadd.f32 %v621, %v717
  %v719 = vpop.f32.mrb[0].mxu0
  %720 = vmatprep.mubr.bf16.mxu0 %v278
  %721 = vmatmul.mubr.bf16.gmra.mrb[0].mxu0 %v277
  %v722 = vpop.f32.mrb[0].mxu0
  %v723 = vadd.f32 %v626, %v722
  %v724 = vpop.f32.mrb[0].mxu0
  %v725 = vpop.f32.mrb[0].mxu0
  %v726 = vadd.f32 %v629, %v725
  %v727 = vpop.f32.mrb[0].mxu0
  %728 = vmatprep.mubr.bf16.mxu0 %v283
  %729 = vmatmul.mubr.bf16.gmra.mrb[0].mxu0 %v282
  %v730 = vpop.f32.mrb[0].mxu0
  %v731 = vadd.f32 %v634, %v730
  %v732 = vpop.f32.mrb[0].mxu0
  %v733 = vpop.f32.mrb[0].mxu0
  %v734 = vadd.f32 %v637, %v733
  %v735 = vpop.f32.mrb[0].mxu0
  %736 = vmatprep.mubr.bf16.mxu0 %v288
  %737 = vmatmul.mubr.bf16.gmra.mrb[0].mxu0 %v287
  %v738 = vpop.f32.mrb[0].mxu0
  %v739 = vadd.f32 %v642, %v738
  %v740 = vpop.f32.mrb[0].mxu0
  %v741 = vpop.f32.mrb[0].mxu0
  %v742 = vadd.f32 %v645, %v741
  %v743 = vpop.f32.mrb[0].mxu0
  %744 = vmatprep.mubr.bf16.mxu0 %v293
  %745 = vmatmul.mubr.bf16.gmra.mrb[0].mxu0 %v292
  %v746 = vpop.f32.mrb[0].mxu0
  %v747 = vadd.f32 %v650, %v746
  %v748 = vpop.f32.mrb[0].mxu0
  %v749 = vpop.f32.mrb[0].mxu0
  %v750 = vadd.f32 %v653, %v749
  %v751 = vpop.f32.mrb[0].mxu0
  %752 = vmatprep.mubr.bf16.mxu0 %v298
  %753 = vmatmul.mubr.bf16.gmra.mrb[0].mxu0 %v297
  %v754 = vpop.f32.mrb[0].mxu0
  %v755 = vadd.f32 %v658, %v754
  %v756 = vpop.f32.mrb[0].mxu0
  %v757 = vpop.f32.mrb[0].mxu0
  %v758 = vadd.f32 %v661, %v757
  %v759 = vpop.f32.mrb[0].mxu0
  %760 = vmatprep.mubr.bf16.mxu0 %v303
  %761 = vmatmul.mubr.bf16.gmra.mrb[0].mxu0 %v302
  %v762 = vpop.f32.mrb[0].mxu0
  %v763 = vadd.f32 %v666, %v762
  %v764 = vpop.f32.mrb[0].mxu0
  %v765 = vpop.f32.mrb[0].mxu0
  %v766 = vadd.f32 %v669, %v765
  %v767 = vpop.f32.mrb[0].mxu0
  %768 = vmatprep.mubr.bf16.mxu0 %v308
  %769 = vmatmul.mubr.bf16.gmra.mrb[0].mxu0 %v307
  %v770 = vpop.f32.mrb[0].mxu0
  %v771 = vadd.f32 %v674, %v770
  %v772 = vpop.f32.mrb[0].mxu0
  %v773 = vpop.f32.mrb[0].mxu0
  %v774 = vadd.f32 %v677, %v773
  %v775 = vpop.f32.mrb[0].mxu0
  %776 = vdwg.mxu0
  %777 = vmatprep.subr.bf16.mxu0 0
  %778 = vmatpush1.bf16.msra.mxu0 %v518
  %779 = vmatprep.subr.bf16.mxu0 0
  %780 = vmatpush1.bf16.msra.mxu0 %v519
  %781 = vmatprep.subr.bf16.mxu0 0
  %782 = vmatpush1.bf16.msra.mxu0 %v520
  %783 = vmatprep.subr.bf16.mxu0 0
  %784 = vmatpush1.bf16.msra.mxu0 %v521
  %785 = vmatprep.subr.bf16.mxu0 0
  %786 = vmatpush1.bf16.msra.mxu0 0
  %787 = vmatprep.subr.bf16.mxu0 0
  %788 = vmatpush1.bf16.msra.mxu0 0
  %789 = vmatprep.subr.bf16.mxu0 0
  %790 = vmatpush1.bf16.msra.mxu0 0
  %791 = vmatprep.subr.bf16.mxu0 0
  %792 = vmatpush1.bf16.msra.mxu0 0
  %793 = vmatprep.subr.bf16.mxu0 0
  %794 = vmatpush1.bf16.msra.mxu0 0
  %795 = vmatprep.subr.bf16.mxu0 0
  %796 = vmatpush1.bf16.msra.mxu0 0
  %797 = vmatprep.subr.bf16.mxu0 0
  %798 = vmatpush1.bf16.msra.mxu0 0
  %799 = vmatprep.subr.bf16.mxu0 0
  %800 = vmatpush1.bf16.msra.mxu0 0
  %801 = vmatprep.subr.bf16.mxu0 0
  %802 = vmatpush1.bf16.msra.mxu0 0
  %803 = vmatprep.subr.bf16.mxu0 0
  %804 = vmatpush1.bf16.msra.mxu0 0
  %805 = vmatprep.subr.bf16.mxu0 0
  %806 = vmatpush1.bf16.msra.mxu0 0
  %807 = vmatprep.subr.bf16.mxu0 0
  %808 = vmatpush1.bf16.msra.mxu0 0
  %809 = vmatprep.mubr.bf16.mxu0 0
  %810 = vmatmul.mubr.bf16.gmra.mrb[0].mxu0 %v560
  %v811 = vpop.f32.mrb[0].mxu0
  %v812 = vadd.f32 %v715, %v811
  %v813 = vpop.f32.mrb[0].mxu0
  %v814 = vpop.f32.mrb[0].mxu0
  %v815 = vadd.f32 %v718, %v814
  %v816 = vpop.f32.mrb[0].mxu0
  %817 = vmatprep.mubr.bf16.mxu0 0
  %818 = vmatmul.mubr.bf16.gmra.mrb[0].mxu0 %v563
  %v819 = vpop.f32.mrb[0].mxu0
  %v820 = vadd.f32 %v723, %v819
  %v821 = vpop.f32.mrb[0].mxu0
  %v822 = vpop.f32.mrb[0].mxu0
  %v823 = vadd.f32 %v726, %v822
  %v824 = vpop.f32.mrb[0].mxu0
  %825 = vmatprep.mubr.bf16.mxu0 0
  %826 = vmatmul.mubr.bf16.gmra.mrb[0].mxu0 %v566
  %v827 = vpop.f32.mrb[0].mxu0
  %v828 = vadd.f32 %v731, %v827
  %v829 = vpop.f32.mrb[0].mxu0
  %v830 = vpop.f32.mrb[0].mxu0
  %v831 = vadd.f32 %v734, %v830
  %v832 = vpop.f32.mrb[0].mxu0
  %833 = vmatprep.mubr.bf16.mxu0 0
  %834 = vmatmul.mubr.bf16.gmra.mrb[0].mxu0 %v569
  %v835 = vpop.f32.mrb[0].mxu0
  %v836 = vadd.f32 %v739, %v835
  %v837 = vpop.f32.mrb[0].mxu0
  %v838 = vpop.f32.mrb[0].mxu0
  %v839 = vadd.f32 %v742, %v838
  %v840 = vpop.f32.mrb[0].mxu0
  %841 = vmatprep.mubr.bf16.mxu0 0
  %842 = vmatmul.mubr.bf16.gmra.mrb[0].mxu0 %v572
  %v843 = vpop.f32.mrb[0].mxu0
  %v844 = vadd.f32 %v747, %v843
  %v845 = vpop.f32.mrb[0].mxu0
  %v846 = vpop.f32.mrb[0].mxu0
  %v847 = vadd.f32 %v750, %v846
  %v848 = vpop.f32.mrb[0].mxu0
  %849 = vmatprep.mubr.bf16.mxu0 0
  %850 = vmatmul.mubr.bf16.gmra.mrb[0].mxu0 %v575
  %v851 = vpop.f32.mrb[0].mxu0
  %v852 = vadd.f32 %v755, %v851
  %v853 = vpop.f32.mrb[0].mxu0
  %v854 = vpop.f32.mrb[0].mxu0
  %v855 = vadd.f32 %v758, %v854
  %v856 = vpop.f32.mrb[0].mxu0
  %857 = vmatprep.mubr.bf16.mxu0 0
  %858 = vmatmul.mubr.bf16.gmra.mrb[0].mxu0 %v578
  %v859 = vpop.f32.mrb[0].mxu0
  %v860 = vadd.f32 %v763, %v859
  %v861 = vpop.f32.mrb[0].mxu0
  %v862 = vpop.f32.mrb[0].mxu0
  %v863 = vadd.f32 %v766, %v862
  %v864 = vpop.f32.mrb[0].mxu0
  %865 = vmatprep.mubr.bf16.mxu0 0
  %866 = vmatmul.mubr.bf16.gmra.mrb[0].mxu0 %v581
  %v867 = vpop.f32.mrb[0].mxu0
  %v868 = vadd.f32 %v771, %v867
  %v869 = vpop.f32.mrb[0].mxu0
  %v870 = vpop.f32.mrb[0].mxu0
  %v871 = vadd.f32 %v774, %v870
  %v872 = vpop.f32.mrb[0].mxu0
  %873 = vdwg.mxu0
  %v874 = vmax.f32 %v812, 0.0
  %v875 = vmax.f32 %v815, 0.0
  %v876 = vmax.f32 %v820, 0.0
  %v877 = vmax.f32 %v823, 0.0
  %v878 = vmax.f32 %v828, 0.0
  %v879 = vmax.f32 %v831, 0.0
  %v880 = vmax.f32 %v836, 0.0
  %v881 = vmax.f32 %v839, 0.0
  %v882 = vmax.f32 %v844, 0.0
  %v883 = vmax.f32 %v847, 0.0
  %v884 = vmax.f32 %v852, 0.0
  %v885 = vmax.f32 %v855, 0.0
  %v886 = vmax.f32 %v860, 0.0
  %v887 = vmax.f32 %v863, 0.0
  %v888 = vmax.f32 %v868, 0.0
  %v889 = vmax.f32 %v871, 0.0
  %v890 = vpack.c.bf16 %v875, %v874
  %v891 = vpack.c.bf16 %v877, %v876
  %v892 = vpack.c.bf16 %v879, %v878
  %v893 = vpack.c.bf16 %v881, %v880
  %v894 = vpack.c.bf16 %v883, %v882
  %v895 = vpack.c.bf16 %v885, %v884
  %v896 = vpack.c.bf16 %v887, %v886
  %v897 = vpack.c.bf16 %v889, %v888
  %v906 = vunpack.c.l.b16 %v890
  %v907 = vunpack.c.h.b16 %v890
  %v908 = vunpack.c.l.b16 %v891
  %v909 = vunpack.c.h.b16 %v891
  %v910 = vunpack.c.l.b16 %v892
  %v911 = vunpack.c.h.b16 %v892
  %v912 = vunpack.c.l.b16 %v893
  %v913 = vunpack.c.h.b16 %v893
  %v914 = vunpack.c.l.b16 %v894
  %v915 = vunpack.c.h.b16 %v894
  %v916 = vunpack.c.l.b16 %v895
  %v917 = vunpack.c.h.b16 %v895
  %v918 = vunpack.c.l.b16 %v896
  %v919 = vunpack.c.h.b16 %v896
  %v920 = vunpack.c.l.b16 %v897
  %v921 = vunpack.c.h.b16 %v897
  %v922 = vpack.c.b16 %v906, %v906
  %v923 = vpack.c.b16 %v907, %v907
  %v924 = vpack.c.b16 %v908, %v908
  %v925 = vpack.c.b16 %v909, %v909
  %v926 = vpack.c.b16 %v910, %v910
  %v927 = vpack.c.b16 %v911, %v911
  %v928 = vpack.c.b16 %v912, %v912
  %v929 = vpack.c.b16 %v913, %v913
  %v930 = vpack.c.b16 %v914, %v914
  %v931 = vpack.c.b16 %v915, %v915
  %v932 = vpack.c.b16 %v916, %v916
  %v933 = vpack.c.b16 %v917, %v917
  %v934 = vpack.c.b16 %v918, %v918
  %v935 = vpack.c.b16 %v919, %v919
  %v936 = vpack.c.b16 %v920, %v920
  %v937 = vpack.c.b16 %v921, %v921
  %954 = vst [vmem:[%s3] sm:$0xf] %v922
  %955 = vst [vmem:[%s3 + $0x4] sm:$0xf] %v923
  %956 = vst [vmem:[%s3 + $0x8] sm:$0xf] %v924
  %957 = vst [vmem:[%s3 + $0xc] sm:$0xf] %v925
  %958 = vst [vmem:[%s3 + $0x10] sm:$0xf] %v926
  %959 = vst [vmem:[%s3 + $0x14] sm:$0xf] %v927
  %960 = vst [vmem:[%s3 + $0x18] sm:$0xf] %v928
  %961 = vst [vmem:[%s3 + $0x1c] sm:$0xf] %v929
  %962 = vst [vmem:[%s3 + $0x20] sm:$0xf] %v930
  %963 = vst [vmem:[%s3 + $0x24] sm:$0xf] %v931
  %964 = vst [vmem:[%s3 + $0x28] sm:$0xf] %v932
  %965 = vst [vmem:[%s3 + $0x2c] sm:$0xf] %v933
  %966 = vst [vmem:[%s3 + $0x30] sm:$0xf] %v934
  %967 = vst [vmem:[%s3 + $0x34] sm:$0xf] %v935
  %968 = vst [vmem:[%s3 + $0x38] sm:$0xf] %v936
  %969 = vst [vmem:[%s3 + $0x3c] sm:$0xf] %v937
  // Predicated region
  $region14: #{generator_forward.6} parent=0 // pred_check
    _
  $region15: #{generator_forward.6} parent=0 // pred_check_branch
    %971 = sbr.rel (0) target = $region17
  $region16: #{generator_forward.6} parent=0 // pred_region
    _
  $region17: #{generator_forward.6} parent=0 // pred_fallthru
    _
  // Predicated region
  $region18: #{generator_forward.6} parent=0 // pred_check
    _
  $region19: #{generator_forward.6} parent=0 // pred_check_branch
    %973 = sbr.rel (0) target = $region21
  $region20: #{generator_forward.6} parent=0 // pred_region
    _
  $region21: #{generator_forward.6} parent=0 // pred_fallthru
    _

// kernel: tile.38
$region0: #{tile.38}
  #allocation0 [shape = 's32[1]{0}', space=sflag, size = 0x4, scoped, tag = 'scoped memory for tile.38']
  %s0 = inlined_call_operand.vmem [shape: f32[3], index: 0, kind: input, shape index: {}]
  %s1 = inlined_call_operand.vmem [shape: f32[4,3], index: 1, kind: output, shape index: {}]
  // Predicated region
  $region2: #{tile.38} parent=0 // pred_check
    _
  $region3: #{tile.38} parent=0 // pred_check_branch
    %3 = sbr.rel (0) target = $region5
  $region4: #{tile.38} parent=0 // pred_region
    _
  $region5: #{tile.38} parent=0 // pred_fallthru
    _
  %v4 = vld [vmem:[%s0] ss:$0 sm:$0xff]
  %5 = vst [vmem:[%s1] sm:$0xf] %v4

// kernel: tile.39
$region0: #{tile.39}
  %s0 = inlined_call_operand.vmem [shape: f32[4,3], index: 0, kind: input, shape index: {}]
  %s1 = inlined_call_operand.vmem [shape: f32[1,12], index: 1, kind: output, shape index: {}]
  $region1: #{tile.39} parent=0
    #allocation0 [shape = 'u8[4096]{0}', space=vmem, size = 0x1000, scoped, tag = 'scoped mem for output reshape']
    #allocation1 [shape = 'u8[4096]{0}', space=vmem, size = 0x1000, scoped, tag = 'scoped mem for input reshape']
    %s3 = sshllo.u32 0, 4
    %v4 = vld [vmem:[%s0] sm:%s3]
    %5 = vst [vmem:[#allocation1] sm:%s3] %v4
    %v6 = vld [vmem:[#allocation1] sm:$0x1]
    %vm7 = vcmask 23552
    %8 = vst.msk [vmem:[#allocation0] sm:$0x1] %vm7, %v6
    %s9 = scalar_lea.vmem [#allocation1], 3
    %v10 = vld [vmem:[%s9] sm:$0x1]
    %11 = vrot.lane.b32.xlu0 %v10, 9
    %v12 = vpop.permute.xlu0 %11
    %vm13 = vcmask 97352
    %14 = vst.msk [vmem:[#allocation0] sm:$0x1] %vm13, %v12
    %s15 = scalar_lea.vmem [#allocation1], 2
    %v16 = vld [vmem:[%s15] sm:$0x1]
    %17 = vrot.lane.b32.xlu0 %v16, 6
    %v18 = vpop.permute.xlu0 %17
    %vm19 = vcmask 72752
    %20 = vst.msk [vmem:[#allocation0] sm:$0x1] %vm19, %v18
    %s21 = scalar_lea.vmem [#allocation1], 1
    %v22 = vld [vmem:[%s21] sm:$0x1]
    %23 = vrot.lane.b32.xlu0 %v22, 3
    %v24 = vpop.permute.xlu0 %23
    %vm25 = vcmask 48152
    %26 = vst.msk [vmem:[#allocation0] sm:$0x1] %vm25, %v24
    %s28 = sshllo.u32 0, 1
    %v30 = vld [vmem:[#allocation0] sm:%s28]
    %s31 = sshllo.u32 0, 1
    %32 = vst [vmem:[%s1] sm:%s31] %v30

// kernel: generator_forward.7
$region0: #{generator_forward.7}
  #allocation0 [shape = 'u32[]', space=smem, size = 0x4, offset = 0x4, fixed_abs, tag = 'smem constant byte address 0x4 - core index']
  #allocation1 [shape = 'u32[144,128]{1,0:T(1,128)}', space=vmem, size = 0x12000, scoped, tag = 'internal scratch']
  %s0 = inlined_call_operand.vmem [shape: bf16[512,288], index: 0, kind: input, shape index: {}]
  %s1 = inlined_call_operand.vmem [shape: bf16[288,12], index: 1, kind: input, shape index: {}]
  %s2 = inlined_call_operand.vmem [shape: f32[1,12], index: 2, kind: input, shape index: {}]
  %s3 = inlined_call_operand.vmem [shape: f32[512,12], index: 3, kind: output, shape index: {}]
  %s4 = sld [smem:[#allocation0]]
  $region45: #{generator_forward.7} parent=0
    _
  %s6 = ssub.s32 1, %s4
  %s7 = scalar_select 0, %s6, %s4
  loop: start=0, step=1, limit=4
  $region2: #{generator_forward.7} parent=0 // loop_pre_header
    _
  $region3: #{generator_forward.7} parent=0 // loop_header
    %s9 = sphi 0, %s13
    %p10 = scmp.ge.s32.totalorder %s9, 4
    %s16 = sphi 0, %s28
    %s17 = sphi 0, %s24
    %s18 = sphi 0, %s16
    %s19 = sphi 0, %s17
    %s20 = sphi 0, %s18
    %s21 = sphi 0, %s19
    %s31 = sphi 0, %s33
    %s34 = sphi 0, %s31
    %s35 = sphi 0, %s34
    %s51 = sphi 0, %s35
    %s57 = sphi 0, %s59
    %s60 = sphi 0, %s57
    %s61 = sphi 0, %s60
    %s77 = sphi 0, %s61
    %s83 = sphi 0, %s85
    %s86 = sphi 0, %s83
    %s87 = sphi 0, %s86
    %s103 = sphi 0, %s87
    %s111 = sphi 0, %s113
    %s114 = sphi 0, %s111
    %s115 = sphi 0, %s114
    %s131 = sphi 0, %s115
  $region4: #{generator_forward.7} parent=0 // loop_header_branch
    %12 = sbr.rel (%p10) target = $region8
  $region5: #{generator_forward.7} parent=0 // loop_body
    %s14 = ssub.s32 %s9, 1
    %s15 = ssub.s32 %s9, 2
    %s22 = sadd.s32 1, %s17
    %p23 = scmp.ge.s32.totalorder %s22, 1
    %s24 = scalar_select %p23, 0, %s22
    %s25 = sadd.s32 1, %s16
    %s26 = scalar_select %p23, %s25, %s16
    %p27 = scmp.ge.s32.totalorder %s26, 2
    %s28 = scalar_select %p27, 0, %s26
    %s29 = ssub.s32 %s16, %s28
    %p30 = scmp.eq.s32.totalorder %s29, 0
    %s32 = sadd.s32 %s31, 1
    %s33 = scalar_select %p30, %s31, %s32
    %p36 = pneg %p30
    %p37 = scmp.eq.s32.totalorder %s9, 1
    %p38 = por %p36, %p37
    %p39 = scmp.ne.s32.totalorder %s31, %s34
    %p40 = scmp.eq.s32.totalorder %s9, 0
    %p41 = por %p39, %p40
    %p42 = scmp.ne.s32.totalorder %s31, %s34
    %p43 = scmp.eq.s32.totalorder %s14, 1
    %p44 = por %p42, %p43
    %p45 = scmp.ne.s32.totalorder %s34, %s35
    %p46 = scmp.eq.s32.totalorder %s14, 0
    %p47 = por %p45, %p46
    %p48 = scmp.ne.s32.totalorder %s34, %s35
    %p49 = scmp.eq.s32.totalorder %s15, 1
    %p50 = por %p48, %p49
    %p52 = scmp.ne.s32.totalorder %s35, %s51
    %p53 = scmp.eq.s32.totalorder %s15, 0
    %p54 = por %p52, %p53
    %s55 = ssub.s32 %s17, %s24
    %p56 = scmp.eq.s32.totalorder %s55, 0
    %s58 = sadd.s32 %s57, 1
    %s59 = scalar_select %p56, %s57, %s58
    %p62 = pneg %p56
    %p63 = scmp.eq.s32.totalorder %s9, 1
    %p64 = por %p62, %p63
    %p65 = scmp.ne.s32.totalorder %s57, %s60
    %p66 = scmp.eq.s32.totalorder %s9, 0
    %p67 = por %p65, %p66
    %p68 = scmp.ne.s32.totalorder %s57, %s60
    %p69 = scmp.eq.s32.totalorder %s14, 1
    %p70 = por %p68, %p69
    %p71 = scmp.ne.s32.totalorder %s60, %s61
    %p72 = scmp.eq.s32.totalorder %s14, 0
    %p73 = por %p71, %p72
    %p74 = scmp.ne.s32.totalorder %s60, %s61
    %p75 = scmp.eq.s32.totalorder %s15, 1
    %p76 = por %p74, %p75
    %p78 = scmp.ne.s32.totalorder %s61, %s77
    %p79 = scmp.eq.s32.totalorder %s15, 0
    %p80 = por %p78, %p79
    %s81 = ssub.s32 %s17, %s24
    %p82 = scmp.eq.s32.totalorder %s81, 0
    %s84 = sadd.s32 %s83, 1
    %s85 = scalar_select %p82, %s83, %s84
    %p88 = pneg %p82
    %p89 = scmp.eq.s32.totalorder %s9, 1
    %p90 = por %p88, %p89
    %p91 = scmp.ne.s32.totalorder %s83, %s86
    %p92 = scmp.eq.s32.totalorder %s9, 0
    %p93 = por %p91, %p92
    %p94 = scmp.ne.s32.totalorder %s83, %s86
    %p95 = scmp.eq.s32.totalorder %s14, 1
    %p96 = por %p94, %p95
    %p97 = scmp.ne.s32.totalorder %s86, %s87
    %p98 = scmp.eq.s32.totalorder %s14, 0
    %p99 = por %p97, %p98
    %p100 = scmp.ne.s32.totalorder %s86, %s87
    %p101 = scmp.eq.s32.totalorder %s15, 1
    %p102 = por %p100, %p101
    %p104 = scmp.ne.s32.totalorder %s87, %s103
    %p105 = scmp.eq.s32.totalorder %s15, 0
    %p106 = por %p104, %p105
    %s107 = ssub.s32 %s16, %s28
    %s108 = ssub.s32 %s17, %s24
    %s109 = sor.u32 %s107, %s108
    %p110 = scmp.eq.s32.totalorder %s109, 0
    %s112 = sadd.s32 %s111, 1
    %s113 = scalar_select %p110, %s111, %s112
    %p116 = pneg %p110
    %p117 = scmp.eq.s32.totalorder %s9, 1
    %p118 = por %p116, %p117
    %p119 = scmp.ne.s32.totalorder %s111, %s114
    %p120 = scmp.eq.s32.totalorder %s9, 0
    %p121 = por %p119, %p120
    %p122 = scmp.ne.s32.totalorder %s111, %s114
    %p123 = scmp.eq.s32.totalorder %s14, 1
    %p124 = por %p122, %p123
    %p125 = scmp.ne.s32.totalorder %s114, %s115
    %p126 = scmp.eq.s32.totalorder %s14, 0
    %p127 = por %p125, %p126
    %p128 = scmp.ne.s32.totalorder %s114, %s115
    %p129 = scmp.eq.s32.totalorder %s15, 1
    %p130 = por %p128, %p129
    %p132 = scmp.ne.s32.totalorder %s115, %s131
    %p133 = scmp.eq.s32.totalorder %s15, 0
    %p134 = por %p132, %p133
    %p135 = scmp.le.s32.totalorder 1, %s9
    %p136 = scmp.lt.s32.totalorder %s9, 3
    %p137 = pnand %p135, %p136
    %p138 = pneg %p137
    // Predicated region
    $region9: #{generator_forward.7} parent=5 // pred_check
      _
    $region10: #{generator_forward.7} parent=5 // pred_check_branch
      %140 = sbr.rel (%p137) target = $region12
    $region11: #{generator_forward.7} parent=5 // pred_region
      %s141 = ssub.s32 %s9, 1
      // Predicated region
      $region13: #{generator_forward.7} parent=11 // pred_check
        %p142 = pneg %p73
      $region14: #{generator_forward.7} parent=11 // pred_check_branch
        %144 = sbr.rel (%p142) target = $region16
      $region15: #{generator_forward.7} parent=11 // pred_region
        %p145 = scmp.lt.s32.totalorder %s19, 0
        %s146 = scalar_select %p145, %s19, 0
        %s147 = smul.addr %s146, 4
        %s148 = scalar_lea.vmem %s1, %s147
      $region16: #{generator_forward.7} parent=11 // pred_fallthru
        _
      // Predicated region
      $region17: #{generator_forward.7} parent=11 // pred_check
        %p149 = pneg %p99
      $region18: #{generator_forward.7} parent=11 // pred_check_branch
        %151 = sbr.rel (%p149) target = $region20
      $region19: #{generator_forward.7} parent=11 // pred_region
        %p152 = scmp.lt.s32.totalorder %s19, 0
        %s153 = scalar_select %p152, %s19, 0
        %s154 = scalar_lea.vmem %s2, %s153
      $region20: #{generator_forward.7} parent=11 // pred_fallthru
        _
    $region12: #{generator_forward.7} parent=5 // pred_fallthru
      _
    %p155 = scmp.lt.s32.totalorder %s9, 2
    // Predicated region
    $region21: #{generator_forward.7} parent=5 // pred_check
      %p156 = pneg %p155
    $region22: #{generator_forward.7} parent=5 // pred_check_branch
      %158 = sbr.rel (%p156) target = $region24
    $region23: #{generator_forward.7} parent=5 // pred_region
      // Predicated region
      $region25: #{generator_forward.7} parent=23 // pred_check
        %p159 = pneg %p41
      $region26: #{generator_forward.7} parent=23 // pred_check_branch
        %161 = sbr.rel (%p159) target = $region28
      $region27: #{generator_forward.7} parent=23 // pred_region
        %s162 = smul.u32 32, %s16
        %p163 = scmp.lt.s32.totalorder %s162, 63
        %s164 = scalar_select %p163, %s162, 63
        %s165 = smul.addr %s164, 3
        %s166 = smul.addr %s165, 4
        %s167 = scalar_lea.vmem %s0, %s166
        %s168 = smul.u32 32, %s16
      $region28: #{generator_forward.7} parent=23 // pred_fallthru
        _
    $region24: #{generator_forward.7} parent=5 // pred_fallthru
      _
    %p169 = scmp.le.s32.totalorder 1, %s9
    %p170 = scmp.lt.s32.totalorder %s9, 3
    %p171 = pnand %p169, %p170
    %p172 = pneg %p171
    // Predicated region
    $region29: #{generator_forward.7} parent=5 // pred_check
      _
    $region30: #{generator_forward.7} parent=5 // pred_check_branch
      %174 = sbr.rel (%p171) target = $region32
    $region31: #{generator_forward.7} parent=5 // pred_region
      %s175 = ssub.s32 %s9, 1
      %s176 = smul.u32 32, %s18
      %p177 = scmp.lt.s32.totalorder %s176, 63
      %s178 = scalar_select %p177, %s176, 63
      %s179 = smul.addr %s178, 3
      %s180 = smul.addr %s179, 4
      %s181 = scalar_lea.vmem %s0, %s180
      %p182 = pneg %p47
      %p183 = pneg %p44
      %p184 = scmp.lt.s32.totalorder %s19, 0
      %s185 = scalar_select %p184, %s19, 0
      %s186 = smul.addr %s185, 4
      %s187 = scalar_lea.vmem %s1, %s186
      %p188 = pneg %p73
      %p189 = pneg %p70
      %p190 = scmp.lt.s32.totalorder %s19, 0
      %s191 = scalar_select %p190, %s19, 0
      %s192 = scalar_lea.vmem %s2, %s191
      %p193 = pneg %p99
      %p194 = pneg %p96
      %p195 = pneg %p127
      %p196 = pneg %p124
      %s197 = smul.u32 32, %s18
      %p198 = scmp.lt.s32.totalorder %s197, 63
      %s199 = scalar_select %p198, %s197, 63
      %p200 = scmp.lt.s32.totalorder %s19, 0
      %s201 = scalar_select %p200, %s19, 0
      %s202 = sadd.s32 %s201, %s199
      %s203 = smul.addr %s202, 8
      %s204 = scalar_lea.vmem %s3, %s203
      %s205 = smul.u32 32, %s18
      %p206 = scmp.lt.s32.totalorder %s205, 63
      %s207 = scalar_select %p206, %s205, 63
      %s208 = smul.addr %s207, 3
      %s209 = smul.addr %s208, 4
      %s210 = scalar_lea.vmem %s0, %s209
      %s211 = smul.u32 32, %s18
      %p212 = scmp.lt.s32.totalorder %s19, 0
      %s213 = scalar_select %p212, %s19, 0
      %s214 = smul.addr %s213, 4
      %s215 = scalar_lea.vmem %s1, %s214
      %p216 = scmp.lt.s32.totalorder %s19, 0
      %s217 = scalar_select %p216, %s19, 0
      %s218 = scalar_lea.vmem %s2, %s217
      %s219 = smul.u32 32, %s18
      %p220 = scmp.lt.s32.totalorder %s219, 63
      %s221 = scalar_select %p220, %s219, 63
      %p222 = scmp.lt.s32.totalorder %s19, 0
      %s223 = scalar_select %p222, %s19, 0
      %s224 = sadd.s32 %s223, %s221
      %s225 = smul.addr %s224, 8
      %s226 = scalar_lea.vmem %s3, %s225
      %s227 = smul.u32 32, %s18
      %v229 = vld [vmem:[%s210] sm:$0xff]
      %v230 = vld [vmem:[%s210 + $0x8] sm:$0xf]
      %v231 = vld [vmem:[%s210 + $0xc] sm:$0xff]
      %v232 = vld [vmem:[%s210 + $0x14] sm:$0xf]
      %v233 = vld [vmem:[%s210 + $0x18] sm:$0xff]
      %v234 = vld [vmem:[%s210 + $0x20] sm:$0xf]
      %v235 = vld [vmem:[%s210 + $0x24] sm:$0xff]
      %v236 = vld [vmem:[%s210 + $0x2c] sm:$0xf]
      %v237 = vld [vmem:[%s210 + $0x30] sm:$0xff]
      %v238 = vld [vmem:[%s210 + $0x38] sm:$0xf]
      %v239 = vld [vmem:[%s210 + $0x3c] sm:$0xff]
      %v240 = vld [vmem:[%s210 + $0x44] sm:$0xf]
      %v241 = vld [vmem:[%s210 + $0x48] sm:$0xff]
      %v242 = vld [vmem:[%s210 + $0x50] sm:$0xf]
      %v243 = vld [vmem:[%s210 + $0x54] sm:$0xff]
      %v244 = vld [vmem:[%s210 + $0x5c] sm:$0xf]
      %v245 = vld [vmem:[%s210 + $0x60] sm:$0xff]
      %v246 = vld [vmem:[%s210 + $0x68] sm:$0xf]
      %v247 = vld [vmem:[%s210 + $0x6c] sm:$0xff]
      %v248 = vld [vmem:[%s210 + $0x74] sm:$0xf]
      %v249 = vld [vmem:[%s210 + $0x78] sm:$0xff]
      %v250 = vld [vmem:[%s210 + $0x80] sm:$0xf]
      %v251 = vld [vmem:[%s210 + $0x84] sm:$0xff]
      %v252 = vld [vmem:[%s210 + $0x8c] sm:$0xf]
      %v253 = vld [vmem:[%s210 + $0x90] sm:$0xff]
      %v254 = vld [vmem:[%s210 + $0x98] sm:$0xf]
      %v255 = vld [vmem:[%s210 + $0x9c] sm:$0xff]
      %v256 = vld [vmem:[%s210 + $0xa4] sm:$0xf]
      %v257 = vld [vmem:[%s210 + $0xa8] sm:$0xff]
      %v258 = vld [vmem:[%s210 + $0xb0] sm:$0xf]
      %v259 = vld [vmem:[%s210 + $0xb4] sm:$0xff]
      %v260 = vld [vmem:[%s210 + $0xbc] sm:$0xf]
      %v261 = vld [vmem:[%s210 + $0xc0] sm:$0xff]
      %v262 = vld [vmem:[%s210 + $0xc8] sm:$0xf]
      %v263 = vld [vmem:[%s210 + $0xcc] sm:$0xff]
      %v264 = vld [vmem:[%s210 + $0xd4] sm:$0xf]
      %v265 = vld [vmem:[%s210 + $0xd8] sm:$0xff]
      %v266 = vld [vmem:[%s210 + $0xe0] sm:$0xf]
      %v267 = vld [vmem:[%s210 + $0xe4] sm:$0xff]
      %v268 = vld [vmem:[%s210 + $0xec] sm:$0xf]
      %v269 = vld [vmem:[%s210 + $0xf0] sm:$0xff]
      %v270 = vld [vmem:[%s210 + $0xf8] sm:$0xf]
      %v271 = vld [vmem:[%s210 + $0xfc] sm:$0xff]
      %v272 = vld [vmem:[%s210 + $0x104] sm:$0xf]
      %v273 = vld [vmem:[%s210 + $0x108] sm:$0xff]
      %v274 = vld [vmem:[%s210 + $0x110] sm:$0xf]
      %v275 = vld [vmem:[%s210 + $0x114] sm:$0xff]
      %v276 = vld [vmem:[%s210 + $0x11c] sm:$0xf]
      %v277 = vld [vmem:[%s210 + $0x120] sm:$0xff]
      %v278 = vld [vmem:[%s210 + $0x128] sm:$0xf]
      %v279 = vld [vmem:[%s210 + $0x12c] sm:$0xff]
      %v280 = vld [vmem:[%s210 + $0x134] sm:$0xf]
      %v281 = vld [vmem:[%s210 + $0x138] sm:$0xff]
      %v282 = vld [vmem:[%s210 + $0x140] sm:$0xf]
      %v283 = vld [vmem:[%s210 + $0x144] sm:$0xff]
      %v284 = vld [vmem:[%s210 + $0x14c] sm:$0xf]
      %v285 = vld [vmem:[%s210 + $0x150] sm:$0xff]
      %v286 = vld [vmem:[%s210 + $0x158] sm:$0xf]
      %v287 = vld [vmem:[%s210 + $0x15c] sm:$0xff]
      %v288 = vld [vmem:[%s210 + $0x164] sm:$0xf]
      %v289 = vld [vmem:[%s210 + $0x168] sm:$0xff]
      %v290 = vld [vmem:[%s210 + $0x170] sm:$0xf]
      %v291 = vld [vmem:[%s210 + $0x174] sm:$0xff]
      %v292 = vld [vmem:[%s210 + $0x17c] sm:$0xf]
      %v293 = vld [vmem:[%s215] sm:$0xf]
      %v294 = vld [vmem:[%s215 + $0x4] sm:$0xf]
      %v295 = vld [vmem:[%s215 + $0x8] sm:$0xf]
      %v296 = vld [vmem:[%s215 + $0xc] sm:$0xf]
      %v297 = vld [vmem:[%s215 + $0x10] sm:$0xf]
      %v298 = vld [vmem:[%s215 + $0x14] sm:$0xf]
      %v299 = vld [vmem:[%s215 + $0x18] sm:$0xf]
      %v300 = vld [vmem:[%s215 + $0x1c] sm:$0xf]
      %v301 = vld [vmem:[%s215 + $0x20] sm:$0xf]
      %v302 = vld [vmem:[%s215 + $0x24] sm:$0xf]
      %v303 = vld [vmem:[%s215 + $0x28] sm:$0xf]
      %v304 = vld [vmem:[%s215 + $0x2c] sm:$0xf]
      %v305 = vld [vmem:[%s215 + $0x30] sm:$0xf]
      %v306 = vld [vmem:[%s215 + $0x34] sm:$0xf]
      %v307 = vld [vmem:[%s215 + $0x38] sm:$0xf]
      %v308 = vld [vmem:[%s215 + $0x3c] sm:$0xf]
      %v309 = vld [vmem:[%s215 + $0x40] sm:$0xf]
      %v310 = vld [vmem:[%s215 + $0x44] sm:$0xf]
      %v311 = vld [vmem:[%s215 + $0x48] sm:$0xf]
      %v312 = vld [vmem:[%s215 + $0x4c] sm:$0xf]
      %v313 = vld [vmem:[%s215 + $0x50] sm:$0xf]
      %v314 = vld [vmem:[%s215 + $0x54] sm:$0xf]
      %v315 = vld [vmem:[%s215 + $0x58] sm:$0xf]
      %v316 = vld [vmem:[%s215 + $0x5c] sm:$0xf]
      %v317 = vld [vmem:[%s215 + $0x60] sm:$0xf]
      %v318 = vld [vmem:[%s215 + $0x64] sm:$0xf]
      %v319 = vld [vmem:[%s215 + $0x68] sm:$0xf]
      %v320 = vld [vmem:[%s215 + $0x6c] sm:$0xf]
      %v321 = vld [vmem:[%s215 + $0x70] sm:$0xf]
      %v322 = vld [vmem:[%s215 + $0x74] sm:$0xf]
      %v323 = vld [vmem:[%s215 + $0x78] sm:$0xf]
      %v324 = vld [vmem:[%s215 + $0x7c] sm:$0xf]
      %v325 = vld [vmem:[%s215 + $0x80] sm:$0xf]
      %v326 = vld [vmem:[%s215 + $0x84] sm:$0xf]
      %v327 = vld [vmem:[%s215 + $0x88] sm:$0xf]
      %v328 = vld [vmem:[%s215 + $0x8c] sm:$0xf]
      %v329 = vld [vmem:[%s218] sm:$0x1]
      %v331 = vlaneseq
      %v332 = vshrl.u32 %v331, 7
      %v333 = vsub.s32 0, %v332
      %v334 = vrot.slane %v329, %v333
      %v400 = vunpack.c.l.b16 %v229
      %v401 = vunpack.c.h.b16 %v229
      %v402 = vunpack.c.l.b16 %v230
      %v403 = vunpack.c.l.b16 %v231
      %v404 = vunpack.c.h.b16 %v231
      %v405 = vunpack.c.l.b16 %v232
      %v406 = vunpack.c.l.b16 %v233
      %v407 = vunpack.c.h.b16 %v233
      %v408 = vunpack.c.l.b16 %v234
      %v409 = vunpack.c.l.b16 %v235
      %v410 = vunpack.c.h.b16 %v235
      %v411 = vunpack.c.l.b16 %v236
      %v412 = vunpack.c.l.b16 %v237
      %v413 = vunpack.c.h.b16 %v237
      %v414 = vunpack.c.l.b16 %v238
      %v415 = vunpack.c.l.b16 %v239
      %v416 = vunpack.c.h.b16 %v239
      %v417 = vunpack.c.l.b16 %v240
      %v418 = vunpack.c.l.b16 %v241
      %v419 = vunpack.c.h.b16 %v241
      %v420 = vunpack.c.l.b16 %v242
      %v421 = vunpack.c.l.b16 %v243
      %v422 = vunpack.c.h.b16 %v243
      %v423 = vunpack.c.l.b16 %v244
      %v424 = vunpack.c.l.b16 %v245
      %v425 = vunpack.c.h.b16 %v245
      %v426 = vunpack.c.l.b16 %v246
      %v427 = vunpack.c.l.b16 %v247
      %v428 = vunpack.c.h.b16 %v247
      %v429 = vunpack.c.l.b16 %v248
      %v430 = vunpack.c.l.b16 %v249
      %v431 = vunpack.c.h.b16 %v249
      %v432 = vunpack.c.l.b16 %v250
      %v433 = vunpack.c.l.b16 %v251
      %v434 = vunpack.c.h.b16 %v251
      %v435 = vunpack.c.l.b16 %v252
      %v436 = vunpack.c.l.b16 %v253
      %v437 = vunpack.c.h.b16 %v253
      %v438 = vunpack.c.l.b16 %v254
      %v439 = vunpack.c.l.b16 %v255
      %v440 = vunpack.c.h.b16 %v255
      %v441 = vunpack.c.l.b16 %v256
      %v442 = vunpack.c.l.b16 %v257
      %v443 = vunpack.c.h.b16 %v257
      %v444 = vunpack.c.l.b16 %v258
      %v445 = vunpack.c.l.b16 %v259
      %v446 = vunpack.c.h.b16 %v259
      %v447 = vunpack.c.l.b16 %v260
      %v448 = vunpack.c.l.b16 %v261
      %v449 = vunpack.c.h.b16 %v261
      %v450 = vunpack.c.l.b16 %v262
      %v451 = vunpack.c.l.b16 %v263
      %v452 = vunpack.c.h.b16 %v263
      %v453 = vunpack.c.l.b16 %v264
      %v454 = vunpack.c.l.b16 %v265
      %v455 = vunpack.c.h.b16 %v265
      %v456 = vunpack.c.l.b16 %v266
      %v457 = vunpack.c.l.b16 %v267
      %v458 = vunpack.c.h.b16 %v267
      %v459 = vunpack.c.l.b16 %v268
      %v460 = vunpack.c.l.b16 %v269
      %v461 = vunpack.c.h.b16 %v269
      %v462 = vunpack.c.l.b16 %v270
      %v463 = vunpack.c.l.b16 %v271
      %v464 = vunpack.c.h.b16 %v271
      %v465 = vunpack.c.l.b16 %v272
      %v466 = vunpack.c.l.b16 %v273
      %v467 = vunpack.c.h.b16 %v273
      %v468 = vunpack.c.l.b16 %v274
      %v469 = vunpack.c.l.b16 %v275
      %v470 = vunpack.c.h.b16 %v275
      %v471 = vunpack.c.l.b16 %v276
      %v472 = vunpack.c.l.b16 %v277
      %v473 = vunpack.c.h.b16 %v277
      %v474 = vunpack.c.l.b16 %v278
      %v475 = vunpack.c.l.b16 %v279
      %v476 = vunpack.c.h.b16 %v279
      %v477 = vunpack.c.l.b16 %v280
      %v478 = vunpack.c.l.b16 %v281
      %v479 = vunpack.c.h.b16 %v281
      %v480 = vunpack.c.l.b16 %v282
      %v481 = vunpack.c.l.b16 %v283
      %v482 = vunpack.c.h.b16 %v283
      %v483 = vunpack.c.l.b16 %v284
      %v484 = vunpack.c.l.b16 %v285
      %v485 = vunpack.c.h.b16 %v285
      %v486 = vunpack.c.l.b16 %v286
      %v487 = vunpack.c.l.b16 %v287
      %v488 = vunpack.c.h.b16 %v287
      %v489 = vunpack.c.l.b16 %v288
      %v490 = vunpack.c.l.b16 %v289
      %v491 = vunpack.c.h.b16 %v289
      %v492 = vunpack.c.l.b16 %v290
      %v493 = vunpack.c.l.b16 %v291
      %v494 = vunpack.c.h.b16 %v291
      %v495 = vunpack.c.l.b16 %v292
      %v496 = vpack.c.b16 %v403, %v400
      %v497 = vpack.c.b16 %v404, %v401
      %v498 = vpack.c.b16 %v405, %v402
      %v499 = vpack.c.b16 %v409, %v406
      %v500 = vpack.c.b16 %v410, %v407
      %v501 = vpack.c.b16 %v411, %v408
      %v502 = vpack.c.b16 %v415, %v412
      %v503 = vpack.c.b16 %v416, %v413
      %v504 = vpack.c.b16 %v417, %v414
      %v505 = vpack.c.b16 %v421, %v418
      %v506 = vpack.c.b16 %v422, %v419
      %v507 = vpack.c.b16 %v423, %v420
      %v508 = vpack.c.b16 %v427, %v424
      %v509 = vpack.c.b16 %v428, %v425
      %v510 = vpack.c.b16 %v429, %v426
      %v511 = vpack.c.b16 %v433, %v430
      %v512 = vpack.c.b16 %v434, %v431
      %v513 = vpack.c.b16 %v435, %v432
      %v514 = vpack.c.b16 %v439, %v436
      %v515 = vpack.c.b16 %v440, %v437
      %v516 = vpack.c.b16 %v441, %v438
      %v517 = vpack.c.b16 %v445, %v442
      %v518 = vpack.c.b16 %v446, %v443
      %v519 = vpack.c.b16 %v447, %v444
      %v520 = vpack.c.b16 %v451, %v448
      %v521 = vpack.c.b16 %v452, %v449
      %v522 = vpack.c.b16 %v453, %v450
      %v523 = vpack.c.b16 %v457, %v454
      %v524 = vpack.c.b16 %v458, %v455
      %v525 = vpack.c.b16 %v459, %v456
      %v526 = vpack.c.b16 %v463, %v460
      %v527 = vpack.c.b16 %v464, %v461
      %v528 = vpack.c.b16 %v465, %v462
      %v529 = vpack.c.b16 %v469, %v466
      %v530 = vpack.c.b16 %v470, %v467
      %v531 = vpack.c.b16 %v471, %v468
      %v532 = vpack.c.b16 %v475, %v472
      %v533 = vpack.c.b16 %v476, %v473
      %v534 = vpack.c.b16 %v477, %v474
      %v535 = vpack.c.b16 %v481, %v478
      %v536 = vpack.c.b16 %v482, %v479
      %v537 = vpack.c.b16 %v483, %v480
      %v538 = vpack.c.b16 %v487, %v484
      %v539 = vpack.c.b16 %v488, %v485
      %v540 = vpack.c.b16 %v489, %v486
      %v541 = vpack.c.b16 %v493, %v490
      %v542 = vpack.c.b16 %v494, %v491
      %v543 = vpack.c.b16 %v495, %v492
      %v612 = vunpack.c.l.b16 %v293
      %v613 = vunpack.c.l.b16 %v294
      %v614 = vunpack.c.l.b16 %v295
      %v615 = vunpack.c.l.b16 %v296
      %v616 = vunpack.c.l.b16 %v297
      %v617 = vunpack.c.l.b16 %v298
      %v618 = vunpack.c.l.b16 %v299
      %v619 = vunpack.c.l.b16 %v300
      %v620 = vunpack.c.l.b16 %v301
      %v621 = vunpack.c.l.b16 %v302
      %v622 = vunpack.c.l.b16 %v303
      %v623 = vunpack.c.l.b16 %v304
      %v624 = vunpack.c.l.b16 %v305
      %v625 = vunpack.c.l.b16 %v306
      %v626 = vunpack.c.l.b16 %v307
      %v627 = vunpack.c.l.b16 %v308
      %v628 = vunpack.c.l.b16 %v309
      %v629 = vunpack.c.l.b16 %v310
      %v630 = vunpack.c.l.b16 %v311
      %v631 = vunpack.c.l.b16 %v312
      %v632 = vunpack.c.l.b16 %v313
      %v633 = vunpack.c.l.b16 %v314
      %v634 = vunpack.c.l.b16 %v315
      %v635 = vunpack.c.l.b16 %v316
      %v636 = vunpack.c.l.b16 %v317
      %v637 = vunpack.c.l.b16 %v318
      %v638 = vunpack.c.l.b16 %v319
      %v639 = vunpack.c.l.b16 %v320
      %v640 = vunpack.c.l.b16 %v321
      %v641 = vunpack.c.l.b16 %v322
      %v642 = vunpack.c.l.b16 %v323
      %v643 = vunpack.c.l.b16 %v324
      %v644 = vunpack.c.l.b16 %v325
      %v645 = vunpack.c.l.b16 %v326
      %v646 = vunpack.c.l.b16 %v327
      %v647 = vunpack.c.l.b16 %v328
      %v648 = vpack.c.b16 %v613, %v612
      %v649 = vpack.c.b16 %v615, %v614
      %v650 = vpack.c.b16 %v617, %v616
      %v651 = vpack.c.b16 %v619, %v618
      %v652 = vpack.c.b16 %v621, %v620
      %v653 = vpack.c.b16 %v623, %v622
      %v654 = vpack.c.b16 %v625, %v624
      %v655 = vpack.c.b16 %v627, %v626
      %v656 = vpack.c.b16 %v629, %v628
      %v657 = vpack.c.b16 %v631, %v630
      %v658 = vpack.c.b16 %v633, %v632
      %v659 = vpack.c.b16 %v635, %v634
      %v660 = vpack.c.b16 %v637, %v636
      %v661 = vpack.c.b16 %v639, %v638
      %v662 = vpack.c.b16 %v641, %v640
      %v663 = vpack.c.b16 %v643, %v642
      %v664 = vpack.c.b16 %v645, %v644
      %v665 = vpack.c.b16 %v647, %v646
      %vm684 = vcmask 261120
      %v686 = vsel %vm684, %v498, 0
      %v689 = vsel %vm684, %v501, 0
      %v692 = vsel %vm684, %v504, 0
      %v695 = vsel %vm684, %v507, 0
      %v698 = vsel %vm684, %v510, 0
      %v701 = vsel %vm684, %v513, 0
      %v704 = vsel %vm684, %v516, 0
      %v707 = vsel %vm684, %v519, 0
      %v710 = vsel %vm684, %v522, 0
      %v713 = vsel %vm684, %v525, 0
      %v716 = vsel %vm684, %v528, 0
      %v719 = vsel %vm684, %v531, 0
      %v722 = vsel %vm684, %v534, 0
      %v725 = vsel %vm684, %v537, 0
      %v728 = vsel %vm684, %v540, 0
      %v731 = vsel %vm684, %v543, 0
      %733 = vmatprep.subr.bf16.mxu0 0
      %734 = vmatpush1.bf16.msra.mxu0 %v648
      %735 = vmatprep.subr.bf16.mxu0 0
      %736 = vmatpush1.bf16.msra.mxu0 %v649
      %737 = vmatprep.subr.bf16.mxu0 0
      %738 = vmatpush1.bf16.msra.mxu0 %v650
      %739 = vmatprep.subr.bf16.mxu0 0
      %740 = vmatpush1.bf16.msra.mxu0 %v651
      %741 = vmatprep.subr.bf16.mxu0 0
      %742 = vmatpush1.bf16.msra.mxu0 %v652
      %743 = vmatprep.subr.bf16.mxu0 0
      %744 = vmatpush1.bf16.msra.mxu0 %v653
      %745 = vmatprep.subr.bf16.mxu0 0
      %746 = vmatpush1.bf16.msra.mxu0 %v654
      %747 = vmatprep.subr.bf16.mxu0 0
      %748 = vmatpush1.bf16.msra.mxu0 %v655
      %749 = vmatprep.subr.bf16.mxu0 0
      %750 = vmatpush1.bf16.msra.mxu0 %v656
      %751 = vmatprep.subr.bf16.mxu0 0
      %752 = vmatpush1.bf16.msra.mxu0 %v657
      %753 = vmatprep.subr.bf16.mxu0 0
      %754 = vmatpush1.bf16.msra.mxu0 %v658
      %755 = vmatprep.subr.bf16.mxu0 0
      %756 = vmatpush1.bf16.msra.mxu0 %v659
      %757 = vmatprep.subr.bf16.mxu0 0
      %758 = vmatpush1.bf16.msra.mxu0 %v660
      %759 = vmatprep.subr.bf16.mxu0 0
      %760 = vmatpush1.bf16.msra.mxu0 %v661
      %761 = vmatprep.subr.bf16.mxu0 0
      %762 = vmatpush1.bf16.msra.mxu0 %v662
      %763 = vmatprep.subr.bf16.mxu0 0
      %764 = vmatpush1.bf16.msra.mxu0 %v663
      %765 = vmatprep.mubr.bf16.mxu0 %v497
      %766 = vmatmul.mubr.bf16.gmra.mrb[0].mxu0 %v496
      %v767 = vpop.f32.mrb[0].mxu0
      %v768 = vadd.f32 %v334, %v767
      %v769 = vpop.f32.mrb[0].mxu0
      %v770 = vpop.f32.mrb[0].mxu0
      %v771 = vadd.f32 %v334, %v770
      %v772 = vpop.f32.mrb[0].mxu0
      %773 = vmatprep.mubr.bf16.mxu0 %v500
      %774 = vmatmul.mubr.bf16.gmra.mrb[0].mxu0 %v499
      %v775 = vpop.f32.mrb[0].mxu0
      %v776 = vadd.f32 %v334, %v775
      %v777 = vpop.f32.mrb[0].mxu0
      %v778 = vpop.f32.mrb[0].mxu0
      %v779 = vadd.f32 %v334, %v778
      %v780 = vpop.f32.mrb[0].mxu0
      %781 = vmatprep.mubr.bf16.mxu0 %v503
      %782 = vmatmul.mubr.bf16.gmra.mrb[0].mxu0 %v502
      %v783 = vpop.f32.mrb[0].mxu0
      %v784 = vadd.f32 %v334, %v783
      %v785 = vpop.f32.mrb[0].mxu0
      %v786 = vpop.f32.mrb[0].mxu0
      %v787 = vadd.f32 %v334, %v786
      %v788 = vpop.f32.mrb[0].mxu0
      %789 = vmatprep.mubr.bf16.mxu0 %v506
      %790 = vmatmul.mubr.bf16.gmra.mrb[0].mxu0 %v505
      %v791 = vpop.f32.mrb[0].mxu0
      %v792 = vadd.f32 %v334, %v791
      %v793 = vpop.f32.mrb[0].mxu0
      %v794 = vpop.f32.mrb[0].mxu0
      %v795 = vadd.f32 %v334, %v794
      %v796 = vpop.f32.mrb[0].mxu0
      %797 = vmatprep.mubr.bf16.mxu0 %v509
      %798 = vmatmul.mubr.bf16.gmra.mrb[0].mxu0 %v508
      %v799 = vpop.f32.mrb[0].mxu0
      %v800 = vadd.f32 %v334, %v799
      %v801 = vpop.f32.mrb[0].mxu0
      %v802 = vpop.f32.mrb[0].mxu0
      %v803 = vadd.f32 %v334, %v802
      %v804 = vpop.f32.mrb[0].mxu0
      %805 = vmatprep.mubr.bf16.mxu0 %v512
      %806 = vmatmul.mubr.bf16.gmra.mrb[0].mxu0 %v511
      %v807 = vpop.f32.mrb[0].mxu0
      %v808 = vadd.f32 %v334, %v807
      %v809 = vpop.f32.mrb[0].mxu0
      %v810 = vpop.f32.mrb[0].mxu0
      %v811 = vadd.f32 %v334, %v810
      %v812 = vpop.f32.mrb[0].mxu0
      %813 = vmatprep.mubr.bf16.mxu0 %v515
      %814 = vmatmul.mubr.bf16.gmra.mrb[0].mxu0 %v514
      %v815 = vpop.f32.mrb[0].mxu0
      %v816 = vadd.f32 %v334, %v815
      %v817 = vpop.f32.mrb[0].mxu0
      %v818 = vpop.f32.mrb[0].mxu0
      %v819 = vadd.f32 %v334, %v818
      %v820 = vpop.f32.mrb[0].mxu0
      %821 = vmatprep.mubr.bf16.mxu0 %v518
      %822 = vmatmul.mubr.bf16.gmra.mrb[0].mxu0 %v517
      %v823 = vpop.f32.mrb[0].mxu0
      %v824 = vadd.f32 %v334, %v823
      %v825 = vpop.f32.mrb[0].mxu0
      %v826 = vpop.f32.mrb[0].mxu0
      %v827 = vadd.f32 %v334, %v826
      %v828 = vpop.f32.mrb[0].mxu0
      %829 = vmatprep.mubr.bf16.mxu0 %v521
      %830 = vmatmul.mubr.bf16.gmra.mrb[0].mxu0 %v520
      %v831 = vpop.f32.mrb[0].mxu0
      %v832 = vadd.f32 %v334, %v831
      %v833 = vpop.f32.mrb[0].mxu0
      %v834 = vpop.f32.mrb[0].mxu0
      %v835 = vadd.f32 %v334, %v834
      %v836 = vpop.f32.mrb[0].mxu0
      %837 = vmatprep.mubr.bf16.mxu0 %v524
      %838 = vmatmul.mubr.bf16.gmra.mrb[0].mxu0 %v523
      %v839 = vpop.f32.mrb[0].mxu0
      %v840 = vadd.f32 %v334, %v839
      %v841 = vpop.f32.mrb[0].mxu0
      %v842 = vpop.f32.mrb[0].mxu0
      %v843 = vadd.f32 %v334, %v842
      %v844 = vpop.f32.mrb[0].mxu0
      %845 = vmatprep.mubr.bf16.mxu0 %v527
      %846 = vmatmul.mubr.bf16.gmra.mrb[0].mxu0 %v526
      %v847 = vpop.f32.mrb[0].mxu0
      %v848 = vadd.f32 %v334, %v847
      %v849 = vpop.f32.mrb[0].mxu0
      %v850 = vpop.f32.mrb[0].mxu0
      %v851 = vadd.f32 %v334, %v850
      %v852 = vpop.f32.mrb[0].mxu0
      %853 = vmatprep.mubr.bf16.mxu0 %v530
      %854 = vmatmul.mubr.bf16.gmra.mrb[0].mxu0 %v529
      %v855 = vpop.f32.mrb[0].mxu0
      %v856 = vadd.f32 %v334, %v855
      %v857 = vpop.f32.mrb[0].mxu0
      %v858 = vpop.f32.mrb[0].mxu0
      %v859 = vadd.f32 %v334, %v858
      %v860 = vpop.f32.mrb[0].mxu0
      %861 = vmatprep.mubr.bf16.mxu0 %v533
      %862 = vmatmul.mubr.bf16.gmra.mrb[0].mxu0 %v532
      %v863 = vpop.f32.mrb[0].mxu0
      %v864 = vadd.f32 %v334, %v863
      %v865 = vpop.f32.mrb[0].mxu0
      %v866 = vpop.f32.mrb[0].mxu0
      %v867 = vadd.f32 %v334, %v866
      %v868 = vpop.f32.mrb[0].mxu0
      %869 = vmatprep.mubr.bf16.mxu0 %v536
      %870 = vmatmul.mubr.bf16.gmra.mrb[0].mxu0 %v535
      %v871 = vpop.f32.mrb[0].mxu0
      %v872 = vadd.f32 %v334, %v871
      %v873 = vpop.f32.mrb[0].mxu0
      %v874 = vpop.f32.mrb[0].mxu0
      %v875 = vadd.f32 %v334, %v874
      %v876 = vpop.f32.mrb[0].mxu0
      %877 = vmatprep.mubr.bf16.mxu0 %v539
      %878 = vmatmul.mubr.bf16.gmra.mrb[0].mxu0 %v538
      %v879 = vpop.f32.mrb[0].mxu0
      %v880 = vadd.f32 %v334, %v879
      %v881 = vpop.f32.mrb[0].mxu0
      %v882 = vpop.f32.mrb[0].mxu0
      %v883 = vadd.f32 %v334, %v882
      %v884 = vpop.f32.mrb[0].mxu0
      %885 = vmatprep.mubr.bf16.mxu0 %v542
      %886 = vmatmul.mubr.bf16.gmra.mrb[0].mxu0 %v541
      %v887 = vpop.f32.mrb[0].mxu0
      %v888 = vadd.f32 %v334, %v887
      %v889 = vpop.f32.mrb[0].mxu0
      %v890 = vpop.f32.mrb[0].mxu0
      %v891 = vadd.f32 %v334, %v890
      %v892 = vpop.f32.mrb[0].mxu0
      %893 = vdwg.mxu0
      %894 = vmatprep.subr.bf16.mxu0 0
      %895 = vmatpush1.bf16.msra.mxu0 %v664
      %896 = vmatprep.subr.bf16.mxu0 0
      %897 = vmatpush1.bf16.msra.mxu0 %v665
      %898 = vmatprep.subr.bf16.mxu0 0
      %899 = vmatpush1.bf16.msra.mxu0 0
      %900 = vmatprep.subr.bf16.mxu0 0
      %901 = vmatpush1.bf16.msra.mxu0 0
      %902 = vmatprep.subr.bf16.mxu0 0
      %903 = vmatpush1.bf16.msra.mxu0 0
      %904 = vmatprep.subr.bf16.mxu0 0
      %905 = vmatpush1.bf16.msra.mxu0 0
      %906 = vmatprep.subr.bf16.mxu0 0
      %907 = vmatpush1.bf16.msra.mxu0 0
      %908 = vmatprep.subr.bf16.mxu0 0
      %909 = vmatpush1.bf16.msra.mxu0 0
      %910 = vmatprep.subr.bf16.mxu0 0
      %911 = vmatpush1.bf16.msra.mxu0 0
      %912 = vmatprep.subr.bf16.mxu0 0
      %913 = vmatpush1.bf16.msra.mxu0 0
      %914 = vmatprep.subr.bf16.mxu0 0
      %915 = vmatpush1.bf16.msra.mxu0 0
      %916 = vmatprep.subr.bf16.mxu0 0
      %917 = vmatpush1.bf16.msra.mxu0 0
      %918 = vmatprep.subr.bf16.mxu0 0
      %919 = vmatpush1.bf16.msra.mxu0 0
      %920 = vmatprep.subr.bf16.mxu0 0
      %921 = vmatpush1.bf16.msra.mxu0 0
      %922 = vmatprep.subr.bf16.mxu0 0
      %923 = vmatpush1.bf16.msra.mxu0 0
      %924 = vmatprep.subr.bf16.mxu0 0
      %925 = vmatpush1.bf16.msra.mxu0 0
      %926 = vmatprep.mubr.bf16.mxu0 0
      %927 = vmatmul.mubr.bf16.gmra.mrb[0].mxu0 %v686
      %v928 = vpop.f32.mrb[0].mxu0
      %v929 = vadd.f32 %v768, %v928
      %v930 = vpop.f32.mrb[0].mxu0
      %v931 = vpop.f32.mrb[0].mxu0
      %v932 = vadd.f32 %v771, %v931
      %v933 = vpop.f32.mrb[0].mxu0
      %934 = vmatprep.mubr.bf16.mxu0 0
      %935 = vmatmul.mubr.bf16.gmra.mrb[0].mxu0 %v689
      %v936 = vpop.f32.mrb[0].mxu0
      %v937 = vadd.f32 %v776, %v936
      %v938 = vpop.f32.mrb[0].mxu0
      %v939 = vpop.f32.mrb[0].mxu0
      %v940 = vadd.f32 %v779, %v939
      %v941 = vpop.f32.mrb[0].mxu0
      %942 = vmatprep.mubr.bf16.mxu0 0
      %943 = vmatmul.mubr.bf16.gmra.mrb[0].mxu0 %v692
      %v944 = vpop.f32.mrb[0].mxu0
      %v945 = vadd.f32 %v784, %v944
      %v946 = vpop.f32.mrb[0].mxu0
      %v947 = vpop.f32.mrb[0].mxu0
      %v948 = vadd.f32 %v787, %v947
      %v949 = vpop.f32.mrb[0].mxu0
      %950 = vmatprep.mubr.bf16.mxu0 0
      %951 = vmatmul.mubr.bf16.gmra.mrb[0].mxu0 %v695
      %v952 = vpop.f32.mrb[0].mxu0
      %v953 = vadd.f32 %v792, %v952
      %v954 = vpop.f32.mrb[0].mxu0
      %v955 = vpop.f32.mrb[0].mxu0
      %v956 = vadd.f32 %v795, %v955
      %v957 = vpop.f32.mrb[0].mxu0
      %958 = vmatprep.mubr.bf16.mxu0 0
      %959 = vmatmul.mubr.bf16.gmra.mrb[0].mxu0 %v698
      %v960 = vpop.f32.mrb[0].mxu0
      %v961 = vadd.f32 %v800, %v960
      %v962 = vpop.f32.mrb[0].mxu0
      %v963 = vpop.f32.mrb[0].mxu0
      %v964 = vadd.f32 %v803, %v963
      %v965 = vpop.f32.mrb[0].mxu0
      %966 = vmatprep.mubr.bf16.mxu0 0
      %967 = vmatmul.mubr.bf16.gmra.mrb[0].mxu0 %v701
      %v968 = vpop.f32.mrb[0].mxu0
      %v969 = vadd.f32 %v808, %v968
      %v970 = vpop.f32.mrb[0].mxu0
      %v971 = vpop.f32.mrb[0].mxu0
      %v972 = vadd.f32 %v811, %v971
      %v973 = vpop.f32.mrb[0].mxu0
      %974 = vmatprep.mubr.bf16.mxu0 0
      %975 = vmatmul.mubr.bf16.gmra.mrb[0].mxu0 %v704
      %v976 = vpop.f32.mrb[0].mxu0
      %v977 = vadd.f32 %v816, %v976
      %v978 = vpop.f32.mrb[0].mxu0
      %v979 = vpop.f32.mrb[0].mxu0
      %v980 = vadd.f32 %v819, %v979
      %v981 = vpop.f32.mrb[0].mxu0
      %982 = vmatprep.mubr.bf16.mxu0 0
      %983 = vmatmul.mubr.bf16.gmra.mrb[0].mxu0 %v707
      %v984 = vpop.f32.mrb[0].mxu0
      %v985 = vadd.f32 %v824, %v984
      %v986 = vpop.f32.mrb[0].mxu0
      %v987 = vpop.f32.mrb[0].mxu0
      %v988 = vadd.f32 %v827, %v987
      %v989 = vpop.f32.mrb[0].mxu0
      %990 = vmatprep.mubr.bf16.mxu0 0
      %991 = vmatmul.mubr.bf16.gmra.mrb[0].mxu0 %v710
      %v992 = vpop.f32.mrb[0].mxu0
      %v993 = vadd.f32 %v832, %v992
      %v994 = vpop.f32.mrb[0].mxu0
      %v995 = vpop.f32.mrb[0].mxu0
      %v996 = vadd.f32 %v835, %v995
      %v997 = vpop.f32.mrb[0].mxu0
      %998 = vmatprep.mubr.bf16.mxu0 0
      %999 = vmatmul.mubr.bf16.gmra.mrb[0].mxu0 %v713
      %v1000 = vpop.f32.mrb[0].mxu0
      %v1001 = vadd.f32 %v840, %v1000
      %v1002 = vpop.f32.mrb[0].mxu0
      %v1003 = vpop.f32.mrb[0].mxu0
      %v1004 = vadd.f32 %v843, %v1003
      %v1005 = vpop.f32.mrb[0].mxu0
      %1006 = vmatprep.mubr.bf16.mxu0 0
      %1007 = vmatmul.mubr.bf16.gmra.mrb[0].mxu0 %v716
      %v1008 = vpop.f32.mrb[0].mxu0
      %v1009 = vadd.f32 %v848, %v1008
      %v1010 = vpop.f32.mrb[0].mxu0
      %v1011 = vpop.f32.mrb[0].mxu0
      %v1012 = vadd.f32 %v851, %v1011
      %v1013 = vpop.f32.mrb[0].mxu0
      %1014 = vmatprep.mubr.bf16.mxu0 0
      %1015 = vmatmul.mubr.bf16.gmra.mrb[0].mxu0 %v719
      %v1016 = vpop.f32.mrb[0].mxu0
      %v1017 = vadd.f32 %v856, %v1016
      %v1018 = vpop.f32.mrb[0].mxu0
      %v1019 = vpop.f32.mrb[0].mxu0
      %v1020 = vadd.f32 %v859, %v1019
      %v1021 = vpop.f32.mrb[0].mxu0
      %1022 = vmatprep.mubr.bf16.mxu0 0
      %1023 = vmatmul.mubr.bf16.gmra.mrb[0].mxu0 %v722
      %v1024 = vpop.f32.mrb[0].mxu0
      %v1025 = vadd.f32 %v864, %v1024
      %v1026 = vpop.f32.mrb[0].mxu0
      %v1027 = vpop.f32.mrb[0].mxu0
      %v1028 = vadd.f32 %v867, %v1027
      %v1029 = vpop.f32.mrb[0].mxu0
      %1030 = vmatprep.mubr.bf16.mxu0 0
      %1031 = vmatmul.mubr.bf16.gmra.mrb[0].mxu0 %v725
      %v1032 = vpop.f32.mrb[0].mxu0
      %v1033 = vadd.f32 %v872, %v1032
      %v1034 = vpop.f32.mrb[0].mxu0
      %v1035 = vpop.f32.mrb[0].mxu0
      %v1036 = vadd.f32 %v875, %v1035
      %v1037 = vpop.f32.mrb[0].mxu0
      %1038 = vmatprep.mubr.bf16.mxu0 0
      %1039 = vmatmul.mubr.bf16.gmra.mrb[0].mxu0 %v728
      %v1040 = vpop.f32.mrb[0].mxu0
      %v1041 = vadd.f32 %v880, %v1040
      %v1042 = vpop.f32.mrb[0].mxu0
      %v1043 = vpop.f32.mrb[0].mxu0
      %v1044 = vadd.f32 %v883, %v1043
      %v1045 = vpop.f32.mrb[0].mxu0
      %1046 = vmatprep.mubr.bf16.mxu0 0
      %1047 = vmatmul.mubr.bf16.gmra.mrb[0].mxu0 %v731
      %v1048 = vpop.f32.mrb[0].mxu0
      %v1049 = vadd.f32 %v888, %v1048
      %v1050 = vpop.f32.mrb[0].mxu0
      %v1051 = vpop.f32.mrb[0].mxu0
      %v1052 = vadd.f32 %v891, %v1051
      %v1053 = vpop.f32.mrb[0].mxu0
      %1054 = vdwg.mxu0
      %v1055 = vtanh.pop %v929
      %v1056 = vtanh.pop %v932
      %v1057 = vtanh.pop %v937
      %v1058 = vtanh.pop %v940
      %v1059 = vtanh.pop %v945
      %v1060 = vtanh.pop %v948
      %v1061 = vtanh.pop %v953
      %v1062 = vtanh.pop %v956
      %v1063 = vtanh.pop %v961
      %v1064 = vtanh.pop %v964
      %v1065 = vtanh.pop %v969
      %v1066 = vtanh.pop %v972
      %v1067 = vtanh.pop %v977
      %v1068 = vtanh.pop %v980
      %v1069 = vtanh.pop %v985
      %v1070 = vtanh.pop %v988
      %v1071 = vtanh.pop %v993
      %v1072 = vtanh.pop %v996
      %v1073 = vtanh.pop %v1001
      %v1074 = vtanh.pop %v1004
      %v1075 = vtanh.pop %v1009
      %v1076 = vtanh.pop %v1012
      %v1077 = vtanh.pop %v1017
      %v1078 = vtanh.pop %v1020
      %v1079 = vtanh.pop %v1025
      %v1080 = vtanh.pop %v1028
      %v1081 = vtanh.pop %v1033
      %v1082 = vtanh.pop %v1036
      %v1083 = vtanh.pop %v1041
      %v1084 = vtanh.pop %v1044
      %v1085 = vtanh.pop %v1049
      %v1086 = vtanh.pop %v1052
      %vm1087 = vcmask 97280
      %1088 = vst.msk [vmem:[%s226] sm:$0xff] %vm1087, %v1055
      %1089 = vst.msk [vmem:[%s226 + $0x8] sm:$0xff] %vm1087, %v1056
      %1090 = vst.msk [vmem:[%s226 + $0x10] sm:$0xff] %vm1087, %v1057
      %1091 = vst.msk [vmem:[%s226 + $0x18] sm:$0xff] %vm1087, %v1058
      %1092 = vst.msk [vmem:[%s226 + $0x20] sm:$0xff] %vm1087, %v1059
      %1093 = vst.msk [vmem:[%s226 + $0x28] sm:$0xff] %vm1087, %v1060
      %1094 = vst.msk [vmem:[%s226 + $0x30] sm:$0xff] %vm1087, %v1061
      %1095 = vst.msk [vmem:[%s226 + $0x38] sm:$0xff] %vm1087, %v1062
      %1096 = vst.msk [vmem:[%s226 + $0x40] sm:$0xff] %vm1087, %v1063
      %1097 = vst.msk [vmem:[%s226 + $0x48] sm:$0xff] %vm1087, %v1064
      %1098 = vst.msk [vmem:[%s226 + $0x50] sm:$0xff] %vm1087, %v1065
      %1099 = vst.msk [vmem:[%s226 + $0x58] sm:$0xff] %vm1087, %v1066
      %1100 = vst.msk [vmem:[%s226 + $0x60] sm:$0xff] %vm1087, %v1067
      %1101 = vst.msk [vmem:[%s226 + $0x68] sm:$0xff] %vm1087, %v1068
      %1102 = vst.msk [vmem:[%s226 + $0x70] sm:$0xff] %vm1087, %v1069
      %1103 = vst.msk [vmem:[%s226 + $0x78] sm:$0xff] %vm1087, %v1070
      %1104 = vst.msk [vmem:[%s226 + $0x80] sm:$0xff] %vm1087, %v1071
      %1105 = vst.msk [vmem:[%s226 + $0x88] sm:$0xff] %vm1087, %v1072
      %1106 = vst.msk [vmem:[%s226 + $0x90] sm:$0xff] %vm1087, %v1073
      %1107 = vst.msk [vmem:[%s226 + $0x98] sm:$0xff] %vm1087, %v1074
      %1108 = vst.msk [vmem:[%s226 + $0xa0] sm:$0xff] %vm1087, %v1075
      %1109 = vst.msk [vmem:[%s226 + $0xa8] sm:$0xff] %vm1087, %v1076
      %1110 = vst.msk [vmem:[%s226 + $0xb0] sm:$0xff] %vm1087, %v1077
      %1111 = vst.msk [vmem:[%s226 + $0xb8] sm:$0xff] %vm1087, %v1078
      %1112 = vst.msk [vmem:[%s226 + $0xc0] sm:$0xff] %vm1087, %v1079
      %1113 = vst.msk [vmem:[%s226 + $0xc8] sm:$0xff] %vm1087, %v1080
      %1114 = vst.msk [vmem:[%s226 + $0xd0] sm:$0xff] %vm1087, %v1081
      %1115 = vst.msk [vmem:[%s226 + $0xd8] sm:$0xff] %vm1087, %v1082
      %1116 = vst.msk [vmem:[%s226 + $0xe0] sm:$0xff] %vm1087, %v1083
      %1117 = vst.msk [vmem:[%s226 + $0xe8] sm:$0xff] %vm1087, %v1084
      %1118 = vst.msk [vmem:[%s226 + $0xf0] sm:$0xff] %vm1087, %v1085
      %1119 = vst.msk [vmem:[%s226 + $0xf8] sm:$0xff] %vm1087, %v1086
      %s1120 = smul.u32 32, %s18
      %p1121 = scmp.lt.s32.totalorder %s1120, 63
      %s1122 = scalar_select %p1121, %s1120, 63
      %p1123 = scmp.lt.s32.totalorder %s19, 0
      %s1124 = scalar_select %p1123, %s19, 0
      %s1125 = sadd.s32 %s1124, %s1122
      %s1126 = smul.addr %s1125, 8
      %s1127 = scalar_lea.vmem %s3, %s1126
      // Predicated region
      $region33: #{generator_forward.7} parent=31 // pred_check
        %p1128 = pneg %p124
      $region34: #{generator_forward.7} parent=31 // pred_check_branch
        %1130 = sbr.rel (%p1128) target = $region36
      $region35: #{generator_forward.7} parent=31 // pred_region
        %s1131 = smul.u32 32, %s18
      $region36: #{generator_forward.7} parent=31 // pred_fallthru
        _
    $region32: #{generator_forward.7} parent=5 // pred_fallthru
      _
    %p1132 = scmp.le.s32.totalorder 2, %s9
    // Predicated region
    $region37: #{generator_forward.7} parent=5 // pred_check
      %p1133 = pneg %p1132
    $region38: #{generator_forward.7} parent=5 // pred_check_branch
      %1135 = sbr.rel (%p1133) target = $region40
    $region39: #{generator_forward.7} parent=5 // pred_region
      %s1136 = ssub.s32 %s9, 2
      // Predicated region
      $region41: #{generator_forward.7} parent=39 // pred_check
        %p1137 = pneg %p130
      $region42: #{generator_forward.7} parent=39 // pred_check_branch
        %1139 = sbr.rel (%p1137) target = $region44
      $region43: #{generator_forward.7} parent=39 // pred_region
        %s1140 = smul.u32 32, %s20
        %p1141 = scmp.lt.s32.totalorder %s1140, 63
        %s1142 = scalar_select %p1141, %s1140, 63
        %p1143 = scmp.lt.s32.totalorder %s21, 0
        %s1144 = scalar_select %p1143, %s21, 0
        %s1145 = sadd.s32 %s1144, %s1142
        %s1146 = smul.addr %s1145, 8
        %s1147 = scalar_lea.vmem %s3, %s1146
      $region44: #{generator_forward.7} parent=39 // pred_fallthru
        _
    $region40: #{generator_forward.7} parent=5 // pred_fallthru
      _
  $region6: #{generator_forward.7} parent=0 // loop_footer
    %s13 = sadd.s32 1, %s9
  $region7: #{generator_forward.7} parent=0 // loop_footer_branch
    %8 = sbr.rel target = $region3
  $region8: #{generator_forward.7} parent=0 // loop_exit
    _

</llo_original>
